<compile_context>
chip_gen: v5e
topology: v5e:2x2
jax: 0.10.0
libtpu: 0.0.40
codegen_flags: <defaults>
</compile_context>

<pallas_src>
import functools

import jax
import jax.numpy as jnp
from jax.experimental import pallas as pl
from jax.experimental.pallas import tpu as pltpu

Relu = 0.01          # LeakyReLU negative slope (as in the PyTorch file)
BN_EPS = 1e-5


# ----------------------------- fused kernel -------------------------------- #

def _resblock_kernel(*refs, H, W, Cin, Cout, stride, has_sc_conv):
    """Fully fused ResBlock forward for one image.

    conv3x3(stride)+BN+LeakyReLU -> conv3x3(1)+BN -> (+ shortcut) -> ReLU.
    All intermediates (padded input, conv1 output, im2col slabs, shortcut)
    stay in VMEM; one HBM read (x) and one HBM write (out) per image.
    """
    n_in = 10 if has_sc_conv else 7
    x_ref, w1_ref, s1_ref, b1_ref, w2_ref, s2_ref, b2_ref = refs[:7]
    if has_sc_conv:
        ws_ref, ss_ref, bs_ref = refs[7:10]
    o_ref = refs[n_in]
    pad_ref, yp_ref, im1_ref, im2_ref = refs[n_in + 1:]

    Ho, Wo = H // stride, W // stride

    # ---- conv1 im2col slab (stride folded into the tap extraction) ----
    if stride == 1:
        # zero-pad x (1-px halo) inside VMEM
        pad_ref[...] = jnp.zeros(pad_ref.shape, pad_ref.dtype)
        pad_ref[1:H + 1, 1:W + 1, :] = x_ref[0]
        for t in range(9):
            kh, kw = divmod(t, 3)
            tap = pad_ref[kh:kh + Ho, kw:kw + Wo, :]
            im1_ref[:, t * Cin:(t + 1) * Cin] = tap.reshape(Ho * Wo, Cin)
        x_sc = x_ref[0].reshape(Ho * Wo, Cin)           # shortcut input
    else:
        # x arrives polyphase-packed as (H/2, 2, W/2, 2*Cin), a free wrapper
        # reshape of NHWC:  xr[a, pr, q, pc*Cin + c] == x[2a+pr, 2q+pc, c].
        # Pad each (row-parity, col-parity) component by one zero row/col at
        # the top/left; every stride-2 tap becomes a unit-stride static slice.
        xr = x_ref[0]                                    # (Ho, 2, Wo, 2*Cin)
        pad_ref[...] = jnp.zeros(pad_ref.shape, pad_ref.dtype)
        for pr in range(2):
            for pc in range(2):
                comp = xr[:, pr, :, pc * Cin:(pc + 1) * Cin]   # x[pr::2, pc::2]
                pad_ref[2 * pr + pc, 1:Ho + 1, 1:Wo + 1, :] = comp
        for t in range(9):
            kh, kw = divmod(t, 3)
            # output (i,j), tap (kh,kw) needs x[2i+kh-1, 2j+kw-1]
            pr = 0 if kh == 1 else 1        # row parity of 2i+kh-1
            sr = 0 if kh == 0 else 1        # slice start inside padded comp
            pc = 0 if kw == 1 else 1
            sc0 = 0 if kw == 0 else 1
            tap = pad_ref[2 * pr + pc, sr:sr + Ho, sc0:sc0 + Wo, :]
            im1_ref[:, t * Cin:(t + 1) * Cin] = tap.reshape(Ho * Wo, Cin)
        # shortcut input x[::2, ::2, :] is the (even,even) component
        x_sc = pad_ref[0, 1:Ho + 1, 1:Wo + 1, :].reshape(Ho * Wo, Cin)

    # ---- conv1: one big-K MXU matmul + folded BN1 + LeakyReLU ----
    y = jnp.dot(im1_ref[...], w1_ref[...], preferred_element_type=jnp.float32)
    y = y * s1_ref[...] + b1_ref[...]
    y = jnp.where(y > 0.0, y, Relu * y)

    # ---- conv2 (stride 1): pad conv1 output in VMEM, im2col, one matmul ----
    yp_ref[...] = jnp.zeros(yp_ref.shape, yp_ref.dtype)
    yp_ref[1:Ho + 1, 1:Wo + 1, :] = y.reshape(Ho, Wo, Cout)
    for t in range(9):
        kh, kw = divmod(t, 3)
        tap = yp_ref[kh:kh + Ho, kw:kw + Wo, :]
        im2_ref[:, t * Cout:(t + 1) * Cout] = tap.reshape(Ho * Wo, Cout)
    y2 = jnp.dot(im2_ref[...], w2_ref[...], preferred_element_type=jnp.float32)
    y2 = y2 * s2_ref[...] + b2_ref[...]                  # folded BN2

    # ---- shortcut branch, fused (never round-trips HBM) ----
    if has_sc_conv:
        sc = jnp.dot(x_sc, ws_ref[...], preferred_element_type=jnp.float32)
        sc = sc * ss_ref[...] + bs_ref[...]              # folded shortcut BN
    else:
        sc = x_sc.astype(jnp.float32)

    out = jnp.maximum(y2 + sc, 0.0)                      # residual add + ReLU
    o_ref[0] = out.astype(o_ref.dtype)


# ------------------------------ wrapper ------------------------------------- #

def _vmem_limit_bytes(H, W, Cin, Cout, Ho, Wo, stride):
    """Explicit scoped-VMEM budget: double-buffered blocks + scratch + slack."""
    f = 4  # float32
    x_elems = H * W * Cin
    out_elems = Ho * Wo * Cout
    w_elems = 9 * Cin * Cout + 9 * Cout * Cout + Cin * Cout + 6 * Cout
    pad_elems = ((H + 2) * (W + 2) * Cin if stride == 1
                 else 4 * (Ho + 1) * (Wo + 1) * Cin)
    scratch = (pad_elems + (Ho + 2) * (Wo + 2) * Cout
               + Ho * Wo * 9 * Cin + Ho * Wo * 9 * Cout)
    live = Ho * Wo * 4 * Cout                # y / y2 / sc temporaries
    need = f * (2 * (x_elems + out_elems + w_elems) + scratch + live) + (8 << 20)
    # floor at the default scoped limit, cap below v7x's 64 MiB physical VMEM
    return int(min(max(need, 32 << 20), 48 << 20))


def resblock_forward(x_nhwc, w1, s1, b1, w2, s2, b2,
                     ws=None, ss=None, bs=None, *, stride=1):
    """x_nhwc: (N, H, W, Cin) float32.  Returns (N, Ho, Wo, Cout) float32."""
    N, H, W, Cin = x_nhwc.shape
    Cout = w1.shape[-1]
    assert stride in (1, 2), "only stride 1 / 2 supported (ResNet-style)"
    assert H % stride == 0 and W % stride == 0
    Ho, Wo = H // stride, W // stride
    assert Wo % 8 == 0, "W/stride must be a multiple of 8 (sublane tile)"
    has_sc = ws is not None

    xf = x_nhwc.astype(jnp.float32)
    if stride == 1:
        x_in = xf
        x_spec = pl.BlockSpec((1, H, W, Cin), lambda n: (n, 0, 0, 0))
        pad_scratch = pltpu.VMEM((H + 2, W + 2, Cin), jnp.float32)
    else:
        # Free row-major metadata reshape exposing the 4 polyphase components:
        # x[2a+b, 2q+p, c] == x_in[a, b, q, p*Cin + c]
        x_in = xf.reshape(N, Ho, 2, Wo, 2 * Cin)
        x_spec = pl.BlockSpec((1, Ho, 2, Wo, 2 * Cin), lambda n: (n, 0, 0, 0, 0))
        pad_scratch = pltpu.VMEM((4, Ho + 1, Wo + 1, Cin), jnp.float32)

    w1f = w1.reshape(9 * Cin, Cout).astype(jnp.float32)   # (kh, kw, cin) flattened
    w2f = w2.reshape(9 * Cout, Cout).astype(jnp.float32)
    row = lambda v: v.reshape(1, Cout).astype(jnp.float32)

    args = [x_in, w1f, row(s1), row(b1), w2f, row(s2), row(b2)]
    in_specs = [
        x_spec,
        pl.BlockSpec((9 * Cin, Cout), lambda n: (0, 0)),
        pl.BlockSpec((1, Cout), lambda n: (0, 0)),
        pl.BlockSpec((1, Cout), lambda n: (0, 0)),
        pl.BlockSpec((9 * Cout, Cout), lambda n: (0, 0)),
        pl.BlockSpec((1, Cout), lambda n: (0, 0)),
        pl.BlockSpec((1, Cout), lambda n: (0, 0)),
    ]
    if has_sc:
        args += [ws.astype(jnp.float32), row(ss), row(bs)]
        in_specs += [
            pl.BlockSpec((Cin, Cout), lambda n: (0, 0)),
            pl.BlockSpec((1, Cout), lambda n: (0, 0)),
            pl.BlockSpec((1, Cout), lambda n: (0, 0)),
        ]

    kernel = functools.partial(_resblock_kernel, H=H, W=W, Cin=Cin, Cout=Cout,
                               stride=stride, has_sc_conv=has_sc)

    out = pl.pallas_call(
        kernel,
        out_shape=jax.ShapeDtypeStruct((N, Ho * Wo, Cout), jnp.float32),
        grid=(N,),
        in_specs=in_specs,
        out_specs=pl.BlockSpec((1, Ho * Wo, Cout), lambda n: (n, 0, 0)),
        scratch_shapes=[
            pad_scratch,                                       # zero-padded input / polyphase comps
            pltpu.VMEM((Ho + 2, Wo + 2, Cout), jnp.float32),   # zero-padded conv1 output
            pltpu.VMEM((Ho * Wo, 9 * Cin), jnp.float32),       # im2col slab, conv1
            pltpu.VMEM((Ho * Wo, 9 * Cout), jnp.float32),      # im2col slab, conv2
        ],
        compiler_params=pltpu.CompilerParams(
            dimension_semantics=("parallel",),                 # batch images independent
            vmem_limit_bytes=_vmem_limit_bytes(H, W, Cin, Cout, Ho, Wo, stride)),
    )(*args)
    # (N, Ho*Wo, Cout) -> (N, Ho, Wo, Cout): free row-major metadata reshape
    return out.reshape(N, Ho, Wo, Cout)


# ------------------------------ ResBlock ------------------------------------ #

def _fold_bn(gamma, beta, mean, var):
    scale = gamma / jnp.sqrt(var + BN_EPS)
    bias = beta - mean * scale
    return scale, bias


class ResBlockPallas:
    """Mirror of the PyTorch ResBlock (eval-mode BatchNorm folded into affine)."""

    def __init__(self, inchannel, outchannel, stride=1, key=None):
        if key is None:
            key = jax.random.PRNGKey(0)
        assert stride in (1, 2)
        self.stride = stride
        self.inchannel = inchannel
        self.outchannel = outchannel
        ks = jax.random.split(key, 6)

        self.w1 = 0.1 * jax.random.normal(ks[0], (3, 3, inchannel, outchannel), jnp.float32)
        self.w2 = 0.1 * jax.random.normal(ks[1], (3, 3, outchannel, outchannel), jnp.float32)

        def bn_params(k, c):
            k1, k2, k3, k4 = jax.random.split(k, 4)
            gamma = 1.0 + 0.1 * jax.random.normal(k1, (c,), jnp.float32)
            beta = 0.1 * jax.random.normal(k2, (c,), jnp.float32)
            mean = 0.1 * jax.random.normal(k3, (c,), jnp.float32)
            var = 1.0 + 0.1 * jax.random.uniform(k4, (c,), jnp.float32)
            return _fold_bn(gamma, beta, mean, var)

        self.bn1_s, self.bn1_b = bn_params(ks[2], outchannel)
        self.bn2_s, self.bn2_b = bn_params(ks[3], outchannel)

        self.has_shortcut_conv = (stride != 1) or (inchannel != outchannel)
        if self.has_shortcut_conv:
            self.ws = 0.1 * jax.random.normal(ks[4], (inchannel, outchannel), jnp.float32)
            self.bns_s, self.bns_b = bn_params(ks[5], outchannel)
        else:
            self.ws = self.bns_s = self.bns_b = None

    def __call__(self, x_nchw):
        x = jnp.transpose(x_nchw, (0, 2, 3, 1)).astype(jnp.float32)   # NCHW -> NHWC
        out = resblock_forward(x, self.w1, self.bn1_s, self.bn1_b,
                               self.w2, self.bn2_s, self.bn2_b,
                               self.ws, self.bns_s, self.bns_b,
                               stride=self.stride)
        return jnp.transpose(out, (0, 3, 1, 2))                        # NHWC -> NCHW


# ------------------------------ reference ----------------------------------- #

def _ref_forward(block, x_nchw):
    x = jnp.transpose(x_nchw, (0, 2, 3, 1)).astype(jnp.float32)
    hi = jax.lax.Precision.HIGHEST

    def conv(xx, w, stride, pad):
        return jax.lax.conv_general_dilated(
            xx, w, (stride, stride), pad,
            dimension_numbers=("NHWC", "HWIO", "NHWC"), precision=hi)

    y = conv(x, block.w1, block.stride, [(1, 1), (1, 1)])
    y = y * block.bn1_s + block.bn1_b
    y = jnp.where(y > 0, y, Relu * y)
    y = conv(y, block.w2, 1, [(1, 1), (1, 1)])
    y = y * block.bn2_s + block.bn2_b

    if block.has_shortcut_conv:
        sc = conv(x, block.ws.reshape(1, 1, block.inchannel, block.outchannel),
                  block.stride, [(0, 0), (0, 0)])
        sc = sc * block.bns_s + block.bns_b
    else:
        sc = x
    out = jnp.maximum(y + sc, 0.0)
    return jnp.transpose(out, (0, 3, 1, 2))


# -------------------------------- main --------------------------------------- #

if __name__ == "__main__":
    key = jax.random.PRNGKey(0)
    kx1, kp1, kx2, kp2, kx3, kp3 = jax.random.split(key, 6)

    # A: Cin != Cout -> 1x1-conv shortcut, stride 1 (primary shapes 2x4x16x16)
    xA = jax.random.normal(kx1, (2, 4, 16, 16), jnp.float32)
    blkA = ResBlockPallas(4, 8, stride=1, key=kp1)
    outA = jax.block_until_ready(blkA(xA))
    refA = jax.block_until_ready(_ref_forward(blkA, xA))
    assert outA.shape == (2, 8, 16, 16)
    assert jnp.allclose(outA, refA, atol=5e-3, rtol=5e-3), "mismatch (stride=1, conv shortcut)"

    # B: stride 2 handled inside the kernel (polyphase taps), 1x1-conv shortcut
    xB = jax.random.normal(kx2, (2, 8, 16, 16), jnp.float32)
    blkB = ResBlockPallas(8, 8, stride=2, key=kp2)
    outB = jax.block_until_ready(blkB(xB))
    refB = jax.block_until_ready(_ref_forward(blkB, xB))
    assert outB.shape == (2, 8, 8, 8)
    assert jnp.allclose(outB, refB, atol=5e-3, rtol=5e-3), "mismatch (stride=2)"

    # C: identity shortcut (Cin == Cout, stride 1)
    xC = jax.random.normal(kx3, (2, 8, 16, 16), jnp.float32)
    blkC = ResBlockPallas(8, 8, stride=1, key=kp3)
    outC = jax.block_until_ready(blkC(xC))
    refC = jax.block_until_ready(_ref_forward(blkC, xC))
    assert jnp.allclose(outC, refC, atol=5e-3, rtol=5e-3), "mismatch (identity shortcut)"

    print("KERNEL_OK")
</pallas_src>

<mosaic_0001>
module attributes {stable_mosaic.version = 11 : i64} {
  func.func @_resblock_kernel(%arg0: i32, %arg1: memref<1x16x16x4xf32, #tpu.memory_space<vmem>>, %arg2: memref<36x8xf32, #tpu.memory_space<vmem>>, %arg3: memref<1x8xf32, #tpu.memory_space<vmem>>, %arg4: memref<1x8xf32, #tpu.memory_space<vmem>>, %arg5: memref<72x8xf32, #tpu.memory_space<vmem>>, %arg6: memref<1x8xf32, #tpu.memory_space<vmem>>, %arg7: memref<1x8xf32, #tpu.memory_space<vmem>>, %arg8: memref<4x8xf32, #tpu.memory_space<vmem>>, %arg9: memref<1x8xf32, #tpu.memory_space<vmem>>, %arg10: memref<1x8xf32, #tpu.memory_space<vmem>>, %arg11: memref<1x256x8xf32, #tpu.memory_space<vmem>>, %arg12: memref<18x18x4xf32, #tpu.memory_space<vmem>>, %arg13: memref<18x18x8xf32, #tpu.memory_space<vmem>>, %arg14: memref<256x36xf32, #tpu.memory_space<vmem>>, %arg15: memref<256x72xf32, #tpu.memory_space<vmem>>) attributes {dimension_semantics = [#tpu.dimension_semantics<parallel>], iteration_bounds = array<i64: 2>, scalar_prefetch = 0 : i64, scratch_operands = 4 : i64, tpu.core_type = #tpu.core_type<tc>, window_params = [{transform_indices = @transform_0, window_bounds = array<i64: 1, 16, 16, 4>}, {pipeline_mode = #tpu.pipeline_mode<synchronous>, transform_indices = @transform_1, window_bounds = array<i64: 36, 8>}, {pipeline_mode = #tpu.pipeline_mode<synchronous>, transform_indices = @transform_2, window_bounds = array<i64: 1, 8>}, {pipeline_mode = #tpu.pipeline_mode<synchronous>, transform_indices = @transform_3, window_bounds = array<i64: 1, 8>}, {pipeline_mode = #tpu.pipeline_mode<synchronous>, transform_indices = @transform_4, window_bounds = array<i64: 72, 8>}, {pipeline_mode = #tpu.pipeline_mode<synchronous>, transform_indices = @transform_5, window_bounds = array<i64: 1, 8>}, {pipeline_mode = #tpu.pipeline_mode<synchronous>, transform_indices = @transform_6, window_bounds = array<i64: 1, 8>}, {pipeline_mode = #tpu.pipeline_mode<synchronous>, transform_indices = @transform_7, window_bounds = array<i64: 4, 8>}, {pipeline_mode = #tpu.pipeline_mode<synchronous>, transform_indices = @transform_8, window_bounds = array<i64: 1, 8>}, {pipeline_mode = #tpu.pipeline_mode<synchronous>, transform_indices = @transform_9, window_bounds = array<i64: 1, 8>}, {transform_indices = @transform_10, window_bounds = array<i64: 1, 256, 8>}]} {
    %cst = arith.constant 0.000000e+00 : f32
    %0 = vector.broadcast %cst : f32 to vector<18x18x4xf32>
    %c0 = arith.constant 0 : index
    %c0_0 = arith.constant 0 : index
    %c0_1 = arith.constant 0 : index
    %1 = vector.load %arg12[%c0, %c0_0, %c0_1] : memref<18x18x4xf32, #tpu.memory_space<vmem>>, vector<18x18x4xf32>
    tpu.vector_store %arg12[%c0, %c0_0, %c0_1], %0 {strides = array<i32>} : memref<18x18x4xf32, #tpu.memory_space<vmem>>, vector<18x18x4xf32>,
    %c0_2 = arith.constant 0 : index
    %c0_3 = arith.constant 0 : index
    %c0_4 = arith.constant 0 : index
    %c0_5 = arith.constant 0 : index
    %2 = vector.load %arg1[%c0_2, %c0_3, %c0_4, %c0_5] : memref<1x16x16x4xf32, #tpu.memory_space<vmem>>, vector<1x16x16x4xf32>
    %3 = vector.shape_cast %2 : vector<1x16x16x4xf32> to vector<16x16x4xf32>
    %c1 = arith.constant 1 : index
    %c1_6 = arith.constant 1 : index
    %c0_7 = arith.constant 0 : index
    %4 = vector.load %arg12[%c1, %c1_6, %c0_7] : memref<18x18x4xf32, #tpu.memory_space<vmem>>, vector<16x16x4xf32>
    tpu.vector_store %arg12[%c1, %c1_6, %c0_7], %3 {strides = array<i32>} : memref<18x18x4xf32, #tpu.memory_space<vmem>>, vector<16x16x4xf32>,
    %c0_8 = arith.constant 0 : index
    %c0_9 = arith.constant 0 : index
    %c0_10 = arith.constant 0 : index
    %5 = vector.load %arg12[%c0_8, %c0_9, %c0_10] : memref<18x18x4xf32, #tpu.memory_space<vmem>>, vector<16x16x4xf32>
    %6 = vector.shape_cast %5 : vector<16x16x4xf32> to vector<256x4xf32>
    %c0_11 = arith.constant 0 : index
    %c0_12 = arith.constant 0 : index
    %7 = vector.load %arg14[%c0_11, %c0_12] : memref<256x36xf32, #tpu.memory_space<vmem>>, vector<256x4xf32>
    tpu.vector_store %arg14[%c0_11, %c0_12], %6 {strides = array<i32>} : memref<256x36xf32, #tpu.memory_space<vmem>>, vector<256x4xf32>,
    %c0_13 = arith.constant 0 : index
    %c1_14 = arith.constant 1 : index
    %c0_15 = arith.constant 0 : index
    %8 = vector.load %arg12[%c0_13, %c1_14, %c0_15] : memref<18x18x4xf32, #tpu.memory_space<vmem>>, vector<16x16x4xf32>
    %9 = vector.shape_cast %8 : vector<16x16x4xf32> to vector<256x4xf32>
    %c0_16 = arith.constant 0 : index
    %c4 = arith.constant 4 : index
    %10 = vector.load %arg14[%c0_16, %c4] : memref<256x36xf32, #tpu.memory_space<vmem>>, vector<256x4xf32>
    tpu.vector_store %arg14[%c0_16, %c4], %9 {strides = array<i32>} : memref<256x36xf32, #tpu.memory_space<vmem>>, vector<256x4xf32>,
    %c0_17 = arith.constant 0 : index
    %c2 = arith.constant 2 : index
    %c0_18 = arith.constant 0 : index
    %11 = vector.load %arg12[%c0_17, %c2, %c0_18] : memref<18x18x4xf32, #tpu.memory_space<vmem>>, vector<16x16x4xf32>
    %12 = vector.shape_cast %11 : vector<16x16x4xf32> to vector<256x4xf32>
    %c0_19 = arith.constant 0 : index
    %c8 = arith.constant 8 : index
    %13 = vector.load %arg14[%c0_19, %c8] : memref<256x36xf32, #tpu.memory_space<vmem>>, vector<256x4xf32>
    tpu.vector_store %arg14[%c0_19, %c8], %12 {strides = array<i32>} : memref<256x36xf32, #tpu.memory_space<vmem>>, vector<256x4xf32>,
    %c1_20 = arith.constant 1 : index
    %c0_21 = arith.constant 0 : index
    %c0_22 = arith.constant 0 : index
    %14 = vector.load %arg12[%c1_20, %c0_21, %c0_22] : memref<18x18x4xf32, #tpu.memory_space<vmem>>, vector<16x16x4xf32>
    %15 = vector.shape_cast %14 : vector<16x16x4xf32> to vector<256x4xf32>
    %c0_23 = arith.constant 0 : index
    %c12 = arith.constant 12 : index
    %16 = vector.load %arg14[%c0_23, %c12] : memref<256x36xf32, #tpu.memory_space<vmem>>, vector<256x4xf32>
    tpu.vector_store %arg14[%c0_23, %c12], %15 {strides = array<i32>} : memref<256x36xf32, #tpu.memory_space<vmem>>, vector<256x4xf32>,
    %c1_24 = arith.constant 1 : index
    %c1_25 = arith.constant 1 : index
    %c0_26 = arith.constant 0 : index
    %17 = vector.load %arg12[%c1_24, %c1_25, %c0_26] : memref<18x18x4xf32, #tpu.memory_space<vmem>>, vector<16x16x4xf32>
    %18 = vector.shape_cast %17 : vector<16x16x4xf32> to vector<256x4xf32>
    %c0_27 = arith.constant 0 : index
    %c16 = arith.constant 16 : index
    %19 = vector.load %arg14[%c0_27, %c16] : memref<256x36xf32, #tpu.memory_space<vmem>>, vector<256x4xf32>
    tpu.vector_store %arg14[%c0_27, %c16], %18 {strides = array<i32>} : memref<256x36xf32, #tpu.memory_space<vmem>>, vector<256x4xf32>,
    %c1_28 = arith.constant 1 : index
    %c2_29 = arith.constant 2 : index
    %c0_30 = arith.constant 0 : index
    %20 = vector.load %arg12[%c1_28, %c2_29, %c0_30] : memref<18x18x4xf32, #tpu.memory_space<vmem>>, vector<16x16x4xf32>
    %21 = vector.shape_cast %20 : vector<16x16x4xf32> to vector<256x4xf32>
    %c0_31 = arith.constant 0 : index
    %c20 = arith.constant 20 : index
    %22 = vector.load %arg14[%c0_31, %c20] : memref<256x36xf32, #tpu.memory_space<vmem>>, vector<256x4xf32>
    tpu.vector_store %arg14[%c0_31, %c20], %21 {strides = array<i32>} : memref<256x36xf32, #tpu.memory_space<vmem>>, vector<256x4xf32>,
    %c2_32 = arith.constant 2 : index
    %c0_33 = arith.constant 0 : index
    %c0_34 = arith.constant 0 : index
    %23 = vector.load %arg12[%c2_32, %c0_33, %c0_34] : memref<18x18x4xf32, #tpu.memory_space<vmem>>, vector<16x16x4xf32>
    %24 = vector.shape_cast %23 : vector<16x16x4xf32> to vector<256x4xf32>
    %c0_35 = arith.constant 0 : index
    %c24 = arith.constant 24 : index
    %25 = vector.load %arg14[%c0_35, %c24] : memref<256x36xf32, #tpu.memory_space<vmem>>, vector<256x4xf32>
    tpu.vector_store %arg14[%c0_35, %c24], %24 {strides = array<i32>} : memref<256x36xf32, #tpu.memory_space<vmem>>, vector<256x4xf32>,
    %c2_36 = arith.constant 2 : index
    %c1_37 = arith.constant 1 : index
    %c0_38 = arith.constant 0 : index
    %26 = vector.load %arg12[%c2_36, %c1_37, %c0_38] : memref<18x18x4xf32, #tpu.memory_space<vmem>>, vector<16x16x4xf32>
    %27 = vector.shape_cast %26 : vector<16x16x4xf32> to vector<256x4xf32>
    %c0_39 = arith.constant 0 : index
    %c28 = arith.constant 28 : index
    %28 = vector.load %arg14[%c0_39, %c28] : memref<256x36xf32, #tpu.memory_space<vmem>>, vector<256x4xf32>
    tpu.vector_store %arg14[%c0_39, %c28], %27 {strides = array<i32>} : memref<256x36xf32, #tpu.memory_space<vmem>>, vector<256x4xf32>,
    %c2_40 = arith.constant 2 : index
    %c2_41 = arith.constant 2 : index
    %c0_42 = arith.constant 0 : index
    %29 = vector.load %arg12[%c2_40, %c2_41, %c0_42] : memref<18x18x4xf32, #tpu.memory_space<vmem>>, vector<16x16x4xf32>
    %30 = vector.shape_cast %29 : vector<16x16x4xf32> to vector<256x4xf32>
    %c0_43 = arith.constant 0 : index
    %c32 = arith.constant 32 : index
    %31 = vector.load %arg14[%c0_43, %c32] : memref<256x36xf32, #tpu.memory_space<vmem>>, vector<256x4xf32>
    tpu.vector_store %arg14[%c0_43, %c32], %30 {strides = array<i32>} : memref<256x36xf32, #tpu.memory_space<vmem>>, vector<256x4xf32>,
    %c0_44 = arith.constant 0 : index
    %c0_45 = arith.constant 0 : index
    %c0_46 = arith.constant 0 : index
    %c0_47 = arith.constant 0 : index
    %32 = vector.load %arg1[%c0_44, %c0_45, %c0_46, %c0_47] : memref<1x16x16x4xf32, #tpu.memory_space<vmem>>, vector<1x16x16x4xf32>
    %33 = vector.shape_cast %32 : vector<1x16x16x4xf32> to vector<16x16x4xf32>
    %34 = vector.shape_cast %33 : vector<16x16x4xf32> to vector<256x4xf32>
    %c0_48 = arith.constant 0 : index
    %c0_49 = arith.constant 0 : index
    %35 = vector.load %arg14[%c0_48, %c0_49] : memref<256x36xf32, #tpu.memory_space<vmem>>, vector<256x36xf32>
    %c0_50 = arith.constant 0 : index
    %c0_51 = arith.constant 0 : index
    %36 = vector.load %arg2[%c0_50, %c0_51] : memref<36x8xf32, #tpu.memory_space<vmem>>, vector<36x8xf32>
    %cst_52 = arith.constant dense<0.000000e+00> : vector<256x8xf32>
    %37 = tpu.matmul %35, %36, %cst_52 {dimension_numbers = #tpu.dot_dimension_numbers<[1], [0], [0], [1], [0, 0, 1, 1], [], []>} : vector<256x36xf32>, vector<36x8xf32>, vector<256x8xf32> -> vector<256x8xf32>
    %c0_53 = arith.constant 0 : index
    %c0_54 = arith.constant 0 : index
    %38 = vector.load %arg3[%c0_53, %c0_54] : memref<1x8xf32, #tpu.memory_space<vmem>>, vector<1x8xf32>
    %39 = vector.broadcast %38 : vector<1x8xf32> to vector<256x8xf32>
    %40 = arith.mulf %37, %39 : vector<256x8xf32>
    %c0_55 = arith.constant 0 : index
    %c0_56 = arith.constant 0 : index
    %41 = vector.load %arg4[%c0_55, %c0_56] : memref<1x8xf32, #tpu.memory_space<vmem>>, vector<1x8xf32>
    %42 = vector.broadcast %41 : vector<1x8xf32> to vector<256x8xf32>
    %43 = arith.addf %40, %42 : vector<256x8xf32>
    %cst_57 = arith.constant 0.000000e+00 : f32
    %44 = vector.broadcast %cst_57 : f32 to vector<256x8xf32>
    %45 = arith.cmpf ogt, %43, %44 : vector<256x8xf32>
    %cst_58 = arith.constant 0.00999999977 : f32
    %46 = vector.broadcast %cst_58 : f32 to vector<256x8xf32>
    %47 = arith.mulf %46, %43 : vector<256x8xf32>
    %48 = arith.select %45, %43, %47 : vector<256x8xi1>, vector<256x8xf32>
    %cst_59 = arith.constant 0.000000e+00 : f32
    %49 = vector.broadcast %cst_59 : f32 to vector<18x18x8xf32>
    %c0_60 = arith.constant 0 : index
    %c0_61 = arith.constant 0 : index
    %c0_62 = arith.constant 0 : index
    %50 = vector.load %arg13[%c0_60, %c0_61, %c0_62] : memref<18x18x8xf32, #tpu.memory_space<vmem>>, vector<18x18x8xf32>
    tpu.vector_store %arg13[%c0_60, %c0_61, %c0_62], %49 {strides = array<i32>} : memref<18x18x8xf32, #tpu.memory_space<vmem>>, vector<18x18x8xf32>,
    %51 = vector.shape_cast %48 : vector<256x8xf32> to vector<16x16x8xf32>
    %c1_63 = arith.constant 1 : index
    %c1_64 = arith.constant 1 : index
    %c0_65 = arith.constant 0 : index
    %52 = vector.load %arg13[%c1_63, %c1_64, %c0_65] : memref<18x18x8xf32, #tpu.memory_space<vmem>>, vector<16x16x8xf32>
    tpu.vector_store %arg13[%c1_63, %c1_64, %c0_65], %51 {strides = array<i32>} : memref<18x18x8xf32, #tpu.memory_space<vmem>>, vector<16x16x8xf32>,
    %c0_66 = arith.constant 0 : index
    %c0_67 = arith.constant 0 : index
    %c0_68 = arith.constant 0 : index
    %53 = vector.load %arg13[%c0_66, %c0_67, %c0_68] : memref<18x18x8xf32, #tpu.memory_space<vmem>>, vector<16x16x8xf32>
    %54 = vector.shape_cast %53 : vector<16x16x8xf32> to vector<256x8xf32>
    %c0_69 = arith.constant 0 : index
    %c0_70 = arith.constant 0 : index
    %55 = vector.load %arg15[%c0_69, %c0_70] : memref<256x72xf32, #tpu.memory_space<vmem>>, vector<256x8xf32>
    tpu.vector_store %arg15[%c0_69, %c0_70], %54 {strides = array<i32>} : memref<256x72xf32, #tpu.memory_space<vmem>>, vector<256x8xf32>,
    %c0_71 = arith.constant 0 : index
    %c1_72 = arith.constant 1 : index
    %c0_73 = arith.constant 0 : index
    %56 = vector.load %arg13[%c0_71, %c1_72, %c0_73] : memref<18x18x8xf32, #tpu.memory_space<vmem>>, vector<16x16x8xf32>
    %57 = vector.shape_cast %56 : vector<16x16x8xf32> to vector<256x8xf32>
    %c0_74 = arith.constant 0 : index
    %c8_75 = arith.constant 8 : index
    %58 = vector.load %arg15[%c0_74, %c8_75] : memref<256x72xf32, #tpu.memory_space<vmem>>, vector<256x8xf32>
    tpu.vector_store %arg15[%c0_74, %c8_75], %57 {strides = array<i32>} : memref<256x72xf32, #tpu.memory_space<vmem>>, vector<256x8xf32>,
    %c0_76 = arith.constant 0 : index
    %c2_77 = arith.constant 2 : index
    %c0_78 = arith.constant 0 : index
    %59 = vector.load %arg13[%c0_76, %c2_77, %c0_78] : memref<18x18x8xf32, #tpu.memory_space<vmem>>, vector<16x16x8xf32>
    %60 = vector.shape_cast %59 : vector<16x16x8xf32> to vector<256x8xf32>
    %c0_79 = arith.constant 0 : index
    %c16_80 = arith.constant 16 : index
    %61 = vector.load %arg15[%c0_79, %c16_80] : memref<256x72xf32, #tpu.memory_space<vmem>>, vector<256x8xf32>
    tpu.vector_store %arg15[%c0_79, %c16_80], %60 {strides = array<i32>} : memref<256x72xf32, #tpu.memory_space<vmem>>, vector<256x8xf32>,
    %c1_81 = arith.constant 1 : index
    %c0_82 = arith.constant 0 : index
    %c0_83 = arith.constant 0 : index
    %62 = vector.load %arg13[%c1_81, %c0_82, %c0_83] : memref<18x18x8xf32, #tpu.memory_space<vmem>>, vector<16x16x8xf32>
    %63 = vector.shape_cast %62 : vector<16x16x8xf32> to vector<256x8xf32>
    %c0_84 = arith.constant 0 : index
    %c24_85 = arith.constant 24 : index
    %64 = vector.load %arg15[%c0_84, %c24_85] : memref<256x72xf32, #tpu.memory_space<vmem>>, vector<256x8xf32>
    tpu.vector_store %arg15[%c0_84, %c24_85], %63 {strides = array<i32>} : memref<256x72xf32, #tpu.memory_space<vmem>>, vector<256x8xf32>,
    %c1_86 = arith.constant 1 : index
    %c1_87 = arith.constant 1 : index
    %c0_88 = arith.constant 0 : index
    %65 = vector.load %arg13[%c1_86, %c1_87, %c0_88] : memref<18x18x8xf32, #tpu.memory_space<vmem>>, vector<16x16x8xf32>
    %66 = vector.shape_cast %65 : vector<16x16x8xf32> to vector<256x8xf32>
    %c0_89 = arith.constant 0 : index
    %c32_90 = arith.constant 32 : index
    %67 = vector.load %arg15[%c0_89, %c32_90] : memref<256x72xf32, #tpu.memory_space<vmem>>, vector<256x8xf32>
    tpu.vector_store %arg15[%c0_89, %c32_90], %66 {strides = array<i32>} : memref<256x72xf32, #tpu.memory_space<vmem>>, vector<256x8xf32>,
    %c1_91 = arith.constant 1 : index
    %c2_92 = arith.constant 2 : index
    %c0_93 = arith.constant 0 : index
    %68 = vector.load %arg13[%c1_91, %c2_92, %c0_93] : memref<18x18x8xf32, #tpu.memory_space<vmem>>, vector<16x16x8xf32>
    %69 = vector.shape_cast %68 : vector<16x16x8xf32> to vector<256x8xf32>
    %c0_94 = arith.constant 0 : index
    %c40 = arith.constant 40 : index
    %70 = vector.load %arg15[%c0_94, %c40] : memref<256x72xf32, #tpu.memory_space<vmem>>, vector<256x8xf32>
    tpu.vector_store %arg15[%c0_94, %c40], %69 {strides = array<i32>} : memref<256x72xf32, #tpu.memory_space<vmem>>, vector<256x8xf32>,
    %c2_95 = arith.constant 2 : index
    %c0_96 = arith.constant 0 : index
    %c0_97 = arith.constant 0 : index
    %71 = vector.load %arg13[%c2_95, %c0_96, %c0_97] : memref<18x18x8xf32, #tpu.memory_space<vmem>>, vector<16x16x8xf32>
    %72 = vector.shape_cast %71 : vector<16x16x8xf32> to vector<256x8xf32>
    %c0_98 = arith.constant 0 : index
    %c48 = arith.constant 48 : index
    %73 = vector.load %arg15[%c0_98, %c48] : memref<256x72xf32, #tpu.memory_space<vmem>>, vector<256x8xf32>
    tpu.vector_store %arg15[%c0_98, %c48], %72 {strides = array<i32>} : memref<256x72xf32, #tpu.memory_space<vmem>>, vector<256x8xf32>,
    %c2_99 = arith.constant 2 : index
    %c1_100 = arith.constant 1 : index
    %c0_101 = arith.constant 0 : index
    %74 = vector.load %arg13[%c2_99, %c1_100, %c0_101] : memref<18x18x8xf32, #tpu.memory_space<vmem>>, vector<16x16x8xf32>
    %75 = vector.shape_cast %74 : vector<16x16x8xf32> to vector<256x8xf32>
    %c0_102 = arith.constant 0 : index
    %c56 = arith.constant 56 : index
    %76 = vector.load %arg15[%c0_102, %c56] : memref<256x72xf32, #tpu.memory_space<vmem>>, vector<256x8xf32>
    tpu.vector_store %arg15[%c0_102, %c56], %75 {strides = array<i32>} : memref<256x72xf32, #tpu.memory_space<vmem>>, vector<256x8xf32>,
    %c2_103 = arith.constant 2 : index
    %c2_104 = arith.constant 2 : index
    %c0_105 = arith.constant 0 : index
    %77 = vector.load %arg13[%c2_103, %c2_104, %c0_105] : memref<18x18x8xf32, #tpu.memory_space<vmem>>, vector<16x16x8xf32>
    %78 = vector.shape_cast %77 : vector<16x16x8xf32> to vector<256x8xf32>
    %c0_106 = arith.constant 0 : index
    %c64 = arith.constant 64 : index
    %79 = vector.load %arg15[%c0_106, %c64] : memref<256x72xf32, #tpu.memory_space<vmem>>, vector<256x8xf32>
    tpu.vector_store %arg15[%c0_106, %c64], %78 {strides = array<i32>} : memref<256x72xf32, #tpu.memory_space<vmem>>, vector<256x8xf32>,
    %c0_107 = arith.constant 0 : index
    %c0_108 = arith.constant 0 : index
    %80 = vector.load %arg15[%c0_107, %c0_108] : memref<256x72xf32, #tpu.memory_space<vmem>>, vector<256x72xf32>
    %c0_109 = arith.constant 0 : index
    %c0_110 = arith.constant 0 : index
    %81 = vector.load %arg5[%c0_109, %c0_110] : memref<72x8xf32, #tpu.memory_space<vmem>>, vector<72x8xf32>
    %cst_111 = arith.constant dense<0.000000e+00> : vector<256x8xf32>
    %82 = tpu.matmul %80, %81, %cst_111 {dimension_numbers = #tpu.dot_dimension_numbers<[1], [0], [0], [1], [0, 0, 1, 1], [], []>} : vector<256x72xf32>, vector<72x8xf32>, vector<256x8xf32> -> vector<256x8xf32>
    %c0_112 = arith.constant 0 : index
    %c0_113 = arith.constant 0 : index
    %83 = vector.load %arg6[%c0_112, %c0_113] : memref<1x8xf32, #tpu.memory_space<vmem>>, vector<1x8xf32>
    %84 = vector.broadcast %83 : vector<1x8xf32> to vector<256x8xf32>
    %85 = arith.mulf %82, %84 : vector<256x8xf32>
    %c0_114 = arith.constant 0 : index
    %c0_115 = arith.constant 0 : index
    %86 = vector.load %arg7[%c0_114, %c0_115] : memref<1x8xf32, #tpu.memory_space<vmem>>, vector<1x8xf32>
    %87 = vector.broadcast %86 : vector<1x8xf32> to vector<256x8xf32>
    %88 = arith.addf %85, %87 : vector<256x8xf32>
    %c0_116 = arith.constant 0 : index
    %c0_117 = arith.constant 0 : index
    %89 = vector.load %arg8[%c0_116, %c0_117] : memref<4x8xf32, #tpu.memory_space<vmem>>, vector<4x8xf32>
    %cst_118 = arith.constant dense<0.000000e+00> : vector<256x8xf32>
    %90 = tpu.matmul %34, %89, %cst_118 {dimension_numbers = #tpu.dot_dimension_numbers<[1], [0], [0], [1], [0, 0, 1, 1], [], []>} : vector<256x4xf32>, vector<4x8xf32>, vector<256x8xf32> -> vector<256x8xf32>
    %c0_119 = arith.constant 0 : index
    %c0_120 = arith.constant 0 : index
    %91 = vector.load %arg9[%c0_119, %c0_120] : memref<1x8xf32, #tpu.memory_space<vmem>>, vector<1x8xf32>
    %92 = vector.broadcast %91 : vector<1x8xf32> to vector<256x8xf32>
    %93 = arith.mulf %90, %92 : vector<256x8xf32>
    %c0_121 = arith.constant 0 : index
    %c0_122 = arith.constant 0 : index
    %94 = vector.load %arg10[%c0_121, %c0_122] : memref<1x8xf32, #tpu.memory_space<vmem>>, vector<1x8xf32>
    %95 = vector.broadcast %94 : vector<1x8xf32> to vector<256x8xf32>
    %96 = arith.addf %93, %95 : vector<256x8xf32>
    %97 = arith.addf %88, %96 : vector<256x8xf32>
    %cst_123 = arith.constant 0.000000e+00 : f32
    %98 = vector.broadcast %cst_123 : f32 to vector<256x8xf32>
    %99 = arith.maximumf %97, %98 : vector<256x8xf32>
    %c0_124 = arith.constant 0 : index
    %c0_125 = arith.constant 0 : index
    %c0_126 = arith.constant 0 : index
    %100 = vector.load %arg11[%c0_124, %c0_125, %c0_126] : memref<1x256x8xf32, #tpu.memory_space<vmem>>, vector<1x256x8xf32>
    %101 = vector.shape_cast %100 : vector<1x256x8xf32> to vector<256x8xf32>
    %102 = vector.shape_cast %99 : vector<256x8xf32> to vector<1x256x8xf32>
    tpu.vector_store %arg11[%c0_124, %c0_125, %c0_126], %102 {strides = array<i32>} : memref<1x256x8xf32, #tpu.memory_space<vmem>>, vector<1x256x8xf32>,
    return
  }
  func.func @transform_0(%arg0: i32) -> (i32, i32, i32, i32) {
    %c0_i32 = arith.constant 0 : i32
    %c0_i32_0 = arith.constant 0 : i32
    %c0_i32_1 = arith.constant 0 : i32
    %c0_i32_2 = arith.constant 0 : i32
    return %arg0, %c0_i32, %c0_i32_0, %c0_i32_1 : i32, i32, i32, i32
  }
  func.func @transform_1(%arg0: i32) -> (i32, i32) {
    %c0_i32 = arith.constant 0 : i32
    %c0_i32_0 = arith.constant 0 : i32
    %c0_i32_1 = arith.constant 0 : i32
    return %c0_i32, %c0_i32_0 : i32, i32
  }
  func.func @transform_2(%arg0: i32) -> (i32, i32) {
    %c0_i32 = arith.constant 0 : i32
    %c0_i32_0 = arith.constant 0 : i32
    %c0_i32_1 = arith.constant 0 : i32
    return %c0_i32, %c0_i32_0 : i32, i32
  }
  func.func @transform_3(%arg0: i32) -> (i32, i32) {
    %c0_i32 = arith.constant 0 : i32
    %c0_i32_0 = arith.constant 0 : i32
    %c0_i32_1 = arith.constant 0 : i32
    return %c0_i32, %c0_i32_0 : i32, i32
  }
  func.func @transform_4(%arg0: i32) -> (i32, i32) {
    %c0_i32 = arith.constant 0 : i32
    %c0_i32_0 = arith.constant 0 : i32
    %c0_i32_1 = arith.constant 0 : i32
    return %c0_i32, %c0_i32_0 : i32, i32
  }
  func.func @transform_5(%arg0: i32) -> (i32, i32) {
    %c0_i32 = arith.constant 0 : i32
    %c0_i32_0 = arith.constant 0 : i32
    %c0_i32_1 = arith.constant 0 : i32
    return %c0_i32, %c0_i32_0 : i32, i32
  }
  func.func @transform_6(%arg0: i32) -> (i32, i32) {
    %c0_i32 = arith.constant 0 : i32
    %c0_i32_0 = arith.constant 0 : i32
    %c0_i32_1 = arith.constant 0 : i32
    return %c0_i32, %c0_i32_0 : i32, i32
  }
  func.func @transform_7(%arg0: i32) -> (i32, i32) {
    %c0_i32 = arith.constant 0 : i32
    %c0_i32_0 = arith.constant 0 : i32
    %c0_i32_1 = arith.constant 0 : i32
    return %c0_i32, %c0_i32_0 : i32, i32
  }
  func.func @transform_8(%arg0: i32) -> (i32, i32) {
    %c0_i32 = arith.constant 0 : i32
    %c0_i32_0 = arith.constant 0 : i32
    %c0_i32_1 = arith.constant 0 : i32
    return %c0_i32, %c0_i32_0 : i32, i32
  }
  func.func @transform_9(%arg0: i32) -> (i32, i32) {
    %c0_i32 = arith.constant 0 : i32
    %c0_i32_0 = arith.constant 0 : i32
    %c0_i32_1 = arith.constant 0 : i32
    return %c0_i32, %c0_i32_0 : i32, i32
  }
  func.func @transform_10(%arg0: i32) -> (i32, i32, i32) {
    %c0_i32 = arith.constant 0 : i32
    %c0_i32_0 = arith.constant 0 : i32
    %c0_i32_1 = arith.constant 0 : i32
    return %arg0, %c0_i32, %c0_i32_0 : i32, i32, i32
  }
}

</mosaic_0001>

<llo_original>
// kernel: tpu_custom_call.1
$region0: #{tpu_custom_call.1}
  #allocation0 [shape = 'u32[]', space=smem, size = 0x4, offset = 0x4, fixed_abs, tag = 'smem constant byte address 0x4 - core index']
  #allocation1 [shape = 'u32[72,128]{1,0:T(1,128)}', space=vmem, size = 0x9000, scoped, tag = 'internal scratch']
  #allocation2 [shape = 'f32[18,18,4]{2,1,0:T(8,128)}', space=vmem, size = 0x36000, scoped, tag = 'scratch operand']
  #allocation3 [shape = 'f32[18,18,8]{2,1,0:T(8,128)}', space=vmem, size = 0x36000, scoped, tag = 'scratch operand']
  #allocation4 [shape = 'f32[256,36]{1,0:T(8,128)}', space=vmem, size = 0x20000, scoped, tag = 'scratch operand']
  #allocation5 [shape = 'f32[256,72]{1,0:T(8,128)}', space=vmem, size = 0x20000, scoped, tag = 'scratch operand']
  %s0 = inlined_call_operand.vmem [shape: f32[2,16,16,4], index: 0, kind: input, shape index: {}]
  %s1 = inlined_call_operand.vmem [shape: f32[36,8], index: 1, kind: input, shape index: {}]
  %s2 = inlined_call_operand.vmem [shape: f32[1,8], index: 2, kind: input, shape index: {}]
  %s3 = inlined_call_operand.vmem [shape: f32[1,8], index: 3, kind: input, shape index: {}]
  %s4 = inlined_call_operand.vmem [shape: f32[72,8], index: 4, kind: input, shape index: {}]
  %s5 = inlined_call_operand.vmem [shape: f32[1,8], index: 5, kind: input, shape index: {}]
  %s6 = inlined_call_operand.vmem [shape: f32[1,8], index: 6, kind: input, shape index: {}]
  %s7 = inlined_call_operand.vmem [shape: f32[4,8], index: 7, kind: input, shape index: {}]
  %s8 = inlined_call_operand.vmem [shape: f32[1,8], index: 8, kind: input, shape index: {}]
  %s9 = inlined_call_operand.vmem [shape: f32[1,8], index: 9, kind: input, shape index: {}]
  %s10 = inlined_call_operand.vmem [shape: f32[2,256,8], index: 10, kind: output, shape index: {}]
  %s11 = sld [smem:[#allocation0]]
  $region73: #{tpu_custom_call.1} parent=0
    _
  %s13 = ssub.s32 1, %s11
  %s14 = scalar_select 0, %s13, %s11
  loop: start=0, step=1, limit=4
  $region2: #{tpu_custom_call.1} parent=0 // loop_pre_header
    _
  $region3: #{tpu_custom_call.1} parent=0 // loop_header
    %s16 = sphi 0, %s20
    %p17 = scmp.ge.s32.totalorder %s16, 4
    %s26 = sphi 0, %s28
    %s29 = sphi 0, %s26
    %s30 = sphi 0, %s29
    %s46 = sphi 0, %s30
    %s50 = sphi 0, %s50
    %s52 = sphi 0, %s50
    %s53 = sphi 0, %s52
    %s67 = sphi 0, %s53
    %s71 = sphi 0, %s71
    %s73 = sphi 0, %s71
    %s74 = sphi 0, %s73
    %s88 = sphi 0, %s74
    %s92 = sphi 0, %s92
    %s94 = sphi 0, %s92
    %s95 = sphi 0, %s94
    %s109 = sphi 0, %s95
    %s113 = sphi 0, %s113
    %s115 = sphi 0, %s113
    %s116 = sphi 0, %s115
    %s130 = sphi 0, %s116
    %s134 = sphi 0, %s134
    %s136 = sphi 0, %s134
    %s137 = sphi 0, %s136
    %s151 = sphi 0, %s137
    %s155 = sphi 0, %s155
    %s157 = sphi 0, %s155
    %s158 = sphi 0, %s157
    %s172 = sphi 0, %s158
    %s176 = sphi 0, %s176
    %s178 = sphi 0, %s176
    %s179 = sphi 0, %s178
    %s193 = sphi 0, %s179
    %s197 = sphi 0, %s197
    %s199 = sphi 0, %s197
    %s200 = sphi 0, %s199
    %s214 = sphi 0, %s200
    %s218 = sphi 0, %s218
    %s220 = sphi 0, %s218
    %s221 = sphi 0, %s220
    %s235 = sphi 0, %s221
    %s241 = sphi 0, %s243
    %s244 = sphi 0, %s241
    %s245 = sphi 0, %s244
    %s261 = sphi 0, %s245
  $region4: #{tpu_custom_call.1} parent=0 // loop_header_branch
    %19 = sbr.rel (%p17) target = $region8
  $region5: #{tpu_custom_call.1} parent=0 // loop_body
    %s21 = ssub.s32 %s16, 1
    %s22 = ssub.s32 %s16, 2
    %s23 = sadd.s32 %s16, 1
    %s24 = ssub.s32 %s16, %s23
    %p25 = scmp.eq.s32.totalorder %s24, 0
    %s27 = sadd.s32 %s26, 1
    %s28 = scalar_select %p25, %s26, %s27
    %p31 = pneg %p25
    %p32 = scmp.eq.s32.totalorder %s16, 1
    %p33 = por %p31, %p32
    %p34 = scmp.ne.s32.totalorder %s26, %s29
    %p35 = scmp.eq.s32.totalorder %s16, 0
    %p36 = por %p34, %p35
    %p37 = scmp.ne.s32.totalorder %s26, %s29
    %p38 = scmp.eq.s32.totalorder %s21, 1
    %p39 = por %p37, %p38
    %p40 = scmp.ne.s32.totalorder %s29, %s30
    %p41 = scmp.eq.s32.totalorder %s21, 0
    %p42 = por %p40, %p41
    %p43 = scmp.ne.s32.totalorder %s29, %s30
    %p44 = scmp.eq.s32.totalorder %s22, 1
    %p45 = por %p43, %p44
    %p47 = scmp.ne.s32.totalorder %s30, %s46
    %p48 = scmp.eq.s32.totalorder %s22, 0
    %p49 = por %p47, %p48
    %s51 = sadd.s32 %s50, 1
    %p54 = scmp.eq.s32.totalorder %s16, 1
    %p55 = scmp.ne.s32.totalorder %s50, %s52
    %p56 = scmp.eq.s32.totalorder %s16, 0
    %p57 = por %p55, %p56
    %p58 = scmp.ne.s32.totalorder %s50, %s52
    %p59 = scmp.eq.s32.totalorder %s21, 1
    %p60 = por %p58, %p59
    %p61 = scmp.ne.s32.totalorder %s52, %s53
    %p62 = scmp.eq.s32.totalorder %s21, 0
    %p63 = por %p61, %p62
    %p64 = scmp.ne.s32.totalorder %s52, %s53
    %p65 = scmp.eq.s32.totalorder %s22, 1
    %p66 = por %p64, %p65
    %p68 = scmp.ne.s32.totalorder %s53, %s67
    %p69 = scmp.eq.s32.totalorder %s22, 0
    %p70 = por %p68, %p69
    %s72 = sadd.s32 %s71, 1
    %p75 = scmp.eq.s32.totalorder %s16, 1
    %p76 = scmp.ne.s32.totalorder %s71, %s73
    %p77 = scmp.eq.s32.totalorder %s16, 0
    %p78 = por %p76, %p77
    %p79 = scmp.ne.s32.totalorder %s71, %s73
    %p80 = scmp.eq.s32.totalorder %s21, 1
    %p81 = por %p79, %p80
    %p82 = scmp.ne.s32.totalorder %s73, %s74
    %p83 = scmp.eq.s32.totalorder %s21, 0
    %p84 = por %p82, %p83
    %p85 = scmp.ne.s32.totalorder %s73, %s74
    %p86 = scmp.eq.s32.totalorder %s22, 1
    %p87 = por %p85, %p86
    %p89 = scmp.ne.s32.totalorder %s74, %s88
    %p90 = scmp.eq.s32.totalorder %s22, 0
    %p91 = por %p89, %p90
    %s93 = sadd.s32 %s92, 1
    %p96 = scmp.eq.s32.totalorder %s16, 1
    %p97 = scmp.ne.s32.totalorder %s92, %s94
    %p98 = scmp.eq.s32.totalorder %s16, 0
    %p99 = por %p97, %p98
    %p100 = scmp.ne.s32.totalorder %s92, %s94
    %p101 = scmp.eq.s32.totalorder %s21, 1
    %p102 = por %p100, %p101
    %p103 = scmp.ne.s32.totalorder %s94, %s95
    %p104 = scmp.eq.s32.totalorder %s21, 0
    %p105 = por %p103, %p104
    %p106 = scmp.ne.s32.totalorder %s94, %s95
    %p107 = scmp.eq.s32.totalorder %s22, 1
    %p108 = por %p106, %p107
    %p110 = scmp.ne.s32.totalorder %s95, %s109
    %p111 = scmp.eq.s32.totalorder %s22, 0
    %p112 = por %p110, %p111
    %s114 = sadd.s32 %s113, 1
    %p117 = scmp.eq.s32.totalorder %s16, 1
    %p118 = scmp.ne.s32.totalorder %s113, %s115
    %p119 = scmp.eq.s32.totalorder %s16, 0
    %p120 = por %p118, %p119
    %p121 = scmp.ne.s32.totalorder %s113, %s115
    %p122 = scmp.eq.s32.totalorder %s21, 1
    %p123 = por %p121, %p122
    %p124 = scmp.ne.s32.totalorder %s115, %s116
    %p125 = scmp.eq.s32.totalorder %s21, 0
    %p126 = por %p124, %p125
    %p127 = scmp.ne.s32.totalorder %s115, %s116
    %p128 = scmp.eq.s32.totalorder %s22, 1
    %p129 = por %p127, %p128
    %p131 = scmp.ne.s32.totalorder %s116, %s130
    %p132 = scmp.eq.s32.totalorder %s22, 0
    %p133 = por %p131, %p132
    %s135 = sadd.s32 %s134, 1
    %p138 = scmp.eq.s32.totalorder %s16, 1
    %p139 = scmp.ne.s32.totalorder %s134, %s136
    %p140 = scmp.eq.s32.totalorder %s16, 0
    %p141 = por %p139, %p140
    %p142 = scmp.ne.s32.totalorder %s134, %s136
    %p143 = scmp.eq.s32.totalorder %s21, 1
    %p144 = por %p142, %p143
    %p145 = scmp.ne.s32.totalorder %s136, %s137
    %p146 = scmp.eq.s32.totalorder %s21, 0
    %p147 = por %p145, %p146
    %p148 = scmp.ne.s32.totalorder %s136, %s137
    %p149 = scmp.eq.s32.totalorder %s22, 1
    %p150 = por %p148, %p149
    %p152 = scmp.ne.s32.totalorder %s137, %s151
    %p153 = scmp.eq.s32.totalorder %s22, 0
    %p154 = por %p152, %p153
    %s156 = sadd.s32 %s155, 1
    %p159 = scmp.eq.s32.totalorder %s16, 1
    %p160 = scmp.ne.s32.totalorder %s155, %s157
    %p161 = scmp.eq.s32.totalorder %s16, 0
    %p162 = por %p160, %p161
    %p163 = scmp.ne.s32.totalorder %s155, %s157
    %p164 = scmp.eq.s32.totalorder %s21, 1
    %p165 = por %p163, %p164
    %p166 = scmp.ne.s32.totalorder %s157, %s158
    %p167 = scmp.eq.s32.totalorder %s21, 0
    %p168 = por %p166, %p167
    %p169 = scmp.ne.s32.totalorder %s157, %s158
    %p170 = scmp.eq.s32.totalorder %s22, 1
    %p171 = por %p169, %p170
    %p173 = scmp.ne.s32.totalorder %s158, %s172
    %p174 = scmp.eq.s32.totalorder %s22, 0
    %p175 = por %p173, %p174
    %s177 = sadd.s32 %s176, 1
    %p180 = scmp.eq.s32.totalorder %s16, 1
    %p181 = scmp.ne.s32.totalorder %s176, %s178
    %p182 = scmp.eq.s32.totalorder %s16, 0
    %p183 = por %p181, %p182
    %p184 = scmp.ne.s32.totalorder %s176, %s178
    %p185 = scmp.eq.s32.totalorder %s21, 1
    %p186 = por %p184, %p185
    %p187 = scmp.ne.s32.totalorder %s178, %s179
    %p188 = scmp.eq.s32.totalorder %s21, 0
    %p189 = por %p187, %p188
    %p190 = scmp.ne.s32.totalorder %s178, %s179
    %p191 = scmp.eq.s32.totalorder %s22, 1
    %p192 = por %p190, %p191
    %p194 = scmp.ne.s32.totalorder %s179, %s193
    %p195 = scmp.eq.s32.totalorder %s22, 0
    %p196 = por %p194, %p195
    %s198 = sadd.s32 %s197, 1
    %p201 = scmp.eq.s32.totalorder %s16, 1
    %p202 = scmp.ne.s32.totalorder %s197, %s199
    %p203 = scmp.eq.s32.totalorder %s16, 0
    %p204 = por %p202, %p203
    %p205 = scmp.ne.s32.totalorder %s197, %s199
    %p206 = scmp.eq.s32.totalorder %s21, 1
    %p207 = por %p205, %p206
    %p208 = scmp.ne.s32.totalorder %s199, %s200
    %p209 = scmp.eq.s32.totalorder %s21, 0
    %p210 = por %p208, %p209
    %p211 = scmp.ne.s32.totalorder %s199, %s200
    %p212 = scmp.eq.s32.totalorder %s22, 1
    %p213 = por %p211, %p212
    %p215 = scmp.ne.s32.totalorder %s200, %s214
    %p216 = scmp.eq.s32.totalorder %s22, 0
    %p217 = por %p215, %p216
    %s219 = sadd.s32 %s218, 1
    %p222 = scmp.eq.s32.totalorder %s16, 1
    %p223 = scmp.ne.s32.totalorder %s218, %s220
    %p224 = scmp.eq.s32.totalorder %s16, 0
    %p225 = por %p223, %p224
    %p226 = scmp.ne.s32.totalorder %s218, %s220
    %p227 = scmp.eq.s32.totalorder %s21, 1
    %p228 = por %p226, %p227
    %p229 = scmp.ne.s32.totalorder %s220, %s221
    %p230 = scmp.eq.s32.totalorder %s21, 0
    %p231 = por %p229, %p230
    %p232 = scmp.ne.s32.totalorder %s220, %s221
    %p233 = scmp.eq.s32.totalorder %s22, 1
    %p234 = por %p232, %p233
    %p236 = scmp.ne.s32.totalorder %s221, %s235
    %p237 = scmp.eq.s32.totalorder %s22, 0
    %p238 = por %p236, %p237
    %s239 = ssub.s32 %s16, %s23
    %p240 = scmp.eq.s32.totalorder %s239, 0
    %s242 = sadd.s32 %s241, 1
    %s243 = scalar_select %p240, %s241, %s242
    %p246 = pneg %p240
    %p247 = scmp.eq.s32.totalorder %s16, 1
    %p248 = por %p246, %p247
    %p249 = scmp.ne.s32.totalorder %s241, %s244
    %p250 = scmp.eq.s32.totalorder %s16, 0
    %p251 = por %p249, %p250
    %p252 = scmp.ne.s32.totalorder %s241, %s244
    %p253 = scmp.eq.s32.totalorder %s21, 1
    %p254 = por %p252, %p253
    %p255 = scmp.ne.s32.totalorder %s244, %s245
    %p256 = scmp.eq.s32.totalorder %s21, 0
    %p257 = por %p255, %p256
    %p258 = scmp.ne.s32.totalorder %s244, %s245
    %p259 = scmp.eq.s32.totalorder %s22, 1
    %p260 = por %p258, %p259
    %p262 = scmp.ne.s32.totalorder %s245, %s261
    %p263 = scmp.eq.s32.totalorder %s22, 0
    %p264 = por %p262, %p263
    %p265 = scmp.le.s32.totalorder 1, %s16
    %p266 = scmp.lt.s32.totalorder %s16, 3
    %p267 = pnand %p265, %p266
    %p268 = pneg %p267
    // Predicated region
    $region9: #{tpu_custom_call.1} parent=5 // pred_check
      _
    $region10: #{tpu_custom_call.1} parent=5 // pred_check_branch
      %270 = sbr.rel (%p267) target = $region12
    $region11: #{tpu_custom_call.1} parent=5 // pred_region
      %s271 = ssub.s32 %s16, 1
      // Predicated region
      $region13: #{tpu_custom_call.1} parent=11 // pred_check
        %p272 = pneg %p63
      $region14: #{tpu_custom_call.1} parent=11 // pred_check_branch
        %274 = sbr.rel (%p272) target = $region16
      $region15: #{tpu_custom_call.1} parent=11 // pred_region
        _
      $region16: #{tpu_custom_call.1} parent=11 // pred_fallthru
        _
      // Predicated region
      $region17: #{tpu_custom_call.1} parent=11 // pred_check
        %p275 = pneg %p84
      $region18: #{tpu_custom_call.1} parent=11 // pred_check_branch
        %277 = sbr.rel (%p275) target = $region20
      $region19: #{tpu_custom_call.1} parent=11 // pred_region
        _
      $region20: #{tpu_custom_call.1} parent=11 // pred_fallthru
        _
      // Predicated region
      $region21: #{tpu_custom_call.1} parent=11 // pred_check
        %p278 = pneg %p105
      $region22: #{tpu_custom_call.1} parent=11 // pred_check_branch
        %280 = sbr.rel (%p278) target = $region24
      $region23: #{tpu_custom_call.1} parent=11 // pred_region
        _
      $region24: #{tpu_custom_call.1} parent=11 // pred_fallthru
        _
      // Predicated region
      $region25: #{tpu_custom_call.1} parent=11 // pred_check
        %p281 = pneg %p126
      $region26: #{tpu_custom_call.1} parent=11 // pred_check_branch
        %283 = sbr.rel (%p281) target = $region28
      $region27: #{tpu_custom_call.1} parent=11 // pred_region
        _
      $region28: #{tpu_custom_call.1} parent=11 // pred_fallthru
        _
      // Predicated region
      $region29: #{tpu_custom_call.1} parent=11 // pred_check
        %p284 = pneg %p147
      $region30: #{tpu_custom_call.1} parent=11 // pred_check_branch
        %286 = sbr.rel (%p284) target = $region32
      $region31: #{tpu_custom_call.1} parent=11 // pred_region
        _
      $region32: #{tpu_custom_call.1} parent=11 // pred_fallthru
        _
      // Predicated region
      $region33: #{tpu_custom_call.1} parent=11 // pred_check
        %p287 = pneg %p168
      $region34: #{tpu_custom_call.1} parent=11 // pred_check_branch
        %289 = sbr.rel (%p287) target = $region36
      $region35: #{tpu_custom_call.1} parent=11 // pred_region
        _
      $region36: #{tpu_custom_call.1} parent=11 // pred_fallthru
        _
      // Predicated region
      $region37: #{tpu_custom_call.1} parent=11 // pred_check
        %p290 = pneg %p189
      $region38: #{tpu_custom_call.1} parent=11 // pred_check_branch
        %292 = sbr.rel (%p290) target = $region40
      $region39: #{tpu_custom_call.1} parent=11 // pred_region
        _
      $region40: #{tpu_custom_call.1} parent=11 // pred_fallthru
        _
      // Predicated region
      $region41: #{tpu_custom_call.1} parent=11 // pred_check
        %p293 = pneg %p210
      $region42: #{tpu_custom_call.1} parent=11 // pred_check_branch
        %295 = sbr.rel (%p293) target = $region44
      $region43: #{tpu_custom_call.1} parent=11 // pred_region
        _
      $region44: #{tpu_custom_call.1} parent=11 // pred_fallthru
        _
      // Predicated region
      $region45: #{tpu_custom_call.1} parent=11 // pred_check
        %p296 = pneg %p231
      $region46: #{tpu_custom_call.1} parent=11 // pred_check_branch
        %298 = sbr.rel (%p296) target = $region48
      $region47: #{tpu_custom_call.1} parent=11 // pred_region
        _
      $region48: #{tpu_custom_call.1} parent=11 // pred_fallthru
        _
    $region12: #{tpu_custom_call.1} parent=5 // pred_fallthru
      _
    %p299 = scmp.lt.s32.totalorder %s16, 2
    // Predicated region
    $region49: #{tpu_custom_call.1} parent=5 // pred_check
      %p300 = pneg %p299
    $region50: #{tpu_custom_call.1} parent=5 // pred_check_branch
      %302 = sbr.rel (%p300) target = $region52
    $region51: #{tpu_custom_call.1} parent=5 // pred_region
      // Predicated region
      $region53: #{tpu_custom_call.1} parent=51 // pred_check
        %p303 = pneg %p36
      $region54: #{tpu_custom_call.1} parent=51 // pred_check_branch
        %305 = sbr.rel (%p303) target = $region56
      $region55: #{tpu_custom_call.1} parent=51 // pred_region
        %p306 = scmp.lt.s32.totalorder %s16, 1
        %s307 = scalar_select %p306, %s16, 1
        %s308 = smul.addr %s307, 32
        %s309 = smul.addr %s308, 8
        %s310 = scalar_lea.vmem %s0, %s309
      $region56: #{tpu_custom_call.1} parent=51 // pred_fallthru
        _
    $region52: #{tpu_custom_call.1} parent=5 // pred_fallthru
      _
    %p311 = scmp.le.s32.totalorder 1, %s16
    %p312 = scmp.lt.s32.totalorder %s16, 3
    %p313 = pnand %p311, %p312
    %p314 = pneg %p313
    // Predicated region
    $region57: #{tpu_custom_call.1} parent=5 // pred_check
      _
    $region58: #{tpu_custom_call.1} parent=5 // pred_check_branch
      %316 = sbr.rel (%p313) target = $region60
    $region59: #{tpu_custom_call.1} parent=5 // pred_region
      %s317 = ssub.s32 %s16, 1
      %p318 = scmp.lt.s32.totalorder %s21, 1
      %s319 = scalar_select %p318, %s21, 1
      %s320 = smul.addr %s319, 32
      %s321 = smul.addr %s320, 8
      %s322 = scalar_lea.vmem %s0, %s321
      %p323 = pneg %p42
      %p324 = pneg %p39
      %p325 = pneg %p63
      %p326 = pneg %p60
      %p327 = pneg %p84
      %p328 = pneg %p81
      %p329 = pneg %p105
      %p330 = pneg %p102
      %p331 = pneg %p126
      %p332 = pneg %p123
      %p333 = pneg %p147
      %p334 = pneg %p144
      %p335 = pneg %p168
      %p336 = pneg %p165
      %p337 = pneg %p189
      %p338 = pneg %p186
      %p339 = pneg %p210
      %p340 = pneg %p207
      %p341 = pneg %p231
      %p342 = pneg %p228
      %p343 = pneg %p257
      %p344 = pneg %p254
      %p345 = scmp.lt.s32.totalorder %s21, 1
      %s346 = scalar_select %p345, %s21, 1
      %s347 = smul.addr %s346, 32
      %s348 = smul.addr %s347, 8
      %s349 = scalar_lea.vmem %s10, %s348
      %p350 = scmp.lt.s32.totalorder %s21, 1
      %s351 = scalar_select %p350, %s21, 1
      %s352 = smul.addr %s351, 32
      %s353 = smul.addr %s352, 8
      %s354 = scalar_lea.vmem %s0, %s353
      %p355 = scmp.lt.s32.totalorder %s21, 1
      %s356 = scalar_select %p355, %s21, 1
      %s357 = smul.addr %s356, 32
      %s358 = smul.addr %s357, 8
      %s359 = scalar_lea.vmem %s10, %s358
      %vm360 = vcmask 31744
      %361 = vst.msk [vmem:[#allocation2] sm:$0xff] %vm360, 0.0
      %362 = vst.msk [vmem:[#allocation2 + $0x8] sm:$0xff] %vm360, 0.0
      %vm363 = vcmask 25600
      %364 = vst.msk [vmem:[#allocation2 + $0x10] sm:$0x3] %vm363, 0.0
      %365 = vst.msk [vmem:[#allocation2 + $0x18] sm:$0xff] %vm360, 0.0
      %366 = vst.msk [vmem:[#allocation2 + $0x20] sm:$0xff] %vm360, 0.0
      %367 = vst.msk [vmem:[#allocation2 + $0x28] sm:$0x3] %vm363, 0.0
      %368 = vst.msk [vmem:[#allocation2 + $0x30] sm:$0xff] %vm360, 0.0
      %369 = vst.msk [vmem:[#allocation2 + $0x38] sm:$0xff] %vm360, 0.0
      %370 = vst.msk [vmem:[#allocation2 + $0x40] sm:$0x3] %vm363, 0.0
      %371 = vst.msk [vmem:[#allocation2 + $0x48] sm:$0xff] %vm360, 0.0
      %372 = vst.msk [vmem:[#allocation2 + $0x50] sm:$0xff] %vm360, 0.0
      %373 = vst.msk [vmem:[#allocation2 + $0x58] sm:$0x3] %vm363, 0.0
      %374 = vst.msk [vmem:[#allocation2 + $0x60] sm:$0xff] %vm360, 0.0
      %375 = vst.msk [vmem:[#allocation2 + $0x68] sm:$0xff] %vm360, 0.0
      %376 = vst.msk [vmem:[#allocation2 + $0x70] sm:$0x3] %vm363, 0.0
      %377 = vst.msk [vmem:[#allocation2 + $0x78] sm:$0xff] %vm360, 0.0
      %378 = vst.msk [vmem:[#allocation2 + $0x80] sm:$0xff] %vm360, 0.0
      %379 = vst.msk [vmem:[#allocation2 + $0x88] sm:$0x3] %vm363, 0.0
      %380 = vst.msk [vmem:[#allocation2 + $0x90] sm:$0xff] %vm360, 0.0
      %381 = vst.msk [vmem:[#allocation2 + $0x98] sm:$0xff] %vm360, 0.0
      %382 = vst.msk [vmem:[#allocation2 + $0xa0] sm:$0x3] %vm363, 0.0
      %383 = vst.msk [vmem:[#allocation2 + $0xa8] sm:$0xff] %vm360, 0.0
      %384 = vst.msk [vmem:[#allocation2 + $0xb0] sm:$0xff] %vm360, 0.0
      %385 = vst.msk [vmem:[#allocation2 + $0xb8] sm:$0x3] %vm363, 0.0
      %386 = vst.msk [vmem:[#allocation2 + $0xc0] sm:$0xff] %vm360, 0.0
      %387 = vst.msk [vmem:[#allocation2 + $0xc8] sm:$0xff] %vm360, 0.0
      %388 = vst.msk [vmem:[#allocation2 + $0xd0] sm:$0x3] %vm363, 0.0
      %389 = vst.msk [vmem:[#allocation2 + $0xd8] sm:$0xff] %vm360, 0.0
      %390 = vst.msk [vmem:[#allocation2 + $0xe0] sm:$0xff] %vm360, 0.0
      %391 = vst.msk [vmem:[#allocation2 + $0xe8] sm:$0x3] %vm363, 0.0
      %392 = vst.msk [vmem:[#allocation2 + $0xf0] sm:$0xff] %vm360, 0.0
      %393 = vst.msk [vmem:[#allocation2 + $0xf8] sm:$0xff] %vm360, 0.0
      %394 = vst.msk [vmem:[#allocation2 + $0x100] sm:$0x3] %vm363, 0.0
      %395 = vst.msk [vmem:[#allocation2 + $0x108] sm:$0xff] %vm360, 0.0
      %396 = vst.msk [vmem:[#allocation2 + $0x110] sm:$0xff] %vm360, 0.0
      %397 = vst.msk [vmem:[#allocation2 + $0x118] sm:$0x3] %vm363, 0.0
      %398 = vst.msk [vmem:[#allocation2 + $0x120] sm:$0xff] %vm360, 0.0
      %399 = vst.msk [vmem:[#allocation2 + $0x128] sm:$0xff] %vm360, 0.0
      %400 = vst.msk [vmem:[#allocation2 + $0x130] sm:$0x3] %vm363, 0.0
      %401 = vst.msk [vmem:[#allocation2 + $0x138] sm:$0xff] %vm360, 0.0
      %402 = vst.msk [vmem:[#allocation2 + $0x140] sm:$0xff] %vm360, 0.0
      %403 = vst.msk [vmem:[#allocation2 + $0x148] sm:$0x3] %vm363, 0.0
      %404 = vst.msk [vmem:[#allocation2 + $0x150] sm:$0xff] %vm360, 0.0
      %405 = vst.msk [vmem:[#allocation2 + $0x158] sm:$0xff] %vm360, 0.0
      %406 = vst.msk [vmem:[#allocation2 + $0x160] sm:$0x3] %vm363, 0.0
      %407 = vst.msk [vmem:[#allocation2 + $0x168] sm:$0xff] %vm360, 0.0
      %408 = vst.msk [vmem:[#allocation2 + $0x170] sm:$0xff] %vm360, 0.0
      %409 = vst.msk [vmem:[#allocation2 + $0x178] sm:$0x3] %vm363, 0.0
      %410 = vst.msk [vmem:[#allocation2 + $0x180] sm:$0xff] %vm360, 0.0
      %411 = vst.msk [vmem:[#allocation2 + $0x188] sm:$0xff] %vm360, 0.0
      %412 = vst.msk [vmem:[#allocation2 + $0x190] sm:$0x3] %vm363, 0.0
      %413 = vst.msk [vmem:[#allocation2 + $0x198] sm:$0xff] %vm360, 0.0
      %414 = vst.msk [vmem:[#allocation2 + $0x1a0] sm:$0xff] %vm360, 0.0
      %415 = vst.msk [vmem:[#allocation2 + $0x1a8] sm:$0x3] %vm363, 0.0
      %v416 = vld [vmem:[%s354] sm:$0xff]
      %v417 = vld [vmem:[%s354 + $0x8] sm:$0xff]
      %v418 = vld [vmem:[%s354 + $0x10] sm:$0xff]
      %v419 = vld [vmem:[%s354 + $0x18] sm:$0xff]
      %v420 = vld [vmem:[%s354 + $0x20] sm:$0xff]
      %v421 = vld [vmem:[%s354 + $0x28] sm:$0xff]
      %v422 = vld [vmem:[%s354 + $0x30] sm:$0xff]
      %v423 = vld [vmem:[%s354 + $0x38] sm:$0xff]
      %v424 = vld [vmem:[%s354 + $0x40] sm:$0xff]
      %v425 = vld [vmem:[%s354 + $0x48] sm:$0xff]
      %v426 = vld [vmem:[%s354 + $0x50] sm:$0xff]
      %v427 = vld [vmem:[%s354 + $0x58] sm:$0xff]
      %v428 = vld [vmem:[%s354 + $0x60] sm:$0xff]
      %v429 = vld [vmem:[%s354 + $0x68] sm:$0xff]
      %v430 = vld [vmem:[%s354 + $0x70] sm:$0xff]
      %v431 = vld [vmem:[%s354 + $0x78] sm:$0xff]
      %v432 = vld [vmem:[%s354 + $0x80] sm:$0xff]
      %v433 = vld [vmem:[%s354 + $0x88] sm:$0xff]
      %v434 = vld [vmem:[%s354 + $0x90] sm:$0xff]
      %v435 = vld [vmem:[%s354 + $0x98] sm:$0xff]
      %v436 = vld [vmem:[%s354 + $0xa0] sm:$0xff]
      %v437 = vld [vmem:[%s354 + $0xa8] sm:$0xff]
      %v438 = vld [vmem:[%s354 + $0xb0] sm:$0xff]
      %v439 = vld [vmem:[%s354 + $0xb8] sm:$0xff]
      %v440 = vld [vmem:[%s354 + $0xc0] sm:$0xff]
      %v441 = vld [vmem:[%s354 + $0xc8] sm:$0xff]
      %v442 = vld [vmem:[%s354 + $0xd0] sm:$0xff]
      %v443 = vld [vmem:[%s354 + $0xd8] sm:$0xff]
      %v444 = vld [vmem:[%s354 + $0xe0] sm:$0xff]
      %v445 = vld [vmem:[%s354 + $0xe8] sm:$0xff]
      %v446 = vld [vmem:[%s354 + $0xf0] sm:$0xff]
      %v447 = vld [vmem:[%s354 + $0xf8] sm:$0xff]
      %s448 = scalar_lea.vmem [#allocation2], 24
      %449 = vst.msk [vmem:[%s448 + $0x1] sm:$0xff] %vm360, %v416
      %450 = vst.msk [vmem:[%s448 + $0x9] sm:$0xff] %vm360, %v417
      %451 = vst.msk [vmem:[%s448 + $0x19] sm:$0xff] %vm360, %v418
      %452 = vst.msk [vmem:[%s448 + $0x21] sm:$0xff] %vm360, %v419
      %453 = vst.msk [vmem:[%s448 + $0x31] sm:$0xff] %vm360, %v420
      %454 = vst.msk [vmem:[%s448 + $0x39] sm:$0xff] %vm360, %v421
      %455 = vst.msk [vmem:[%s448 + $0x49] sm:$0xff] %vm360, %v422
      %456 = vst.msk [vmem:[%s448 + $0x51] sm:$0xff] %vm360, %v423
      %457 = vst.msk [vmem:[%s448 + $0x61] sm:$0xff] %vm360, %v424
      %458 = vst.msk [vmem:[%s448 + $0x69] sm:$0xff] %vm360, %v425
      %459 = vst.msk [vmem:[%s448 + $0x79] sm:$0xff] %vm360, %v426
      %460 = vst.msk [vmem:[%s448 + $0x81] sm:$0xff] %vm360, %v427
      %461 = vst.msk [vmem:[%s448 + $0x91] sm:$0xff] %vm360, %v428
      %462 = vst.msk [vmem:[%s448 + $0x99] sm:$0xff] %vm360, %v429
      %463 = vst.msk [vmem:[%s448 + $0xa9] sm:$0xff] %vm360, %v430
      %464 = vst.msk [vmem:[%s448 + $0xb1] sm:$0xff] %vm360, %v431
      %465 = vst.msk [vmem:[%s448 + $0xc1] sm:$0xff] %vm360, %v432
      %466 = vst.msk [vmem:[%s448 + $0xc9] sm:$0xff] %vm360, %v433
      %467 = vst.msk [vmem:[%s448 + $0xd9] sm:$0xff] %vm360, %v434
      %468 = vst.msk [vmem:[%s448 + $0xe1] sm:$0xff] %vm360, %v435
      %469 = vst.msk [vmem:[%s448 + $0xf1] sm:$0xff] %vm360, %v436
      %470 = vst.msk [vmem:[%s448 + $0xf9] sm:$0xff] %vm360, %v437
      %471 = vst.msk [vmem:[%s448 + $0x109] sm:$0xff] %vm360, %v438
      %472 = vst.msk [vmem:[%s448 + $0x111] sm:$0xff] %vm360, %v439
      %473 = vst.msk [vmem:[%s448 + $0x121] sm:$0xff] %vm360, %v440
      %474 = vst.msk [vmem:[%s448 + $0x129] sm:$0xff] %vm360, %v441
      %475 = vst.msk [vmem:[%s448 + $0x139] sm:$0xff] %vm360, %v442
      %476 = vst.msk [vmem:[%s448 + $0x141] sm:$0xff] %vm360, %v443
      %477 = vst.msk [vmem:[%s448 + $0x151] sm:$0xff] %vm360, %v444
      %478 = vst.msk [vmem:[%s448 + $0x159] sm:$0xff] %vm360, %v445
      %479 = vst.msk [vmem:[%s448 + $0x169] sm:$0xff] %vm360, %v446
      %480 = vst.msk [vmem:[%s448 + $0x171] sm:$0xff] %vm360, %v447
      %v481 = vld [vmem:[#allocation2] sm:$0xff]
      %v482 = vld [vmem:[#allocation2 + $0x8] sm:$0xff]
      %v483 = vld [vmem:[#allocation2 + $0x18] sm:$0xff]
      %v484 = vld [vmem:[#allocation2 + $0x20] sm:$0xff]
      %v485 = vld [vmem:[#allocation2 + $0x30] sm:$0xff]
      %v486 = vld [vmem:[#allocation2 + $0x38] sm:$0xff]
      %v487 = vld [vmem:[#allocation2 + $0x48] sm:$0xff]
      %v488 = vld [vmem:[#allocation2 + $0x50] sm:$0xff]
      %v489 = vld [vmem:[#allocation2 + $0x60] sm:$0xff]
      %v490 = vld [vmem:[#allocation2 + $0x68] sm:$0xff]
      %v491 = vld [vmem:[#allocation2 + $0x78] sm:$0xff]
      %v492 = vld [vmem:[#allocation2 + $0x80] sm:$0xff]
      %v493 = vld [vmem:[#allocation2 + $0x90] sm:$0xff]
      %v494 = vld [vmem:[#allocation2 + $0x98] sm:$0xff]
      %v495 = vld [vmem:[#allocation2 + $0xa8] sm:$0xff]
      %v496 = vld [vmem:[#allocation2 + $0xb0] sm:$0xff]
      %v497 = vld [vmem:[#allocation2 + $0xc0] sm:$0xff]
      %v498 = vld [vmem:[#allocation2 + $0xc8] sm:$0xff]
      %v499 = vld [vmem:[#allocation2 + $0xd8] sm:$0xff]
      %v500 = vld [vmem:[#allocation2 + $0xe0] sm:$0xff]
      %v501 = vld [vmem:[#allocation2 + $0xf0] sm:$0xff]
      %v502 = vld [vmem:[#allocation2 + $0xf8] sm:$0xff]
      %v503 = vld [vmem:[#allocation2 + $0x108] sm:$0xff]
      %v504 = vld [vmem:[#allocation2 + $0x110] sm:$0xff]
      %v505 = vld [vmem:[#allocation2 + $0x120] sm:$0xff]
      %v506 = vld [vmem:[#allocation2 + $0x128] sm:$0xff]
      %v507 = vld [vmem:[#allocation2 + $0x138] sm:$0xff]
      %v508 = vld [vmem:[#allocation2 + $0x140] sm:$0xff]
      %v509 = vld [vmem:[#allocation2 + $0x150] sm:$0xff]
      %v510 = vld [vmem:[#allocation2 + $0x158] sm:$0xff]
      %v511 = vld [vmem:[#allocation2 + $0x168] sm:$0xff]
      %v512 = vld [vmem:[#allocation2 + $0x170] sm:$0xff]
      %513 = vst.msk [vmem:[#allocation4] sm:$0xff] %vm360, %v481
      %514 = vst.msk [vmem:[#allocation4 + $0x8] sm:$0xff] %vm360, %v482
      %515 = vst.msk [vmem:[#allocation4 + $0x10] sm:$0xff] %vm360, %v483
      %516 = vst.msk [vmem:[#allocation4 + $0x18] sm:$0xff] %vm360, %v484
      %517 = vst.msk [vmem:[#allocation4 + $0x20] sm:$0xff] %vm360, %v485
      %518 = vst.msk [vmem:[#allocation4 + $0x28] sm:$0xff] %vm360, %v486
      %519 = vst.msk [vmem:[#allocation4 + $0x30] sm:$0xff] %vm360, %v487
      %520 = vst.msk [vmem:[#allocation4 + $0x38] sm:$0xff] %vm360, %v488
      %521 = vst.msk [vmem:[#allocation4 + $0x40] sm:$0xff] %vm360, %v489
      %522 = vst.msk [vmem:[#allocation4 + $0x48] sm:$0xff] %vm360, %v490
      %523 = vst.msk [vmem:[#allocation4 + $0x50] sm:$0xff] %vm360, %v491
      %524 = vst.msk [vmem:[#allocation4 + $0x58] sm:$0xff] %vm360, %v492
      %525 = vst.msk [vmem:[#allocation4 + $0x60] sm:$0xff] %vm360, %v493
      %526 = vst.msk [vmem:[#allocation4 + $0x68] sm:$0xff] %vm360, %v494
      %527 = vst.msk [vmem:[#allocation4 + $0x70] sm:$0xff] %vm360, %v495
      %528 = vst.msk [vmem:[#allocation4 + $0x78] sm:$0xff] %vm360, %v496
      %529 = vst.msk [vmem:[#allocation4 + $0x80] sm:$0xff] %vm360, %v497
      %530 = vst.msk [vmem:[#allocation4 + $0x88] sm:$0xff] %vm360, %v498
      %531 = vst.msk [vmem:[#allocation4 + $0x90] sm:$0xff] %vm360, %v499
      %532 = vst.msk [vmem:[#allocation4 + $0x98] sm:$0xff] %vm360, %v500
      %533 = vst.msk [vmem:[#allocation4 + $0xa0] sm:$0xff] %vm360, %v501
      %534 = vst.msk [vmem:[#allocation4 + $0xa8] sm:$0xff] %vm360, %v502
      %535 = vst.msk [vmem:[#allocation4 + $0xb0] sm:$0xff] %vm360, %v503
      %536 = vst.msk [vmem:[#allocation4 + $0xb8] sm:$0xff] %vm360, %v504
      %537 = vst.msk [vmem:[#allocation4 + $0xc0] sm:$0xff] %vm360, %v505
      %538 = vst.msk [vmem:[#allocation4 + $0xc8] sm:$0xff] %vm360, %v506
      %539 = vst.msk [vmem:[#allocation4 + $0xd0] sm:$0xff] %vm360, %v507
      %540 = vst.msk [vmem:[#allocation4 + $0xd8] sm:$0xff] %vm360, %v508
      %541 = vst.msk [vmem:[#allocation4 + $0xe0] sm:$0xff] %vm360, %v509
      %542 = vst.msk [vmem:[#allocation4 + $0xe8] sm:$0xff] %vm360, %v510
      %543 = vst.msk [vmem:[#allocation4 + $0xf0] sm:$0xff] %vm360, %v511
      %544 = vst.msk [vmem:[#allocation4 + $0xf8] sm:$0xff] %vm360, %v512
      %v545 = vld [vmem:[#allocation2 + $0x1] sm:$0xff]
      %v546 = vld [vmem:[#allocation2 + $0x9] sm:$0xff]
      %v547 = vld [vmem:[#allocation2 + $0x19] sm:$0xff]
      %v548 = vld [vmem:[#allocation2 + $0x21] sm:$0xff]
      %v549 = vld [vmem:[#allocation2 + $0x31] sm:$0xff]
      %v550 = vld [vmem:[#allocation2 + $0x39] sm:$0xff]
      %v551 = vld [vmem:[#allocation2 + $0x49] sm:$0xff]
      %v552 = vld [vmem:[#allocation2 + $0x51] sm:$0xff]
      %v553 = vld [vmem:[#allocation2 + $0x61] sm:$0xff]
      %v554 = vld [vmem:[#allocation2 + $0x69] sm:$0xff]
      %v555 = vld [vmem:[#allocation2 + $0x79] sm:$0xff]
      %v556 = vld [vmem:[#allocation2 + $0x81] sm:$0xff]
      %v557 = vld [vmem:[#allocation2 + $0x91] sm:$0xff]
      %v558 = vld [vmem:[#allocation2 + $0x99] sm:$0xff]
      %v559 = vld [vmem:[#allocation2 + $0xa9] sm:$0xff]
      %v560 = vld [vmem:[#allocation2 + $0xb1] sm:$0xff]
      %v561 = vld [vmem:[#allocation2 + $0xc1] sm:$0xff]
      %v562 = vld [vmem:[#allocation2 + $0xc9] sm:$0xff]
      %v563 = vld [vmem:[#allocation2 + $0xd9] sm:$0xff]
      %v564 = vld [vmem:[#allocation2 + $0xe1] sm:$0xff]
      %v565 = vld [vmem:[#allocation2 + $0xf1] sm:$0xff]
      %v566 = vld [vmem:[#allocation2 + $0xf9] sm:$0xff]
      %v567 = vld [vmem:[#allocation2 + $0x109] sm:$0xff]
      %v568 = vld [vmem:[#allocation2 + $0x111] sm:$0xff]
      %v569 = vld [vmem:[#allocation2 + $0x121] sm:$0xff]
      %v570 = vld [vmem:[#allocation2 + $0x129] sm:$0xff]
      %v571 = vld [vmem:[#allocation2 + $0x139] sm:$0xff]
      %v572 = vld [vmem:[#allocation2 + $0x141] sm:$0xff]
      %v573 = vld [vmem:[#allocation2 + $0x151] sm:$0xff]
      %v574 = vld [vmem:[#allocation2 + $0x159] sm:$0xff]
      %v575 = vld [vmem:[#allocation2 + $0x169] sm:$0xff]
      %v576 = vld [vmem:[#allocation2 + $0x171] sm:$0xff]
      %609 = vrot.lane.b32.xlu0 %v545, 4
      %v610 = vpop.permute.xlu0 %609
      %611 = vrot.lane.b32.xlu0 %v546, 4
      %v612 = vpop.permute.xlu0 %611
      %613 = vrot.lane.b32.xlu0 %v547, 4
      %v614 = vpop.permute.xlu0 %613
      %615 = vrot.lane.b32.xlu0 %v548, 4
      %v616 = vpop.permute.xlu0 %615
      %617 = vrot.lane.b32.xlu0 %v549, 4
      %v618 = vpop.permute.xlu0 %617
      %619 = vrot.lane.b32.xlu0 %v550, 4
      %v620 = vpop.permute.xlu0 %619
      %621 = vrot.lane.b32.xlu0 %v551, 4
      %v622 = vpop.permute.xlu0 %621
      %623 = vrot.lane.b32.xlu0 %v552, 4
      %v624 = vpop.permute.xlu0 %623
      %625 = vrot.lane.b32.xlu0 %v553, 4
      %v626 = vpop.permute.xlu0 %625
      %627 = vrot.lane.b32.xlu0 %v554, 4
      %v628 = vpop.permute.xlu0 %627
      %629 = vrot.lane.b32.xlu0 %v555, 4
      %v630 = vpop.permute.xlu0 %629
      %631 = vrot.lane.b32.xlu0 %v556, 4
      %v632 = vpop.permute.xlu0 %631
      %633 = vrot.lane.b32.xlu0 %v557, 4
      %v634 = vpop.permute.xlu0 %633
      %635 = vrot.lane.b32.xlu0 %v558, 4
      %v636 = vpop.permute.xlu0 %635
      %637 = vrot.lane.b32.xlu0 %v559, 4
      %v638 = vpop.permute.xlu0 %637
      %639 = vrot.lane.b32.xlu0 %v560, 4
      %v640 = vpop.permute.xlu0 %639
      %641 = vrot.lane.b32.xlu0 %v561, 4
      %v642 = vpop.permute.xlu0 %641
      %643 = vrot.lane.b32.xlu0 %v562, 4
      %v644 = vpop.permute.xlu0 %643
      %645 = vrot.lane.b32.xlu0 %v563, 4
      %v646 = vpop.permute.xlu0 %645
      %647 = vrot.lane.b32.xlu0 %v564, 4
      %v648 = vpop.permute.xlu0 %647
      %649 = vrot.lane.b32.xlu0 %v565, 4
      %v650 = vpop.permute.xlu0 %649
      %651 = vrot.lane.b32.xlu0 %v566, 4
      %v652 = vpop.permute.xlu0 %651
      %653 = vrot.lane.b32.xlu0 %v567, 4
      %v654 = vpop.permute.xlu0 %653
      %655 = vrot.lane.b32.xlu0 %v568, 4
      %v656 = vpop.permute.xlu0 %655
      %657 = vrot.lane.b32.xlu0 %v569, 4
      %v658 = vpop.permute.xlu0 %657
      %659 = vrot.lane.b32.xlu0 %v570, 4
      %v660 = vpop.permute.xlu0 %659
      %661 = vrot.lane.b32.xlu0 %v571, 4
      %v662 = vpop.permute.xlu0 %661
      %663 = vrot.lane.b32.xlu0 %v572, 4
      %v664 = vpop.permute.xlu0 %663
      %665 = vrot.lane.b32.xlu0 %v573, 4
      %v666 = vpop.permute.xlu0 %665
      %667 = vrot.lane.b32.xlu0 %v574, 4
      %v668 = vpop.permute.xlu0 %667
      %669 = vrot.lane.b32.xlu0 %v575, 4
      %v670 = vpop.permute.xlu0 %669
      %671 = vrot.lane.b32.xlu0 %v576, 4
      %v672 = vpop.permute.xlu0 %671
      %vm705 = vcmask 64544
      %706 = vst.msk [vmem:[#allocation4] sm:$0xff] %vm705, %v610
      %707 = vst.msk [vmem:[#allocation4 + $0x8] sm:$0xff] %vm705, %v612
      %708 = vst.msk [vmem:[#allocation4 + $0x10] sm:$0xff] %vm705, %v614
      %709 = vst.msk [vmem:[#allocation4 + $0x18] sm:$0xff] %vm705, %v616
      %710 = vst.msk [vmem:[#allocation4 + $0x20] sm:$0xff] %vm705, %v618
      %711 = vst.msk [vmem:[#allocation4 + $0x28] sm:$0xff] %vm705, %v620
      %712 = vst.msk [vmem:[#allocation4 + $0x30] sm:$0xff] %vm705, %v622
      %713 = vst.msk [vmem:[#allocation4 + $0x38] sm:$0xff] %vm705, %v624
      %714 = vst.msk [vmem:[#allocation4 + $0x40] sm:$0xff] %vm705, %v626
      %715 = vst.msk [vmem:[#allocation4 + $0x48] sm:$0xff] %vm705, %v628
      %716 = vst.msk [vmem:[#allocation4 + $0x50] sm:$0xff] %vm705, %v630
      %717 = vst.msk [vmem:[#allocation4 + $0x58] sm:$0xff] %vm705, %v632
      %718 = vst.msk [vmem:[#allocation4 + $0x60] sm:$0xff] %vm705, %v634
      %719 = vst.msk [vmem:[#allocation4 + $0x68] sm:$0xff] %vm705, %v636
      %720 = vst.msk [vmem:[#allocation4 + $0x70] sm:$0xff] %vm705, %v638
      %721 = vst.msk [vmem:[#allocation4 + $0x78] sm:$0xff] %vm705, %v640
      %722 = vst.msk [vmem:[#allocation4 + $0x80] sm:$0xff] %vm705, %v642
      %723 = vst.msk [vmem:[#allocation4 + $0x88] sm:$0xff] %vm705, %v644
      %724 = vst.msk [vmem:[#allocation4 + $0x90] sm:$0xff] %vm705, %v646
      %725 = vst.msk [vmem:[#allocation4 + $0x98] sm:$0xff] %vm705, %v648
      %726 = vst.msk [vmem:[#allocation4 + $0xa0] sm:$0xff] %vm705, %v650
      %727 = vst.msk [vmem:[#allocation4 + $0xa8] sm:$0xff] %vm705, %v652
      %728 = vst.msk [vmem:[#allocation4 + $0xb0] sm:$0xff] %vm705, %v654
      %729 = vst.msk [vmem:[#allocation4 + $0xb8] sm:$0xff] %vm705, %v656
      %730 = vst.msk [vmem:[#allocation4 + $0xc0] sm:$0xff] %vm705, %v658
      %731 = vst.msk [vmem:[#allocation4 + $0xc8] sm:$0xff] %vm705, %v660
      %732 = vst.msk [vmem:[#allocation4 + $0xd0] sm:$0xff] %vm705, %v662
      %733 = vst.msk [vmem:[#allocation4 + $0xd8] sm:$0xff] %vm705, %v664
      %734 = vst.msk [vmem:[#allocation4 + $0xe0] sm:$0xff] %vm705, %v666
      %735 = vst.msk [vmem:[#allocation4 + $0xe8] sm:$0xff] %vm705, %v668
      %736 = vst.msk [vmem:[#allocation4 + $0xf0] sm:$0xff] %vm705, %v670
      %737 = vst.msk [vmem:[#allocation4 + $0xf8] sm:$0xff] %vm705, %v672
      %v738 = vld [vmem:[#allocation2 + $0x2] sm:$0xff]
      %v739 = vld [vmem:[#allocation2 + $0xa] sm:$0xff]
      %v740 = vld [vmem:[#allocation2 + $0x1a] sm:$0xff]
      %v741 = vld [vmem:[#allocation2 + $0x22] sm:$0xff]
      %v742 = vld [vmem:[#allocation2 + $0x32] sm:$0xff]
      %v743 = vld [vmem:[#allocation2 + $0x3a] sm:$0xff]
      %v744 = vld [vmem:[#allocation2 + $0x4a] sm:$0xff]
      %v745 = vld [vmem:[#allocation2 + $0x52] sm:$0xff]
      %v746 = vld [vmem:[#allocation2 + $0x62] sm:$0xff]
      %v747 = vld [vmem:[#allocation2 + $0x6a] sm:$0xff]
      %v748 = vld [vmem:[#allocation2 + $0x7a] sm:$0xff]
      %v749 = vld [vmem:[#allocation2 + $0x82] sm:$0xff]
      %v750 = vld [vmem:[#allocation2 + $0x92] sm:$0xff]
      %v751 = vld [vmem:[#allocation2 + $0x9a] sm:$0xff]
      %v752 = vld [vmem:[#allocation2 + $0xaa] sm:$0xff]
      %v753 = vld [vmem:[#allocation2 + $0xb2] sm:$0xff]
      %v754 = vld [vmem:[#allocation2 + $0xc2] sm:$0xff]
      %v755 = vld [vmem:[#allocation2 + $0xca] sm:$0xff]
      %v756 = vld [vmem:[#allocation2 + $0xda] sm:$0xff]
      %v757 = vld [vmem:[#allocation2 + $0xe2] sm:$0xff]
      %v758 = vld [vmem:[#allocation2 + $0xf2] sm:$0xff]
      %v759 = vld [vmem:[#allocation2 + $0xfa] sm:$0xff]
      %v760 = vld [vmem:[#allocation2 + $0x10a] sm:$0xff]
      %v761 = vld [vmem:[#allocation2 + $0x112] sm:$0xff]
      %v762 = vld [vmem:[#allocation2 + $0x122] sm:$0xff]
      %v763 = vld [vmem:[#allocation2 + $0x12a] sm:$0xff]
      %v764 = vld [vmem:[#allocation2 + $0x13a] sm:$0xff]
      %v765 = vld [vmem:[#allocation2 + $0x142] sm:$0xff]
      %v766 = vld [vmem:[#allocation2 + $0x152] sm:$0xff]
      %v767 = vld [vmem:[#allocation2 + $0x15a] sm:$0xff]
      %v768 = vld [vmem:[#allocation2 + $0x16a] sm:$0xff]
      %v769 = vld [vmem:[#allocation2 + $0x172] sm:$0xff]
      %802 = vrot.lane.b32.xlu0 %v738, 8
      %v803 = vpop.permute.xlu0 %802
      %804 = vrot.lane.b32.xlu0 %v739, 8
      %v805 = vpop.permute.xlu0 %804
      %806 = vrot.lane.b32.xlu0 %v740, 8
      %v807 = vpop.permute.xlu0 %806
      %808 = vrot.lane.b32.xlu0 %v741, 8
      %v809 = vpop.permute.xlu0 %808
      %810 = vrot.lane.b32.xlu0 %v742, 8
      %v811 = vpop.permute.xlu0 %810
      %812 = vrot.lane.b32.xlu0 %v743, 8
      %v813 = vpop.permute.xlu0 %812
      %814 = vrot.lane.b32.xlu0 %v744, 8
      %v815 = vpop.permute.xlu0 %814
      %816 = vrot.lane.b32.xlu0 %v745, 8
      %v817 = vpop.permute.xlu0 %816
      %818 = vrot.lane.b32.xlu0 %v746, 8
      %v819 = vpop.permute.xlu0 %818
      %820 = vrot.lane.b32.xlu0 %v747, 8
      %v821 = vpop.permute.xlu0 %820
      %822 = vrot.lane.b32.xlu0 %v748, 8
      %v823 = vpop.permute.xlu0 %822
      %824 = vrot.lane.b32.xlu0 %v749, 8
      %v825 = vpop.permute.xlu0 %824
      %826 = vrot.lane.b32.xlu0 %v750, 8
      %v827 = vpop.permute.xlu0 %826
      %828 = vrot.lane.b32.xlu0 %v751, 8
      %v829 = vpop.permute.xlu0 %828
      %830 = vrot.lane.b32.xlu0 %v752, 8
      %v831 = vpop.permute.xlu0 %830
      %832 = vrot.lane.b32.xlu0 %v753, 8
      %v833 = vpop.permute.xlu0 %832
      %834 = vrot.lane.b32.xlu0 %v754, 8
      %v835 = vpop.permute.xlu0 %834
      %836 = vrot.lane.b32.xlu0 %v755, 8
      %v837 = vpop.permute.xlu0 %836
      %838 = vrot.lane.b32.xlu0 %v756, 8
      %v839 = vpop.permute.xlu0 %838
      %840 = vrot.lane.b32.xlu0 %v757, 8
      %v841 = vpop.permute.xlu0 %840
      %842 = vrot.lane.b32.xlu0 %v758, 8
      %v843 = vpop.permute.xlu0 %842
      %844 = vrot.lane.b32.xlu0 %v759, 8
      %v845 = vpop.permute.xlu0 %844
      %846 = vrot.lane.b32.xlu0 %v760, 8
      %v847 = vpop.permute.xlu0 %846
      %848 = vrot.lane.b32.xlu0 %v761, 8
      %v849 = vpop.permute.xlu0 %848
      %850 = vrot.lane.b32.xlu0 %v762, 8
      %v851 = vpop.permute.xlu0 %850
      %852 = vrot.lane.b32.xlu0 %v763, 8
      %v853 = vpop.permute.xlu0 %852
      %854 = vrot.lane.b32.xlu0 %v764, 8
      %v855 = vpop.permute.xlu0 %854
      %856 = vrot.lane.b32.xlu0 %v765, 8
      %v857 = vpop.permute.xlu0 %856
      %858 = vrot.lane.b32.xlu0 %v766, 8
      %v859 = vpop.permute.xlu0 %858
      %860 = vrot.lane.b32.xlu0 %v767, 8
      %v861 = vpop.permute.xlu0 %860
      %862 = vrot.lane.b32.xlu0 %v768, 8
      %v863 = vpop.permute.xlu0 %862
      %864 = vrot.lane.b32.xlu0 %v769, 8
      %v865 = vpop.permute.xlu0 %864
      %vm898 = vcmask 97344
      %899 = vst.msk [vmem:[#allocation4] sm:$0xff] %vm898, %v803
      %900 = vst.msk [vmem:[#allocation4 + $0x8] sm:$0xff] %vm898, %v805
      %901 = vst.msk [vmem:[#allocation4 + $0x10] sm:$0xff] %vm898, %v807
      %902 = vst.msk [vmem:[#allocation4 + $0x18] sm:$0xff] %vm898, %v809
      %903 = vst.msk [vmem:[#allocation4 + $0x20] sm:$0xff] %vm898, %v811
      %904 = vst.msk [vmem:[#allocation4 + $0x28] sm:$0xff] %vm898, %v813
      %905 = vst.msk [vmem:[#allocation4 + $0x30] sm:$0xff] %vm898, %v815
      %906 = vst.msk [vmem:[#allocation4 + $0x38] sm:$0xff] %vm898, %v817
      %907 = vst.msk [vmem:[#allocation4 + $0x40] sm:$0xff] %vm898, %v819
      %908 = vst.msk [vmem:[#allocation4 + $0x48] sm:$0xff] %vm898, %v821
      %909 = vst.msk [vmem:[#allocation4 + $0x50] sm:$0xff] %vm898, %v823
      %910 = vst.msk [vmem:[#allocation4 + $0x58] sm:$0xff] %vm898, %v825
      %911 = vst.msk [vmem:[#allocation4 + $0x60] sm:$0xff] %vm898, %v827
      %912 = vst.msk [vmem:[#allocation4 + $0x68] sm:$0xff] %vm898, %v829
      %913 = vst.msk [vmem:[#allocation4 + $0x70] sm:$0xff] %vm898, %v831
      %914 = vst.msk [vmem:[#allocation4 + $0x78] sm:$0xff] %vm898, %v833
      %915 = vst.msk [vmem:[#allocation4 + $0x80] sm:$0xff] %vm898, %v835
      %916 = vst.msk [vmem:[#allocation4 + $0x88] sm:$0xff] %vm898, %v837
      %917 = vst.msk [vmem:[#allocation4 + $0x90] sm:$0xff] %vm898, %v839
      %918 = vst.msk [vmem:[#allocation4 + $0x98] sm:$0xff] %vm898, %v841
      %919 = vst.msk [vmem:[#allocation4 + $0xa0] sm:$0xff] %vm898, %v843
      %920 = vst.msk [vmem:[#allocation4 + $0xa8] sm:$0xff] %vm898, %v845
      %921 = vst.msk [vmem:[#allocation4 + $0xb0] sm:$0xff] %vm898, %v847
      %922 = vst.msk [vmem:[#allocation4 + $0xb8] sm:$0xff] %vm898, %v849
      %923 = vst.msk [vmem:[#allocation4 + $0xc0] sm:$0xff] %vm898, %v851
      %924 = vst.msk [vmem:[#allocation4 + $0xc8] sm:$0xff] %vm898, %v853
      %925 = vst.msk [vmem:[#allocation4 + $0xd0] sm:$0xff] %vm898, %v855
      %926 = vst.msk [vmem:[#allocation4 + $0xd8] sm:$0xff] %vm898, %v857
      %927 = vst.msk [vmem:[#allocation4 + $0xe0] sm:$0xff] %vm898, %v859
      %928 = vst.msk [vmem:[#allocation4 + $0xe8] sm:$0xff] %vm898, %v861
      %929 = vst.msk [vmem:[#allocation4 + $0xf0] sm:$0xff] %vm898, %v863
      %930 = vst.msk [vmem:[#allocation4 + $0xf8] sm:$0xff] %vm898, %v865
      %v931 = vld [vmem:[%s448] sm:$0xff]
      %v932 = vld [vmem:[%s448 + $0x8] sm:$0xff]
      %v933 = vld [vmem:[%s448 + $0x18] sm:$0xff]
      %v934 = vld [vmem:[%s448 + $0x20] sm:$0xff]
      %v935 = vld [vmem:[%s448 + $0x30] sm:$0xff]
      %v936 = vld [vmem:[%s448 + $0x38] sm:$0xff]
      %v937 = vld [vmem:[%s448 + $0x48] sm:$0xff]
      %v938 = vld [vmem:[%s448 + $0x50] sm:$0xff]
      %v939 = vld [vmem:[%s448 + $0x60] sm:$0xff]
      %v940 = vld [vmem:[%s448 + $0x68] sm:$0xff]
      %v941 = vld [vmem:[%s448 + $0x78] sm:$0xff]
      %v942 = vld [vmem:[%s448 + $0x80] sm:$0xff]
      %v943 = vld [vmem:[%s448 + $0x90] sm:$0xff]
      %v944 = vld [vmem:[%s448 + $0x98] sm:$0xff]
      %v945 = vld [vmem:[%s448 + $0xa8] sm:$0xff]
      %v946 = vld [vmem:[%s448 + $0xb0] sm:$0xff]
      %v947 = vld [vmem:[%s448 + $0xc0] sm:$0xff]
      %v948 = vld [vmem:[%s448 + $0xc8] sm:$0xff]
      %v949 = vld [vmem:[%s448 + $0xd8] sm:$0xff]
      %v950 = vld [vmem:[%s448 + $0xe0] sm:$0xff]
      %v951 = vld [vmem:[%s448 + $0xf0] sm:$0xff]
      %v952 = vld [vmem:[%s448 + $0xf8] sm:$0xff]
      %v953 = vld [vmem:[%s448 + $0x108] sm:$0xff]
      %v954 = vld [vmem:[%s448 + $0x110] sm:$0xff]
      %v955 = vld [vmem:[%s448 + $0x120] sm:$0xff]
      %v956 = vld [vmem:[%s448 + $0x128] sm:$0xff]
      %v957 = vld [vmem:[%s448 + $0x138] sm:$0xff]
      %v958 = vld [vmem:[%s448 + $0x140] sm:$0xff]
      %v959 = vld [vmem:[%s448 + $0x150] sm:$0xff]
      %v960 = vld [vmem:[%s448 + $0x158] sm:$0xff]
      %v961 = vld [vmem:[%s448 + $0x168] sm:$0xff]
      %v962 = vld [vmem:[%s448 + $0x170] sm:$0xff]
      %995 = vrot.lane.b32.xlu0 %v931, 12
      %v996 = vpop.permute.xlu0 %995
      %997 = vrot.lane.b32.xlu0 %v932, 12
      %v998 = vpop.permute.xlu0 %997
      %999 = vrot.lane.b32.xlu0 %v933, 12
      %v1000 = vpop.permute.xlu0 %999
      %1001 = vrot.lane.b32.xlu0 %v934, 12
      %v1002 = vpop.permute.xlu0 %1001
      %1003 = vrot.lane.b32.xlu0 %v935, 12
      %v1004 = vpop.permute.xlu0 %1003
      %1005 = vrot.lane.b32.xlu0 %v936, 12
      %v1006 = vpop.permute.xlu0 %1005
      %1007 = vrot.lane.b32.xlu0 %v937, 12
      %v1008 = vpop.permute.xlu0 %1007
      %1009 = vrot.lane.b32.xlu0 %v938, 12
      %v1010 = vpop.permute.xlu0 %1009
      %1011 = vrot.lane.b32.xlu0 %v939, 12
      %v1012 = vpop.permute.xlu0 %1011
      %1013 = vrot.lane.b32.xlu0 %v940, 12
      %v1014 = vpop.permute.xlu0 %1013
      %1015 = vrot.lane.b32.xlu0 %v941, 12
      %v1016 = vpop.permute.xlu0 %1015
      %1017 = vrot.lane.b32.xlu0 %v942, 12
      %v1018 = vpop.permute.xlu0 %1017
      %1019 = vrot.lane.b32.xlu0 %v943, 12
      %v1020 = vpop.permute.xlu0 %1019
      %1021 = vrot.lane.b32.xlu0 %v944, 12
      %v1022 = vpop.permute.xlu0 %1021
      %1023 = vrot.lane.b32.xlu0 %v945, 12
      %v1024 = vpop.permute.xlu0 %1023
      %1025 = vrot.lane.b32.xlu0 %v946, 12
      %v1026 = vpop.permute.xlu0 %1025
      %1027 = vrot.lane.b32.xlu0 %v947, 12
      %v1028 = vpop.permute.xlu0 %1027
      %1029 = vrot.lane.b32.xlu0 %v948, 12
      %v1030 = vpop.permute.xlu0 %1029
      %1031 = vrot.lane.b32.xlu0 %v949, 12
      %v1032 = vpop.permute.xlu0 %1031
      %1033 = vrot.lane.b32.xlu0 %v950, 12
      %v1034 = vpop.permute.xlu0 %1033
      %1035 = vrot.lane.b32.xlu0 %v951, 12
      %v1036 = vpop.permute.xlu0 %1035
      %1037 = vrot.lane.b32.xlu0 %v952, 12
      %v1038 = vpop.permute.xlu0 %1037
      %1039 = vrot.lane.b32.xlu0 %v953, 12
      %v1040 = vpop.permute.xlu0 %1039
      %1041 = vrot.lane.b32.xlu0 %v954, 12
      %v1042 = vpop.permute.xlu0 %1041
      %1043 = vrot.lane.b32.xlu0 %v955, 12
      %v1044 = vpop.permute.xlu0 %1043
      %1045 = vrot.lane.b32.xlu0 %v956, 12
      %v1046 = vpop.permute.xlu0 %1045
      %1047 = vrot.lane.b32.xlu0 %v957, 12
      %v1048 = vpop.permute.xlu0 %1047
      %1049 = vrot.lane.b32.xlu0 %v958, 12
      %v1050 = vpop.permute.xlu0 %1049
      %1051 = vrot.lane.b32.xlu0 %v959, 12
      %v1052 = vpop.permute.xlu0 %1051
      %1053 = vrot.lane.b32.xlu0 %v960, 12
      %v1054 = vpop.permute.xlu0 %1053
      %1055 = vrot.lane.b32.xlu0 %v961, 12
      %v1056 = vpop.permute.xlu0 %1055
      %1057 = vrot.lane.b32.xlu0 %v962, 12
      %v1058 = vpop.permute.xlu0 %1057
      %vm1091 = vcmask 130144
      %1092 = vst.msk [vmem:[#allocation4] sm:$0xff] %vm1091, %v996
      %1093 = vst.msk [vmem:[#allocation4 + $0x8] sm:$0xff] %vm1091, %v998
      %1094 = vst.msk [vmem:[#allocation4 + $0x10] sm:$0xff] %vm1091, %v1000
      %1095 = vst.msk [vmem:[#allocation4 + $0x18] sm:$0xff] %vm1091, %v1002
      %1096 = vst.msk [vmem:[#allocation4 + $0x20] sm:$0xff] %vm1091, %v1004
      %1097 = vst.msk [vmem:[#allocation4 + $0x28] sm:$0xff] %vm1091, %v1006
      %1098 = vst.msk [vmem:[#allocation4 + $0x30] sm:$0xff] %vm1091, %v1008
      %1099 = vst.msk [vmem:[#allocation4 + $0x38] sm:$0xff] %vm1091, %v1010
      %1100 = vst.msk [vmem:[#allocation4 + $0x40] sm:$0xff] %vm1091, %v1012
      %1101 = vst.msk [vmem:[#allocation4 + $0x48] sm:$0xff] %vm1091, %v1014
      %1102 = vst.msk [vmem:[#allocation4 + $0x50] sm:$0xff] %vm1091, %v1016
      %1103 = vst.msk [vmem:[#allocation4 + $0x58] sm:$0xff] %vm1091, %v1018
      %1104 = vst.msk [vmem:[#allocation4 + $0x60] sm:$0xff] %vm1091, %v1020
      %1105 = vst.msk [vmem:[#allocation4 + $0x68] sm:$0xff] %vm1091, %v1022
      %1106 = vst.msk [vmem:[#allocation4 + $0x70] sm:$0xff] %vm1091, %v1024
      %1107 = vst.msk [vmem:[#allocation4 + $0x78] sm:$0xff] %vm1091, %v1026
      %1108 = vst.msk [vmem:[#allocation4 + $0x80] sm:$0xff] %vm1091, %v1028
      %1109 = vst.msk [vmem:[#allocation4 + $0x88] sm:$0xff] %vm1091, %v1030
      %1110 = vst.msk [vmem:[#allocation4 + $0x90] sm:$0xff] %vm1091, %v1032
      %1111 = vst.msk [vmem:[#allocation4 + $0x98] sm:$0xff] %vm1091, %v1034
      %1112 = vst.msk [vmem:[#allocation4 + $0xa0] sm:$0xff] %vm1091, %v1036
      %1113 = vst.msk [vmem:[#allocation4 + $0xa8] sm:$0xff] %vm1091, %v1038
      %1114 = vst.msk [vmem:[#allocation4 + $0xb0] sm:$0xff] %vm1091, %v1040
      %1115 = vst.msk [vmem:[#allocation4 + $0xb8] sm:$0xff] %vm1091, %v1042
      %1116 = vst.msk [vmem:[#allocation4 + $0xc0] sm:$0xff] %vm1091, %v1044
      %1117 = vst.msk [vmem:[#allocation4 + $0xc8] sm:$0xff] %vm1091, %v1046
      %1118 = vst.msk [vmem:[#allocation4 + $0xd0] sm:$0xff] %vm1091, %v1048
      %1119 = vst.msk [vmem:[#allocation4 + $0xd8] sm:$0xff] %vm1091, %v1050
      %1120 = vst.msk [vmem:[#allocation4 + $0xe0] sm:$0xff] %vm1091, %v1052
      %1121 = vst.msk [vmem:[#allocation4 + $0xe8] sm:$0xff] %vm1091, %v1054
      %1122 = vst.msk [vmem:[#allocation4 + $0xf0] sm:$0xff] %vm1091, %v1056
      %1123 = vst.msk [vmem:[#allocation4 + $0xf8] sm:$0xff] %vm1091, %v1058
      %v1124 = vld [vmem:[%s448 + $0x1] sm:$0xff]
      %v1125 = vld [vmem:[%s448 + $0x9] sm:$0xff]
      %v1126 = vld [vmem:[%s448 + $0x19] sm:$0xff]
      %v1127 = vld [vmem:[%s448 + $0x21] sm:$0xff]
      %v1128 = vld [vmem:[%s448 + $0x31] sm:$0xff]
      %v1129 = vld [vmem:[%s448 + $0x39] sm:$0xff]
      %v1130 = vld [vmem:[%s448 + $0x49] sm:$0xff]
      %v1131 = vld [vmem:[%s448 + $0x51] sm:$0xff]
      %v1132 = vld [vmem:[%s448 + $0x61] sm:$0xff]
      %v1133 = vld [vmem:[%s448 + $0x69] sm:$0xff]
      %v1134 = vld [vmem:[%s448 + $0x79] sm:$0xff]
      %v1135 = vld [vmem:[%s448 + $0x81] sm:$0xff]
      %v1136 = vld [vmem:[%s448 + $0x91] sm:$0xff]
      %v1137 = vld [vmem:[%s448 + $0x99] sm:$0xff]
      %v1138 = vld [vmem:[%s448 + $0xa9] sm:$0xff]
      %v1139 = vld [vmem:[%s448 + $0xb1] sm:$0xff]
      %v1140 = vld [vmem:[%s448 + $0xc1] sm:$0xff]
      %v1141 = vld [vmem:[%s448 + $0xc9] sm:$0xff]
      %v1142 = vld [vmem:[%s448 + $0xd9] sm:$0xff]
      %v1143 = vld [vmem:[%s448 + $0xe1] sm:$0xff]
      %v1144 = vld [vmem:[%s448 + $0xf1] sm:$0xff]
      %v1145 = vld [vmem:[%s448 + $0xf9] sm:$0xff]
      %v1146 = vld [vmem:[%s448 + $0x109] sm:$0xff]
      %v1147 = vld [vmem:[%s448 + $0x111] sm:$0xff]
      %v1148 = vld [vmem:[%s448 + $0x121] sm:$0xff]
      %v1149 = vld [vmem:[%s448 + $0x129] sm:$0xff]
      %v1150 = vld [vmem:[%s448 + $0x139] sm:$0xff]
      %v1151 = vld [vmem:[%s448 + $0x141] sm:$0xff]
      %v1152 = vld [vmem:[%s448 + $0x151] sm:$0xff]
      %v1153 = vld [vmem:[%s448 + $0x159] sm:$0xff]
      %v1154 = vld [vmem:[%s448 + $0x169] sm:$0xff]
      %v1155 = vld [vmem:[%s448 + $0x171] sm:$0xff]
      %1188 = vrot.lane.b32.xlu0 %v1124, 16
      %v1189 = vpop.permute.xlu0 %1188
      %1190 = vrot.lane.b32.xlu0 %v1125, 16
      %v1191 = vpop.permute.xlu0 %1190
      %1192 = vrot.lane.b32.xlu0 %v1126, 16
      %v1193 = vpop.permute.xlu0 %1192
      %1194 = vrot.lane.b32.xlu0 %v1127, 16
      %v1195 = vpop.permute.xlu0 %1194
      %1196 = vrot.lane.b32.xlu0 %v1128, 16
      %v1197 = vpop.permute.xlu0 %1196
      %1198 = vrot.lane.b32.xlu0 %v1129, 16
      %v1199 = vpop.permute.xlu0 %1198
      %1200 = vrot.lane.b32.xlu0 %v1130, 16
      %v1201 = vpop.permute.xlu0 %1200
      %1202 = vrot.lane.b32.xlu0 %v1131, 16
      %v1203 = vpop.permute.xlu0 %1202
      %1204 = vrot.lane.b32.xlu0 %v1132, 16
      %v1205 = vpop.permute.xlu0 %1204
      %1206 = vrot.lane.b32.xlu0 %v1133, 16
      %v1207 = vpop.permute.xlu0 %1206
      %1208 = vrot.lane.b32.xlu0 %v1134, 16
      %v1209 = vpop.permute.xlu0 %1208
      %1210 = vrot.lane.b32.xlu0 %v1135, 16
      %v1211 = vpop.permute.xlu0 %1210
      %1212 = vrot.lane.b32.xlu0 %v1136, 16
      %v1213 = vpop.permute.xlu0 %1212
      %1214 = vrot.lane.b32.xlu0 %v1137, 16
      %v1215 = vpop.permute.xlu0 %1214
      %1216 = vrot.lane.b32.xlu0 %v1138, 16
      %v1217 = vpop.permute.xlu0 %1216
      %1218 = vrot.lane.b32.xlu0 %v1139, 16
      %v1219 = vpop.permute.xlu0 %1218
      %1220 = vrot.lane.b32.xlu0 %v1140, 16
      %v1221 = vpop.permute.xlu0 %1220
      %1222 = vrot.lane.b32.xlu0 %v1141, 16
      %v1223 = vpop.permute.xlu0 %1222
      %1224 = vrot.lane.b32.xlu0 %v1142, 16
      %v1225 = vpop.permute.xlu0 %1224
      %1226 = vrot.lane.b32.xlu0 %v1143, 16
      %v1227 = vpop.permute.xlu0 %1226
      %1228 = vrot.lane.b32.xlu0 %v1144, 16
      %v1229 = vpop.permute.xlu0 %1228
      %1230 = vrot.lane.b32.xlu0 %v1145, 16
      %v1231 = vpop.permute.xlu0 %1230
      %1232 = vrot.lane.b32.xlu0 %v1146, 16
      %v1233 = vpop.permute.xlu0 %1232
      %1234 = vrot.lane.b32.xlu0 %v1147, 16
      %v1235 = vpop.permute.xlu0 %1234
      %1236 = vrot.lane.b32.xlu0 %v1148, 16
      %v1237 = vpop.permute.xlu0 %1236
      %1238 = vrot.lane.b32.xlu0 %v1149, 16
      %v1239 = vpop.permute.xlu0 %1238
      %1240 = vrot.lane.b32.xlu0 %v1150, 16
      %v1241 = vpop.permute.xlu0 %1240
      %1242 = vrot.lane.b32.xlu0 %v1151, 16
      %v1243 = vpop.permute.xlu0 %1242
      %1244 = vrot.lane.b32.xlu0 %v1152, 16
      %v1245 = vpop.permute.xlu0 %1244
      %1246 = vrot.lane.b32.xlu0 %v1153, 16
      %v1247 = vpop.permute.xlu0 %1246
      %1248 = vrot.lane.b32.xlu0 %v1154, 16
      %v1249 = vpop.permute.xlu0 %1248
      %1250 = vrot.lane.b32.xlu0 %v1155, 16
      %v1251 = vpop.permute.xlu0 %1250
      %vm1284 = vcmask 162944
      %1285 = vst.msk [vmem:[#allocation4] sm:$0xff] %vm1284, %v1189
      %1286 = vst.msk [vmem:[#allocation4 + $0x8] sm:$0xff] %vm1284, %v1191
      %1287 = vst.msk [vmem:[#allocation4 + $0x10] sm:$0xff] %vm1284, %v1193
      %1288 = vst.msk [vmem:[#allocation4 + $0x18] sm:$0xff] %vm1284, %v1195
      %1289 = vst.msk [vmem:[#allocation4 + $0x20] sm:$0xff] %vm1284, %v1197
      %1290 = vst.msk [vmem:[#allocation4 + $0x28] sm:$0xff] %vm1284, %v1199
      %1291 = vst.msk [vmem:[#allocation4 + $0x30] sm:$0xff] %vm1284, %v1201
      %1292 = vst.msk [vmem:[#allocation4 + $0x38] sm:$0xff] %vm1284, %v1203
      %1293 = vst.msk [vmem:[#allocation4 + $0x40] sm:$0xff] %vm1284, %v1205
      %1294 = vst.msk [vmem:[#allocation4 + $0x48] sm:$0xff] %vm1284, %v1207
      %1295 = vst.msk [vmem:[#allocation4 + $0x50] sm:$0xff] %vm1284, %v1209
      %1296 = vst.msk [vmem:[#allocation4 + $0x58] sm:$0xff] %vm1284, %v1211
      %1297 = vst.msk [vmem:[#allocation4 + $0x60] sm:$0xff] %vm1284, %v1213
      %1298 = vst.msk [vmem:[#allocation4 + $0x68] sm:$0xff] %vm1284, %v1215
      %1299 = vst.msk [vmem:[#allocation4 + $0x70] sm:$0xff] %vm1284, %v1217
      %1300 = vst.msk [vmem:[#allocation4 + $0x78] sm:$0xff] %vm1284, %v1219
      %1301 = vst.msk [vmem:[#allocation4 + $0x80] sm:$0xff] %vm1284, %v1221
      %1302 = vst.msk [vmem:[#allocation4 + $0x88] sm:$0xff] %vm1284, %v1223
      %1303 = vst.msk [vmem:[#allocation4 + $0x90] sm:$0xff] %vm1284, %v1225
      %1304 = vst.msk [vmem:[#allocation4 + $0x98] sm:$0xff] %vm1284, %v1227
      %1305 = vst.msk [vmem:[#allocation4 + $0xa0] sm:$0xff] %vm1284, %v1229
      %1306 = vst.msk [vmem:[#allocation4 + $0xa8] sm:$0xff] %vm1284, %v1231
      %1307 = vst.msk [vmem:[#allocation4 + $0xb0] sm:$0xff] %vm1284, %v1233
      %1308 = vst.msk [vmem:[#allocation4 + $0xb8] sm:$0xff] %vm1284, %v1235
      %1309 = vst.msk [vmem:[#allocation4 + $0xc0] sm:$0xff] %vm1284, %v1237
      %1310 = vst.msk [vmem:[#allocation4 + $0xc8] sm:$0xff] %vm1284, %v1239
      %1311 = vst.msk [vmem:[#allocation4 + $0xd0] sm:$0xff] %vm1284, %v1241
      %1312 = vst.msk [vmem:[#allocation4 + $0xd8] sm:$0xff] %vm1284, %v1243
      %1313 = vst.msk [vmem:[#allocation4 + $0xe0] sm:$0xff] %vm1284, %v1245
      %1314 = vst.msk [vmem:[#allocation4 + $0xe8] sm:$0xff] %vm1284, %v1247
      %1315 = vst.msk [vmem:[#allocation4 + $0xf0] sm:$0xff] %vm1284, %v1249
      %1316 = vst.msk [vmem:[#allocation4 + $0xf8] sm:$0xff] %vm1284, %v1251
      %v1317 = vld [vmem:[%s448 + $0x2] sm:$0xff]
      %v1318 = vld [vmem:[%s448 + $0xa] sm:$0xff]
      %v1319 = vld [vmem:[%s448 + $0x1a] sm:$0xff]
      %v1320 = vld [vmem:[%s448 + $0x22] sm:$0xff]
      %v1321 = vld [vmem:[%s448 + $0x32] sm:$0xff]
      %v1322 = vld [vmem:[%s448 + $0x3a] sm:$0xff]
      %v1323 = vld [vmem:[%s448 + $0x4a] sm:$0xff]
      %v1324 = vld [vmem:[%s448 + $0x52] sm:$0xff]
      %v1325 = vld [vmem:[%s448 + $0x62] sm:$0xff]
      %v1326 = vld [vmem:[%s448 + $0x6a] sm:$0xff]
      %v1327 = vld [vmem:[%s448 + $0x7a] sm:$0xff]
      %v1328 = vld [vmem:[%s448 + $0x82] sm:$0xff]
      %v1329 = vld [vmem:[%s448 + $0x92] sm:$0xff]
      %v1330 = vld [vmem:[%s448 + $0x9a] sm:$0xff]
      %v1331 = vld [vmem:[%s448 + $0xaa] sm:$0xff]
      %v1332 = vld [vmem:[%s448 + $0xb2] sm:$0xff]
      %v1333 = vld [vmem:[%s448 + $0xc2] sm:$0xff]
      %v1334 = vld [vmem:[%s448 + $0xca] sm:$0xff]
      %v1335 = vld [vmem:[%s448 + $0xda] sm:$0xff]
      %v1336 = vld [vmem:[%s448 + $0xe2] sm:$0xff]
      %v1337 = vld [vmem:[%s448 + $0xf2] sm:$0xff]
      %v1338 = vld [vmem:[%s448 + $0xfa] sm:$0xff]
      %v1339 = vld [vmem:[%s448 + $0x10a] sm:$0xff]
      %v1340 = vld [vmem:[%s448 + $0x112] sm:$0xff]
      %v1341 = vld [vmem:[%s448 + $0x122] sm:$0xff]
      %v1342 = vld [vmem:[%s448 + $0x12a] sm:$0xff]
      %v1343 = vld [vmem:[%s448 + $0x13a] sm:$0xff]
      %v1344 = vld [vmem:[%s448 + $0x142] sm:$0xff]
      %v1345 = vld [vmem:[%s448 + $0x152] sm:$0xff]
      %v1346 = vld [vmem:[%s448 + $0x15a] sm:$0xff]
      %v1347 = vld [vmem:[%s448 + $0x16a] sm:$0xff]
      %v1348 = vld [vmem:[%s448 + $0x172] sm:$0xff]
      %1381 = vrot.lane.b32.xlu0 %v1317, 20
      %v1382 = vpop.permute.xlu0 %1381
      %1383 = vrot.lane.b32.xlu0 %v1318, 20
      %v1384 = vpop.permute.xlu0 %1383
      %1385 = vrot.lane.b32.xlu0 %v1319, 20
      %v1386 = vpop.permute.xlu0 %1385
      %1387 = vrot.lane.b32.xlu0 %v1320, 20
      %v1388 = vpop.permute.xlu0 %1387
      %1389 = vrot.lane.b32.xlu0 %v1321, 20
      %v1390 = vpop.permute.xlu0 %1389
      %1391 = vrot.lane.b32.xlu0 %v1322, 20
      %v1392 = vpop.permute.xlu0 %1391
      %1393 = vrot.lane.b32.xlu0 %v1323, 20
      %v1394 = vpop.permute.xlu0 %1393
      %1395 = vrot.lane.b32.xlu0 %v1324, 20
      %v1396 = vpop.permute.xlu0 %1395
      %1397 = vrot.lane.b32.xlu0 %v1325, 20
      %v1398 = vpop.permute.xlu0 %1397
      %1399 = vrot.lane.b32.xlu0 %v1326, 20
      %v1400 = vpop.permute.xlu0 %1399
      %1401 = vrot.lane.b32.xlu0 %v1327, 20
      %v1402 = vpop.permute.xlu0 %1401
      %1403 = vrot.lane.b32.xlu0 %v1328, 20
      %v1404 = vpop.permute.xlu0 %1403
      %1405 = vrot.lane.b32.xlu0 %v1329, 20
      %v1406 = vpop.permute.xlu0 %1405
      %1407 = vrot.lane.b32.xlu0 %v1330, 20
      %v1408 = vpop.permute.xlu0 %1407
      %1409 = vrot.lane.b32.xlu0 %v1331, 20
      %v1410 = vpop.permute.xlu0 %1409
      %1411 = vrot.lane.b32.xlu0 %v1332, 20
      %v1412 = vpop.permute.xlu0 %1411
      %1413 = vrot.lane.b32.xlu0 %v1333, 20
      %v1414 = vpop.permute.xlu0 %1413
      %1415 = vrot.lane.b32.xlu0 %v1334, 20
      %v1416 = vpop.permute.xlu0 %1415
      %1417 = vrot.lane.b32.xlu0 %v1335, 20
      %v1418 = vpop.permute.xlu0 %1417
      %1419 = vrot.lane.b32.xlu0 %v1336, 20
      %v1420 = vpop.permute.xlu0 %1419
      %1421 = vrot.lane.b32.xlu0 %v1337, 20
      %v1422 = vpop.permute.xlu0 %1421
      %1423 = vrot.lane.b32.xlu0 %v1338, 20
      %v1424 = vpop.permute.xlu0 %1423
      %1425 = vrot.lane.b32.xlu0 %v1339, 20
      %v1426 = vpop.permute.xlu0 %1425
      %1427 = vrot.lane.b32.xlu0 %v1340, 20
      %v1428 = vpop.permute.xlu0 %1427
      %1429 = vrot.lane.b32.xlu0 %v1341, 20
      %v1430 = vpop.permute.xlu0 %1429
      %1431 = vrot.lane.b32.xlu0 %v1342, 20
      %v1432 = vpop.permute.xlu0 %1431
      %1433 = vrot.lane.b32.xlu0 %v1343, 20
      %v1434 = vpop.permute.xlu0 %1433
      %1435 = vrot.lane.b32.xlu0 %v1344, 20
      %v1436 = vpop.permute.xlu0 %1435
      %1437 = vrot.lane.b32.xlu0 %v1345, 20
      %v1438 = vpop.permute.xlu0 %1437
      %1439 = vrot.lane.b32.xlu0 %v1346, 20
      %v1440 = vpop.permute.xlu0 %1439
      %1441 = vrot.lane.b32.xlu0 %v1347, 20
      %v1442 = vpop.permute.xlu0 %1441
      %1443 = vrot.lane.b32.xlu0 %v1348, 20
      %v1444 = vpop.permute.xlu0 %1443
      %vm1477 = vcmask 195744
      %1478 = vst.msk [vmem:[#allocation4] sm:$0xff] %vm1477, %v1382
      %1479 = vst.msk [vmem:[#allocation4 + $0x8] sm:$0xff] %vm1477, %v1384
      %1480 = vst.msk [vmem:[#allocation4 + $0x10] sm:$0xff] %vm1477, %v1386
      %1481 = vst.msk [vmem:[#allocation4 + $0x18] sm:$0xff] %vm1477, %v1388
      %1482 = vst.msk [vmem:[#allocation4 + $0x20] sm:$0xff] %vm1477, %v1390
      %1483 = vst.msk [vmem:[#allocation4 + $0x28] sm:$0xff] %vm1477, %v1392
      %1484 = vst.msk [vmem:[#allocation4 + $0x30] sm:$0xff] %vm1477, %v1394
      %1485 = vst.msk [vmem:[#allocation4 + $0x38] sm:$0xff] %vm1477, %v1396
      %1486 = vst.msk [vmem:[#allocation4 + $0x40] sm:$0xff] %vm1477, %v1398
      %1487 = vst.msk [vmem:[#allocation4 + $0x48] sm:$0xff] %vm1477, %v1400
      %1488 = vst.msk [vmem:[#allocation4 + $0x50] sm:$0xff] %vm1477, %v1402
      %1489 = vst.msk [vmem:[#allocation4 + $0x58] sm:$0xff] %vm1477, %v1404
      %1490 = vst.msk [vmem:[#allocation4 + $0x60] sm:$0xff] %vm1477, %v1406
      %1491 = vst.msk [vmem:[#allocation4 + $0x68] sm:$0xff] %vm1477, %v1408
      %1492 = vst.msk [vmem:[#allocation4 + $0x70] sm:$0xff] %vm1477, %v1410
      %1493 = vst.msk [vmem:[#allocation4 + $0x78] sm:$0xff] %vm1477, %v1412
      %1494 = vst.msk [vmem:[#allocation4 + $0x80] sm:$0xff] %vm1477, %v1414
      %1495 = vst.msk [vmem:[#allocation4 + $0x88] sm:$0xff] %vm1477, %v1416
      %1496 = vst.msk [vmem:[#allocation4 + $0x90] sm:$0xff] %vm1477, %v1418
      %1497 = vst.msk [vmem:[#allocation4 + $0x98] sm:$0xff] %vm1477, %v1420
      %1498 = vst.msk [vmem:[#allocation4 + $0xa0] sm:$0xff] %vm1477, %v1422
      %1499 = vst.msk [vmem:[#allocation4 + $0xa8] sm:$0xff] %vm1477, %v1424
      %1500 = vst.msk [vmem:[#allocation4 + $0xb0] sm:$0xff] %vm1477, %v1426
      %1501 = vst.msk [vmem:[#allocation4 + $0xb8] sm:$0xff] %vm1477, %v1428
      %1502 = vst.msk [vmem:[#allocation4 + $0xc0] sm:$0xff] %vm1477, %v1430
      %1503 = vst.msk [vmem:[#allocation4 + $0xc8] sm:$0xff] %vm1477, %v1432
      %1504 = vst.msk [vmem:[#allocation4 + $0xd0] sm:$0xff] %vm1477, %v1434
      %1505 = vst.msk [vmem:[#allocation4 + $0xd8] sm:$0xff] %vm1477, %v1436
      %1506 = vst.msk [vmem:[#allocation4 + $0xe0] sm:$0xff] %vm1477, %v1438
      %1507 = vst.msk [vmem:[#allocation4 + $0xe8] sm:$0xff] %vm1477, %v1440
      %1508 = vst.msk [vmem:[#allocation4 + $0xf0] sm:$0xff] %vm1477, %v1442
      %1509 = vst.msk [vmem:[#allocation4 + $0xf8] sm:$0xff] %vm1477, %v1444
      %s1510 = scalar_lea.vmem [#allocation2], 48
      %v1511 = vld [vmem:[%s1510] sm:$0xff]
      %v1512 = vld [vmem:[%s1510 + $0x8] sm:$0xff]
      %v1513 = vld [vmem:[%s1510 + $0x18] sm:$0xff]
      %v1514 = vld [vmem:[%s1510 + $0x20] sm:$0xff]
      %v1515 = vld [vmem:[%s1510 + $0x30] sm:$0xff]
      %v1516 = vld [vmem:[%s1510 + $0x38] sm:$0xff]
      %v1517 = vld [vmem:[%s1510 + $0x48] sm:$0xff]
      %v1518 = vld [vmem:[%s1510 + $0x50] sm:$0xff]
      %v1519 = vld [vmem:[%s1510 + $0x60] sm:$0xff]
      %v1520 = vld [vmem:[%s1510 + $0x68] sm:$0xff]
      %v1521 = vld [vmem:[%s1510 + $0x78] sm:$0xff]
      %v1522 = vld [vmem:[%s1510 + $0x80] sm:$0xff]
      %v1523 = vld [vmem:[%s1510 + $0x90] sm:$0xff]
      %v1524 = vld [vmem:[%s1510 + $0x98] sm:$0xff]
      %v1525 = vld [vmem:[%s1510 + $0xa8] sm:$0xff]
      %v1526 = vld [vmem:[%s1510 + $0xb0] sm:$0xff]
      %v1527 = vld [vmem:[%s1510 + $0xc0] sm:$0xff]
      %v1528 = vld [vmem:[%s1510 + $0xc8] sm:$0xff]
      %v1529 = vld [vmem:[%s1510 + $0xd8] sm:$0xff]
      %v1530 = vld [vmem:[%s1510 + $0xe0] sm:$0xff]
      %v1531 = vld [vmem:[%s1510 + $0xf0] sm:$0xff]
      %v1532 = vld [vmem:[%s1510 + $0xf8] sm:$0xff]
      %v1533 = vld [vmem:[%s1510 + $0x108] sm:$0xff]
      %v1534 = vld [vmem:[%s1510 + $0x110] sm:$0xff]
      %v1535 = vld [vmem:[%s1510 + $0x120] sm:$0xff]
      %v1536 = vld [vmem:[%s1510 + $0x128] sm:$0xff]
      %v1537 = vld [vmem:[%s1510 + $0x138] sm:$0xff]
      %v1538 = vld [vmem:[%s1510 + $0x140] sm:$0xff]
      %v1539 = vld [vmem:[%s1510 + $0x150] sm:$0xff]
      %v1540 = vld [vmem:[%s1510 + $0x158] sm:$0xff]
      %v1541 = vld [vmem:[%s1510 + $0x168] sm:$0xff]
      %v1542 = vld [vmem:[%s1510 + $0x170] sm:$0xff]
      %1575 = vrot.lane.b32.xlu0 %v1511, 24
      %v1576 = vpop.permute.xlu0 %1575
      %1577 = vrot.lane.b32.xlu0 %v1512, 24
      %v1578 = vpop.permute.xlu0 %1577
      %1579 = vrot.lane.b32.xlu0 %v1513, 24
      %v1580 = vpop.permute.xlu0 %1579
      %1581 = vrot.lane.b32.xlu0 %v1514, 24
      %v1582 = vpop.permute.xlu0 %1581
      %1583 = vrot.lane.b32.xlu0 %v1515, 24
      %v1584 = vpop.permute.xlu0 %1583
      %1585 = vrot.lane.b32.xlu0 %v1516, 24
      %v1586 = vpop.permute.xlu0 %1585
      %1587 = vrot.lane.b32.xlu0 %v1517, 24
      %v1588 = vpop.permute.xlu0 %1587
      %1589 = vrot.lane.b32.xlu0 %v1518, 24
      %v1590 = vpop.permute.xlu0 %1589
      %1591 = vrot.lane.b32.xlu0 %v1519, 24
      %v1592 = vpop.permute.xlu0 %1591
      %1593 = vrot.lane.b32.xlu0 %v1520, 24
      %v1594 = vpop.permute.xlu0 %1593
      %1595 = vrot.lane.b32.xlu0 %v1521, 24
      %v1596 = vpop.permute.xlu0 %1595
      %1597 = vrot.lane.b32.xlu0 %v1522, 24
      %v1598 = vpop.permute.xlu0 %1597
      %1599 = vrot.lane.b32.xlu0 %v1523, 24
      %v1600 = vpop.permute.xlu0 %1599
      %1601 = vrot.lane.b32.xlu0 %v1524, 24
      %v1602 = vpop.permute.xlu0 %1601
      %1603 = vrot.lane.b32.xlu0 %v1525, 24
      %v1604 = vpop.permute.xlu0 %1603
      %1605 = vrot.lane.b32.xlu0 %v1526, 24
      %v1606 = vpop.permute.xlu0 %1605
      %1607 = vrot.lane.b32.xlu0 %v1527, 24
      %v1608 = vpop.permute.xlu0 %1607
      %1609 = vrot.lane.b32.xlu0 %v1528, 24
      %v1610 = vpop.permute.xlu0 %1609
      %1611 = vrot.lane.b32.xlu0 %v1529, 24
      %v1612 = vpop.permute.xlu0 %1611
      %1613 = vrot.lane.b32.xlu0 %v1530, 24
      %v1614 = vpop.permute.xlu0 %1613
      %1615 = vrot.lane.b32.xlu0 %v1531, 24
      %v1616 = vpop.permute.xlu0 %1615
      %1617 = vrot.lane.b32.xlu0 %v1532, 24
      %v1618 = vpop.permute.xlu0 %1617
      %1619 = vrot.lane.b32.xlu0 %v1533, 24
      %v1620 = vpop.permute.xlu0 %1619
      %1621 = vrot.lane.b32.xlu0 %v1534, 24
      %v1622 = vpop.permute.xlu0 %1621
      %1623 = vrot.lane.b32.xlu0 %v1535, 24
      %v1624 = vpop.permute.xlu0 %1623
      %1625 = vrot.lane.b32.xlu0 %v1536, 24
      %v1626 = vpop.permute.xlu0 %1625
      %1627 = vrot.lane.b32.xlu0 %v1537, 24
      %v1628 = vpop.permute.xlu0 %1627
      %1629 = vrot.lane.b32.xlu0 %v1538, 24
      %v1630 = vpop.permute.xlu0 %1629
      %1631 = vrot.lane.b32.xlu0 %v1539, 24
      %v1632 = vpop.permute.xlu0 %1631
      %1633 = vrot.lane.b32.xlu0 %v1540, 24
      %v1634 = vpop.permute.xlu0 %1633
      %1635 = vrot.lane.b32.xlu0 %v1541, 24
      %v1636 = vpop.permute.xlu0 %1635
      %1637 = vrot.lane.b32.xlu0 %v1542, 24
      %v1638 = vpop.permute.xlu0 %1637
      %vm1671 = vcmask 228544
      %1672 = vst.msk [vmem:[#allocation4] sm:$0xff] %vm1671, %v1576
      %1673 = vst.msk [vmem:[#allocation4 + $0x8] sm:$0xff] %vm1671, %v1578
      %1674 = vst.msk [vmem:[#allocation4 + $0x10] sm:$0xff] %vm1671, %v1580
      %1675 = vst.msk [vmem:[#allocation4 + $0x18] sm:$0xff] %vm1671, %v1582
      %1676 = vst.msk [vmem:[#allocation4 + $0x20] sm:$0xff] %vm1671, %v1584
      %1677 = vst.msk [vmem:[#allocation4 + $0x28] sm:$0xff] %vm1671, %v1586
      %1678 = vst.msk [vmem:[#allocation4 + $0x30] sm:$0xff] %vm1671, %v1588
      %1679 = vst.msk [vmem:[#allocation4 + $0x38] sm:$0xff] %vm1671, %v1590
      %1680 = vst.msk [vmem:[#allocation4 + $0x40] sm:$0xff] %vm1671, %v1592
      %1681 = vst.msk [vmem:[#allocation4 + $0x48] sm:$0xff] %vm1671, %v1594
      %1682 = vst.msk [vmem:[#allocation4 + $0x50] sm:$0xff] %vm1671, %v1596
      %1683 = vst.msk [vmem:[#allocation4 + $0x58] sm:$0xff] %vm1671, %v1598
      %1684 = vst.msk [vmem:[#allocation4 + $0x60] sm:$0xff] %vm1671, %v1600
      %1685 = vst.msk [vmem:[#allocation4 + $0x68] sm:$0xff] %vm1671, %v1602
      %1686 = vst.msk [vmem:[#allocation4 + $0x70] sm:$0xff] %vm1671, %v1604
      %1687 = vst.msk [vmem:[#allocation4 + $0x78] sm:$0xff] %vm1671, %v1606
      %1688 = vst.msk [vmem:[#allocation4 + $0x80] sm:$0xff] %vm1671, %v1608
      %1689 = vst.msk [vmem:[#allocation4 + $0x88] sm:$0xff] %vm1671, %v1610
      %1690 = vst.msk [vmem:[#allocation4 + $0x90] sm:$0xff] %vm1671, %v1612
      %1691 = vst.msk [vmem:[#allocation4 + $0x98] sm:$0xff] %vm1671, %v1614
      %1692 = vst.msk [vmem:[#allocation4 + $0xa0] sm:$0xff] %vm1671, %v1616
      %1693 = vst.msk [vmem:[#allocation4 + $0xa8] sm:$0xff] %vm1671, %v1618
      %1694 = vst.msk [vmem:[#allocation4 + $0xb0] sm:$0xff] %vm1671, %v1620
      %1695 = vst.msk [vmem:[#allocation4 + $0xb8] sm:$0xff] %vm1671, %v1622
      %1696 = vst.msk [vmem:[#allocation4 + $0xc0] sm:$0xff] %vm1671, %v1624
      %1697 = vst.msk [vmem:[#allocation4 + $0xc8] sm:$0xff] %vm1671, %v1626
      %1698 = vst.msk [vmem:[#allocation4 + $0xd0] sm:$0xff] %vm1671, %v1628
      %1699 = vst.msk [vmem:[#allocation4 + $0xd8] sm:$0xff] %vm1671, %v1630
      %1700 = vst.msk [vmem:[#allocation4 + $0xe0] sm:$0xff] %vm1671, %v1632
      %1701 = vst.msk [vmem:[#allocation4 + $0xe8] sm:$0xff] %vm1671, %v1634
      %1702 = vst.msk [vmem:[#allocation4 + $0xf0] sm:$0xff] %vm1671, %v1636
      %1703 = vst.msk [vmem:[#allocation4 + $0xf8] sm:$0xff] %vm1671, %v1638
      %v1704 = vld [vmem:[%s1510 + $0x1] sm:$0xff]
      %v1705 = vld [vmem:[%s1510 + $0x9] sm:$0xff]
      %v1706 = vld [vmem:[%s1510 + $0x19] sm:$0xff]
      %v1707 = vld [vmem:[%s1510 + $0x21] sm:$0xff]
      %v1708 = vld [vmem:[%s1510 + $0x31] sm:$0xff]
      %v1709 = vld [vmem:[%s1510 + $0x39] sm:$0xff]
      %v1710 = vld [vmem:[%s1510 + $0x49] sm:$0xff]
      %v1711 = vld [vmem:[%s1510 + $0x51] sm:$0xff]
      %v1712 = vld [vmem:[%s1510 + $0x61] sm:$0xff]
      %v1713 = vld [vmem:[%s1510 + $0x69] sm:$0xff]
      %v1714 = vld [vmem:[%s1510 + $0x79] sm:$0xff]
      %v1715 = vld [vmem:[%s1510 + $0x81] sm:$0xff]
      %v1716 = vld [vmem:[%s1510 + $0x91] sm:$0xff]
      %v1717 = vld [vmem:[%s1510 + $0x99] sm:$0xff]
      %v1718 = vld [vmem:[%s1510 + $0xa9] sm:$0xff]
      %v1719 = vld [vmem:[%s1510 + $0xb1] sm:$0xff]
      %v1720 = vld [vmem:[%s1510 + $0xc1] sm:$0xff]
      %v1721 = vld [vmem:[%s1510 + $0xc9] sm:$0xff]
      %v1722 = vld [vmem:[%s1510 + $0xd9] sm:$0xff]
      %v1723 = vld [vmem:[%s1510 + $0xe1] sm:$0xff]
      %v1724 = vld [vmem:[%s1510 + $0xf1] sm:$0xff]
      %v1725 = vld [vmem:[%s1510 + $0xf9] sm:$0xff]
      %v1726 = vld [vmem:[%s1510 + $0x109] sm:$0xff]
      %v1727 = vld [vmem:[%s1510 + $0x111] sm:$0xff]
      %v1728 = vld [vmem:[%s1510 + $0x121] sm:$0xff]
      %v1729 = vld [vmem:[%s1510 + $0x129] sm:$0xff]
      %v1730 = vld [vmem:[%s1510 + $0x139] sm:$0xff]
      %v1731 = vld [vmem:[%s1510 + $0x141] sm:$0xff]
      %v1732 = vld [vmem:[%s1510 + $0x151] sm:$0xff]
      %v1733 = vld [vmem:[%s1510 + $0x159] sm:$0xff]
      %v1734 = vld [vmem:[%s1510 + $0x169] sm:$0xff]
      %v1735 = vld [vmem:[%s1510 + $0x171] sm:$0xff]
      %1768 = vrot.lane.b32.xlu0 %v1704, 28
      %v1769 = vpop.permute.xlu0 %1768
      %1770 = vrot.lane.b32.xlu0 %v1705, 28
      %v1771 = vpop.permute.xlu0 %1770
      %1772 = vrot.lane.b32.xlu0 %v1706, 28
      %v1773 = vpop.permute.xlu0 %1772
      %1774 = vrot.lane.b32.xlu0 %v1707, 28
      %v1775 = vpop.permute.xlu0 %1774
      %1776 = vrot.lane.b32.xlu0 %v1708, 28
      %v1777 = vpop.permute.xlu0 %1776
      %1778 = vrot.lane.b32.xlu0 %v1709, 28
      %v1779 = vpop.permute.xlu0 %1778
      %1780 = vrot.lane.b32.xlu0 %v1710, 28
      %v1781 = vpop.permute.xlu0 %1780
      %1782 = vrot.lane.b32.xlu0 %v1711, 28
      %v1783 = vpop.permute.xlu0 %1782
      %1784 = vrot.lane.b32.xlu0 %v1712, 28
      %v1785 = vpop.permute.xlu0 %1784
      %1786 = vrot.lane.b32.xlu0 %v1713, 28
      %v1787 = vpop.permute.xlu0 %1786
      %1788 = vrot.lane.b32.xlu0 %v1714, 28
      %v1789 = vpop.permute.xlu0 %1788
      %1790 = vrot.lane.b32.xlu0 %v1715, 28
      %v1791 = vpop.permute.xlu0 %1790
      %1792 = vrot.lane.b32.xlu0 %v1716, 28
      %v1793 = vpop.permute.xlu0 %1792
      %1794 = vrot.lane.b32.xlu0 %v1717, 28
      %v1795 = vpop.permute.xlu0 %1794
      %1796 = vrot.lane.b32.xlu0 %v1718, 28
      %v1797 = vpop.permute.xlu0 %1796
      %1798 = vrot.lane.b32.xlu0 %v1719, 28
      %v1799 = vpop.permute.xlu0 %1798
      %1800 = vrot.lane.b32.xlu0 %v1720, 28
      %v1801 = vpop.permute.xlu0 %1800
      %1802 = vrot.lane.b32.xlu0 %v1721, 28
      %v1803 = vpop.permute.xlu0 %1802
      %1804 = vrot.lane.b32.xlu0 %v1722, 28
      %v1805 = vpop.permute.xlu0 %1804
      %1806 = vrot.lane.b32.xlu0 %v1723, 28
      %v1807 = vpop.permute.xlu0 %1806
      %1808 = vrot.lane.b32.xlu0 %v1724, 28
      %v1809 = vpop.permute.xlu0 %1808
      %1810 = vrot.lane.b32.xlu0 %v1725, 28
      %v1811 = vpop.permute.xlu0 %1810
      %1812 = vrot.lane.b32.xlu0 %v1726, 28
      %v1813 = vpop.permute.xlu0 %1812
      %1814 = vrot.lane.b32.xlu0 %v1727, 28
      %v1815 = vpop.permute.xlu0 %1814
      %1816 = vrot.lane.b32.xlu0 %v1728, 28
      %v1817 = vpop.permute.xlu0 %1816
      %1818 = vrot.lane.b32.xlu0 %v1729, 28
      %v1819 = vpop.permute.xlu0 %1818
      %1820 = vrot.lane.b32.xlu0 %v1730, 28
      %v1821 = vpop.permute.xlu0 %1820
      %1822 = vrot.lane.b32.xlu0 %v1731, 28
      %v1823 = vpop.permute.xlu0 %1822
      %1824 = vrot.lane.b32.xlu0 %v1732, 28
      %v1825 = vpop.permute.xlu0 %1824
      %1826 = vrot.lane.b32.xlu0 %v1733, 28
      %v1827 = vpop.permute.xlu0 %1826
      %1828 = vrot.lane.b32.xlu0 %v1734, 28
      %v1829 = vpop.permute.xlu0 %1828
      %1830 = vrot.lane.b32.xlu0 %v1735, 28
      %v1831 = vpop.permute.xlu0 %1830
      %vm1864 = vcmask 261344
      %1865 = vst.msk [vmem:[#allocation4] sm:$0xff] %vm1864, %v1769
      %1866 = vst.msk [vmem:[#allocation4 + $0x8] sm:$0xff] %vm1864, %v1771
      %1867 = vst.msk [vmem:[#allocation4 + $0x10] sm:$0xff] %vm1864, %v1773
      %1868 = vst.msk [vmem:[#allocation4 + $0x18] sm:$0xff] %vm1864, %v1775
      %1869 = vst.msk [vmem:[#allocation4 + $0x20] sm:$0xff] %vm1864, %v1777
      %1870 = vst.msk [vmem:[#allocation4 + $0x28] sm:$0xff] %vm1864, %v1779
      %1871 = vst.msk [vmem:[#allocation4 + $0x30] sm:$0xff] %vm1864, %v1781
      %1872 = vst.msk [vmem:[#allocation4 + $0x38] sm:$0xff] %vm1864, %v1783
      %1873 = vst.msk [vmem:[#allocation4 + $0x40] sm:$0xff] %vm1864, %v1785
      %1874 = vst.msk [vmem:[#allocation4 + $0x48] sm:$0xff] %vm1864, %v1787
      %1875 = vst.msk [vmem:[#allocation4 + $0x50] sm:$0xff] %vm1864, %v1789
      %1876 = vst.msk [vmem:[#allocation4 + $0x58] sm:$0xff] %vm1864, %v1791
      %1877 = vst.msk [vmem:[#allocation4 + $0x60] sm:$0xff] %vm1864, %v1793
      %1878 = vst.msk [vmem:[#allocation4 + $0x68] sm:$0xff] %vm1864, %v1795
      %1879 = vst.msk [vmem:[#allocation4 + $0x70] sm:$0xff] %vm1864, %v1797
      %1880 = vst.msk [vmem:[#allocation4 + $0x78] sm:$0xff] %vm1864, %v1799
      %1881 = vst.msk [vmem:[#allocation4 + $0x80] sm:$0xff] %vm1864, %v1801
      %1882 = vst.msk [vmem:[#allocation4 + $0x88] sm:$0xff] %vm1864, %v1803
      %1883 = vst.msk [vmem:[#allocation4 + $0x90] sm:$0xff] %vm1864, %v1805
      %1884 = vst.msk [vmem:[#allocation4 + $0x98] sm:$0xff] %vm1864, %v1807
      %1885 = vst.msk [vmem:[#allocation4 + $0xa0] sm:$0xff] %vm1864, %v1809
      %1886 = vst.msk [vmem:[#allocation4 + $0xa8] sm:$0xff] %vm1864, %v1811
      %1887 = vst.msk [vmem:[#allocation4 + $0xb0] sm:$0xff] %vm1864, %v1813
      %1888 = vst.msk [vmem:[#allocation4 + $0xb8] sm:$0xff] %vm1864, %v1815
      %1889 = vst.msk [vmem:[#allocation4 + $0xc0] sm:$0xff] %vm1864, %v1817
      %1890 = vst.msk [vmem:[#allocation4 + $0xc8] sm:$0xff] %vm1864, %v1819
      %1891 = vst.msk [vmem:[#allocation4 + $0xd0] sm:$0xff] %vm1864, %v1821
      %1892 = vst.msk [vmem:[#allocation4 + $0xd8] sm:$0xff] %vm1864, %v1823
      %1893 = vst.msk [vmem:[#allocation4 + $0xe0] sm:$0xff] %vm1864, %v1825
      %1894 = vst.msk [vmem:[#allocation4 + $0xe8] sm:$0xff] %vm1864, %v1827
      %1895 = vst.msk [vmem:[#allocation4 + $0xf0] sm:$0xff] %vm1864, %v1829
      %1896 = vst.msk [vmem:[#allocation4 + $0xf8] sm:$0xff] %vm1864, %v1831
      %v1897 = vld [vmem:[%s1510 + $0x2] sm:$0xff]
      %v1898 = vld [vmem:[%s1510 + $0xa] sm:$0xff]
      %v1899 = vld [vmem:[%s1510 + $0x1a] sm:$0xff]
      %v1900 = vld [vmem:[%s1510 + $0x22] sm:$0xff]
      %v1901 = vld [vmem:[%s1510 + $0x32] sm:$0xff]
      %v1902 = vld [vmem:[%s1510 + $0x3a] sm:$0xff]
      %v1903 = vld [vmem:[%s1510 + $0x4a] sm:$0xff]
      %v1904 = vld [vmem:[%s1510 + $0x52] sm:$0xff]
      %v1905 = vld [vmem:[%s1510 + $0x62] sm:$0xff]
      %v1906 = vld [vmem:[%s1510 + $0x6a] sm:$0xff]
      %v1907 = vld [vmem:[%s1510 + $0x7a] sm:$0xff]
      %v1908 = vld [vmem:[%s1510 + $0x82] sm:$0xff]
      %v1909 = vld [vmem:[%s1510 + $0x92] sm:$0xff]
      %v1910 = vld [vmem:[%s1510 + $0x9a] sm:$0xff]
      %v1911 = vld [vmem:[%s1510 + $0xaa] sm:$0xff]
      %v1912 = vld [vmem:[%s1510 + $0xb2] sm:$0xff]
      %v1913 = vld [vmem:[%s1510 + $0xc2] sm:$0xff]
      %v1914 = vld [vmem:[%s1510 + $0xca] sm:$0xff]
      %v1915 = vld [vmem:[%s1510 + $0xda] sm:$0xff]
      %v1916 = vld [vmem:[%s1510 + $0xe2] sm:$0xff]
      %v1917 = vld [vmem:[%s1510 + $0xf2] sm:$0xff]
      %v1918 = vld [vmem:[%s1510 + $0xfa] sm:$0xff]
      %v1919 = vld [vmem:[%s1510 + $0x10a] sm:$0xff]
      %v1920 = vld [vmem:[%s1510 + $0x112] sm:$0xff]
      %v1921 = vld [vmem:[%s1510 + $0x122] sm:$0xff]
      %v1922 = vld [vmem:[%s1510 + $0x12a] sm:$0xff]
      %v1923 = vld [vmem:[%s1510 + $0x13a] sm:$0xff]
      %v1924 = vld [vmem:[%s1510 + $0x142] sm:$0xff]
      %v1925 = vld [vmem:[%s1510 + $0x152] sm:$0xff]
      %v1926 = vld [vmem:[%s1510 + $0x15a] sm:$0xff]
      %v1927 = vld [vmem:[%s1510 + $0x16a] sm:$0xff]
      %v1928 = vld [vmem:[%s1510 + $0x172] sm:$0xff]
      %1961 = vrot.lane.b32.xlu0 %v1897, 32
      %v1962 = vpop.permute.xlu0 %1961
      %1963 = vrot.lane.b32.xlu0 %v1898, 32
      %v1964 = vpop.permute.xlu0 %1963
      %1965 = vrot.lane.b32.xlu0 %v1899, 32
      %v1966 = vpop.permute.xlu0 %1965
      %1967 = vrot.lane.b32.xlu0 %v1900, 32
      %v1968 = vpop.permute.xlu0 %1967
      %1969 = vrot.lane.b32.xlu0 %v1901, 32
      %v1970 = vpop.permute.xlu0 %1969
      %1971 = vrot.lane.b32.xlu0 %v1902, 32
      %v1972 = vpop.permute.xlu0 %1971
      %1973 = vrot.lane.b32.xlu0 %v1903, 32
      %v1974 = vpop.permute.xlu0 %1973
      %1975 = vrot.lane.b32.xlu0 %v1904, 32
      %v1976 = vpop.permute.xlu0 %1975
      %1977 = vrot.lane.b32.xlu0 %v1905, 32
      %v1978 = vpop.permute.xlu0 %1977
      %1979 = vrot.lane.b32.xlu0 %v1906, 32
      %v1980 = vpop.permute.xlu0 %1979
      %1981 = vrot.lane.b32.xlu0 %v1907, 32
      %v1982 = vpop.permute.xlu0 %1981
      %1983 = vrot.lane.b32.xlu0 %v1908, 32
      %v1984 = vpop.permute.xlu0 %1983
      %1985 = vrot.lane.b32.xlu0 %v1909, 32
      %v1986 = vpop.permute.xlu0 %1985
      %1987 = vrot.lane.b32.xlu0 %v1910, 32
      %v1988 = vpop.permute.xlu0 %1987
      %1989 = vrot.lane.b32.xlu0 %v1911, 32
      %v1990 = vpop.permute.xlu0 %1989
      %1991 = vrot.lane.b32.xlu0 %v1912, 32
      %v1992 = vpop.permute.xlu0 %1991
      %1993 = vrot.lane.b32.xlu0 %v1913, 32
      %v1994 = vpop.permute.xlu0 %1993
      %1995 = vrot.lane.b32.xlu0 %v1914, 32
      %v1996 = vpop.permute.xlu0 %1995
      %1997 = vrot.lane.b32.xlu0 %v1915, 32
      %v1998 = vpop.permute.xlu0 %1997
      %1999 = vrot.lane.b32.xlu0 %v1916, 32
      %v2000 = vpop.permute.xlu0 %1999
      %2001 = vrot.lane.b32.xlu0 %v1917, 32
      %v2002 = vpop.permute.xlu0 %2001
      %2003 = vrot.lane.b32.xlu0 %v1918, 32
      %v2004 = vpop.permute.xlu0 %2003
      %2005 = vrot.lane.b32.xlu0 %v1919, 32
      %v2006 = vpop.permute.xlu0 %2005
      %2007 = vrot.lane.b32.xlu0 %v1920, 32
      %v2008 = vpop.permute.xlu0 %2007
      %2009 = vrot.lane.b32.xlu0 %v1921, 32
      %v2010 = vpop.permute.xlu0 %2009
      %2011 = vrot.lane.b32.xlu0 %v1922, 32
      %v2012 = vpop.permute.xlu0 %2011
      %2013 = vrot.lane.b32.xlu0 %v1923, 32
      %v2014 = vpop.permute.xlu0 %2013
      %2015 = vrot.lane.b32.xlu0 %v1924, 32
      %v2016 = vpop.permute.xlu0 %2015
      %2017 = vrot.lane.b32.xlu0 %v1925, 32
      %v2018 = vpop.permute.xlu0 %2017
      %2019 = vrot.lane.b32.xlu0 %v1926, 32
      %v2020 = vpop.permute.xlu0 %2019
      %2021 = vrot.lane.b32.xlu0 %v1927, 32
      %v2022 = vpop.permute.xlu0 %2021
      %2023 = vrot.lane.b32.xlu0 %v1928, 32
      %v2024 = vpop.permute.xlu0 %2023
      %vm2057 = vcmask 294144
      %2058 = vst.msk [vmem:[#allocation4] sm:$0xff] %vm2057, %v1962
      %2059 = vst.msk [vmem:[#allocation4 + $0x8] sm:$0xff] %vm2057, %v1964
      %2060 = vst.msk [vmem:[#allocation4 + $0x10] sm:$0xff] %vm2057, %v1966
      %2061 = vst.msk [vmem:[#allocation4 + $0x18] sm:$0xff] %vm2057, %v1968
      %2062 = vst.msk [vmem:[#allocation4 + $0x20] sm:$0xff] %vm2057, %v1970
      %2063 = vst.msk [vmem:[#allocation4 + $0x28] sm:$0xff] %vm2057, %v1972
      %2064 = vst.msk [vmem:[#allocation4 + $0x30] sm:$0xff] %vm2057, %v1974
      %2065 = vst.msk [vmem:[#allocation4 + $0x38] sm:$0xff] %vm2057, %v1976
      %2066 = vst.msk [vmem:[#allocation4 + $0x40] sm:$0xff] %vm2057, %v1978
      %2067 = vst.msk [vmem:[#allocation4 + $0x48] sm:$0xff] %vm2057, %v1980
      %2068 = vst.msk [vmem:[#allocation4 + $0x50] sm:$0xff] %vm2057, %v1982
      %2069 = vst.msk [vmem:[#allocation4 + $0x58] sm:$0xff] %vm2057, %v1984
      %2070 = vst.msk [vmem:[#allocation4 + $0x60] sm:$0xff] %vm2057, %v1986
      %2071 = vst.msk [vmem:[#allocation4 + $0x68] sm:$0xff] %vm2057, %v1988
      %2072 = vst.msk [vmem:[#allocation4 + $0x70] sm:$0xff] %vm2057, %v1990
      %2073 = vst.msk [vmem:[#allocation4 + $0x78] sm:$0xff] %vm2057, %v1992
      %2074 = vst.msk [vmem:[#allocation4 + $0x80] sm:$0xff] %vm2057, %v1994
      %2075 = vst.msk [vmem:[#allocation4 + $0x88] sm:$0xff] %vm2057, %v1996
      %2076 = vst.msk [vmem:[#allocation4 + $0x90] sm:$0xff] %vm2057, %v1998
      %2077 = vst.msk [vmem:[#allocation4 + $0x98] sm:$0xff] %vm2057, %v2000
      %2078 = vst.msk [vmem:[#allocation4 + $0xa0] sm:$0xff] %vm2057, %v2002
      %2079 = vst.msk [vmem:[#allocation4 + $0xa8] sm:$0xff] %vm2057, %v2004
      %2080 = vst.msk [vmem:[#allocation4 + $0xb0] sm:$0xff] %vm2057, %v2006
      %2081 = vst.msk [vmem:[#allocation4 + $0xb8] sm:$0xff] %vm2057, %v2008
      %2082 = vst.msk [vmem:[#allocation4 + $0xc0] sm:$0xff] %vm2057, %v2010
      %2083 = vst.msk [vmem:[#allocation4 + $0xc8] sm:$0xff] %vm2057, %v2012
      %2084 = vst.msk [vmem:[#allocation4 + $0xd0] sm:$0xff] %vm2057, %v2014
      %2085 = vst.msk [vmem:[#allocation4 + $0xd8] sm:$0xff] %vm2057, %v2016
      %2086 = vst.msk [vmem:[#allocation4 + $0xe0] sm:$0xff] %vm2057, %v2018
      %2087 = vst.msk [vmem:[#allocation4 + $0xe8] sm:$0xff] %vm2057, %v2020
      %2088 = vst.msk [vmem:[#allocation4 + $0xf0] sm:$0xff] %vm2057, %v2022
      %2089 = vst.msk [vmem:[#allocation4 + $0xf8] sm:$0xff] %vm2057, %v2024
      %v2090 = vld [vmem:[%s354] sm:$0xff]
      %v2091 = vld [vmem:[%s354 + $0x8] sm:$0xff]
      %v2092 = vld [vmem:[%s354 + $0x10] sm:$0xff]
      %v2093 = vld [vmem:[%s354 + $0x18] sm:$0xff]
      %v2094 = vld [vmem:[%s354 + $0x20] sm:$0xff]
      %v2095 = vld [vmem:[%s354 + $0x28] sm:$0xff]
      %v2096 = vld [vmem:[%s354 + $0x30] sm:$0xff]
      %v2097 = vld [vmem:[%s354 + $0x38] sm:$0xff]
      %v2098 = vld [vmem:[%s354 + $0x40] sm:$0xff]
      %v2099 = vld [vmem:[%s354 + $0x48] sm:$0xff]
      %v2100 = vld [vmem:[%s354 + $0x50] sm:$0xff]
      %v2101 = vld [vmem:[%s354 + $0x58] sm:$0xff]
      %v2102 = vld [vmem:[%s354 + $0x60] sm:$0xff]
      %v2103 = vld [vmem:[%s354 + $0x68] sm:$0xff]
      %v2104 = vld [vmem:[%s354 + $0x70] sm:$0xff]
      %v2105 = vld [vmem:[%s354 + $0x78] sm:$0xff]
      %v2106 = vld [vmem:[%s354 + $0x80] sm:$0xff]
      %v2107 = vld [vmem:[%s354 + $0x88] sm:$0xff]
      %v2108 = vld [vmem:[%s354 + $0x90] sm:$0xff]
      %v2109 = vld [vmem:[%s354 + $0x98] sm:$0xff]
      %v2110 = vld [vmem:[%s354 + $0xa0] sm:$0xff]
      %v2111 = vld [vmem:[%s354 + $0xa8] sm:$0xff]
      %v2112 = vld [vmem:[%s354 + $0xb0] sm:$0xff]
      %v2113 = vld [vmem:[%s354 + $0xb8] sm:$0xff]
      %v2114 = vld [vmem:[%s354 + $0xc0] sm:$0xff]
      %v2115 = vld [vmem:[%s354 + $0xc8] sm:$0xff]
      %v2116 = vld [vmem:[%s354 + $0xd0] sm:$0xff]
      %v2117 = vld [vmem:[%s354 + $0xd8] sm:$0xff]
      %v2118 = vld [vmem:[%s354 + $0xe0] sm:$0xff]
      %v2119 = vld [vmem:[%s354 + $0xe8] sm:$0xff]
      %v2120 = vld [vmem:[%s354 + $0xf0] sm:$0xff]
      %v2121 = vld [vmem:[%s354 + $0xf8] sm:$0xff]
      %v2122 = vld [vmem:[#allocation4] sm:$0xff]
      %v2123 = vld [vmem:[#allocation4 + $0x8] sm:$0xff]
      %v2124 = vld [vmem:[#allocation4 + $0x10] sm:$0xff]
      %v2125 = vld [vmem:[#allocation4 + $0x18] sm:$0xff]
      %v2126 = vld [vmem:[#allocation4 + $0x20] sm:$0xff]
      %v2127 = vld [vmem:[#allocation4 + $0x28] sm:$0xff]
      %v2128 = vld [vmem:[#allocation4 + $0x30] sm:$0xff]
      %v2129 = vld [vmem:[#allocation4 + $0x38] sm:$0xff]
      %v2130 = vld [vmem:[#allocation4 + $0x40] sm:$0xff]
      %v2131 = vld [vmem:[#allocation4 + $0x48] sm:$0xff]
      %v2132 = vld [vmem:[#allocation4 + $0x50] sm:$0xff]
      %v2133 = vld [vmem:[#allocation4 + $0x58] sm:$0xff]
      %v2134 = vld [vmem:[#allocation4 + $0x60] sm:$0xff]
      %v2135 = vld [vmem:[#allocation4 + $0x68] sm:$0xff]
      %v2136 = vld [vmem:[#allocation4 + $0x70] sm:$0xff]
      %v2137 = vld [vmem:[#allocation4 + $0x78] sm:$0xff]
      %v2138 = vld [vmem:[#allocation4 + $0x80] sm:$0xff]
      %v2139 = vld [vmem:[#allocation4 + $0x88] sm:$0xff]
      %v2140 = vld [vmem:[#allocation4 + $0x90] sm:$0xff]
      %v2141 = vld [vmem:[#allocation4 + $0x98] sm:$0xff]
      %v2142 = vld [vmem:[#allocation4 + $0xa0] sm:$0xff]
      %v2143 = vld [vmem:[#allocation4 + $0xa8] sm:$0xff]
      %v2144 = vld [vmem:[#allocation4 + $0xb0] sm:$0xff]
      %v2145 = vld [vmem:[#allocation4 + $0xb8] sm:$0xff]
      %v2146 = vld [vmem:[#allocation4 + $0xc0] sm:$0xff]
      %v2147 = vld [vmem:[#allocation4 + $0xc8] sm:$0xff]
      %v2148 = vld [vmem:[#allocation4 + $0xd0] sm:$0xff]
      %v2149 = vld [vmem:[#allocation4 + $0xd8] sm:$0xff]
      %v2150 = vld [vmem:[#allocation4 + $0xe0] sm:$0xff]
      %v2151 = vld [vmem:[#allocation4 + $0xe8] sm:$0xff]
      %v2152 = vld [vmem:[#allocation4 + $0xf0] sm:$0xff]
      %v2153 = vld [vmem:[#allocation4 + $0xf8] sm:$0xff]
      %v2154 = vld [vmem:[%s1] sm:$0xff]
      %v2155 = vld [vmem:[%s1 + $0x8] sm:$0xff]
      %v2156 = vld [vmem:[%s1 + $0x10] sm:$0xff]
      %v2157 = vld [vmem:[%s1 + $0x18] sm:$0xff]
      %v2158 = vld [vmem:[%s1 + $0x20] sm:$0xf]
      %vm2159 = vcmask 293888
      %v2161 = vsel %vm2159, %v2122, 0
      %v2164 = vsel %vm2159, %v2123, 0
      %v2167 = vsel %vm2159, %v2124, 0
      %v2170 = vsel %vm2159, %v2125, 0
      %v2173 = vsel %vm2159, %v2126, 0
      %v2176 = vsel %vm2159, %v2127, 0
      %v2179 = vsel %vm2159, %v2128, 0
      %v2182 = vsel %vm2159, %v2129, 0
      %v2185 = vsel %vm2159, %v2130, 0
      %v2188 = vsel %vm2159, %v2131, 0
      %v2191 = vsel %vm2159, %v2132, 0
      %v2194 = vsel %vm2159, %v2133, 0
      %v2197 = vsel %vm2159, %v2134, 0
      %v2200 = vsel %vm2159, %v2135, 0
      %v2203 = vsel %vm2159, %v2136, 0
      %v2206 = vsel %vm2159, %v2137, 0
      %v2209 = vsel %vm2159, %v2138, 0
      %v2212 = vsel %vm2159, %v2139, 0
      %v2215 = vsel %vm2159, %v2140, 0
      %v2218 = vsel %vm2159, %v2141, 0
      %v2221 = vsel %vm2159, %v2142, 0
      %v2224 = vsel %vm2159, %v2143, 0
      %v2227 = vsel %vm2159, %v2144, 0
      %v2230 = vsel %vm2159, %v2145, 0
      %v2233 = vsel %vm2159, %v2146, 0
      %v2236 = vsel %vm2159, %v2147, 0
      %v2239 = vsel %vm2159, %v2148, 0
      %v2242 = vsel %vm2159, %v2149, 0
      %v2245 = vsel %vm2159, %v2150, 0
      %v2248 = vsel %vm2159, %v2151, 0
      %v2251 = vsel %vm2159, %v2152, 0
      %v2254 = vsel %vm2159, %v2153, 0
      %vm2256 = vcmask 1043456
      %v2258 = vsel %vm2256, %v2158, 0
      %2260 = vmatpush.msra.mxu0 0.0
      %2261 = vmatpush.msra.mxu0 0.0
      %2262 = vmatpush.msra.mxu0 0.0
      %2263 = vmatpush.msra.mxu0 0.0
      %2264 = vmatpush.msra.mxu0 0.0
      %2265 = vmatpush.msra.mxu0 0.0
      %2266 = vmatpush.msra.mxu0 0.0
      %2267 = vmatpush.msra.mxu0 0.0
      %2268 = vmatpush.msra.mxu0 0.0
      %2269 = vmatpush.msra.mxu0 0.0
      %2270 = vmatpush.msra.mxu0 0.0
      %2271 = vmatpush.msra.mxu0 %v2258
      %2272 = vmatpush.msra.mxu0 %v2157
      %2273 = vmatpush.msra.mxu0 %v2156
      %2274 = vmatpush.msra.mxu0 %v2155
      %2275 = vmatpush.msra.mxu0 %v2154
      %2276 = vmatmul.f32.gmra.mxu0 %v2161
      %v2277 = vpop.f32.mrf.mxu0
      %v2278 = vadd.f32 0.0, %v2277
      %2279 = vmatmul.f32.gmra.mxu0 %v2164
      %v2280 = vpop.f32.mrf.mxu0
      %v2281 = vadd.f32 0.0, %v2280
      %2282 = vmatmul.f32.gmra.mxu0 %v2167
      %v2283 = vpop.f32.mrf.mxu0
      %v2284 = vadd.f32 0.0, %v2283
      %2285 = vmatmul.f32.gmra.mxu0 %v2170
      %v2286 = vpop.f32.mrf.mxu0
      %v2287 = vadd.f32 0.0, %v2286
      %2288 = vmatmul.f32.gmra.mxu0 %v2173
      %v2289 = vpop.f32.mrf.mxu0
      %v2290 = vadd.f32 0.0, %v2289
      %2291 = vmatmul.f32.gmra.mxu0 %v2176
      %v2292 = vpop.f32.mrf.mxu0
      %v2293 = vadd.f32 0.0, %v2292
      %2294 = vmatmul.f32.gmra.mxu0 %v2179
      %v2295 = vpop.f32.mrf.mxu0
      %v2296 = vadd.f32 0.0, %v2295
      %2297 = vmatmul.f32.gmra.mxu0 %v2182
      %v2298 = vpop.f32.mrf.mxu0
      %v2299 = vadd.f32 0.0, %v2298
      %2300 = vmatmul.f32.gmra.mxu0 %v2185
      %v2301 = vpop.f32.mrf.mxu0
      %v2302 = vadd.f32 0.0, %v2301
      %2303 = vmatmul.f32.gmra.mxu0 %v2188
      %v2304 = vpop.f32.mrf.mxu0
      %v2305 = vadd.f32 0.0, %v2304
      %2306 = vmatmul.f32.gmra.mxu0 %v2191
      %v2307 = vpop.f32.mrf.mxu0
      %v2308 = vadd.f32 0.0, %v2307
      %2309 = vmatmul.f32.gmra.mxu0 %v2194
      %v2310 = vpop.f32.mrf.mxu0
      %v2311 = vadd.f32 0.0, %v2310
      %2312 = vmatmul.f32.gmra.mxu0 %v2197
      %v2313 = vpop.f32.mrf.mxu0
      %v2314 = vadd.f32 0.0, %v2313
      %2315 = vmatmul.f32.gmra.mxu0 %v2200
      %v2316 = vpop.f32.mrf.mxu0
      %v2317 = vadd.f32 0.0, %v2316
      %2318 = vmatmul.f32.gmra.mxu0 %v2203
      %v2319 = vpop.f32.mrf.mxu0
      %v2320 = vadd.f32 0.0, %v2319
      %2321 = vmatmul.f32.gmra.mxu0 %v2206
      %v2322 = vpop.f32.mrf.mxu0
      %v2323 = vadd.f32 0.0, %v2322
      %2324 = vmatmul.f32.gmra.mxu0 %v2209
      %v2325 = vpop.f32.mrf.mxu0
      %v2326 = vadd.f32 0.0, %v2325
      %2327 = vmatmul.f32.gmra.mxu0 %v2212
      %v2328 = vpop.f32.mrf.mxu0
      %v2329 = vadd.f32 0.0, %v2328
      %2330 = vmatmul.f32.gmra.mxu0 %v2215
      %v2331 = vpop.f32.mrf.mxu0
      %v2332 = vadd.f32 0.0, %v2331
      %2333 = vmatmul.f32.gmra.mxu0 %v2218
      %v2334 = vpop.f32.mrf.mxu0
      %v2335 = vadd.f32 0.0, %v2334
      %2336 = vmatmul.f32.gmra.mxu0 %v2221
      %v2337 = vpop.f32.mrf.mxu0
      %v2338 = vadd.f32 0.0, %v2337
      %2339 = vmatmul.f32.gmra.mxu0 %v2224
      %v2340 = vpop.f32.mrf.mxu0
      %v2341 = vadd.f32 0.0, %v2340
      %2342 = vmatmul.f32.gmra.mxu0 %v2227
      %v2343 = vpop.f32.mrf.mxu0
      %v2344 = vadd.f32 0.0, %v2343
      %2345 = vmatmul.f32.gmra.mxu0 %v2230
      %v2346 = vpop.f32.mrf.mxu0
      %v2347 = vadd.f32 0.0, %v2346
      %2348 = vmatmul.f32.gmra.mxu0 %v2233
      %v2349 = vpop.f32.mrf.mxu0
      %v2350 = vadd.f32 0.0, %v2349
      %2351 = vmatmul.f32.gmra.mxu0 %v2236
      %v2352 = vpop.f32.mrf.mxu0
      %v2353 = vadd.f32 0.0, %v2352
      %2354 = vmatmul.f32.gmra.mxu0 %v2239
      %v2355 = vpop.f32.mrf.mxu0
      %v2356 = vadd.f32 0.0, %v2355
      %2357 = vmatmul.f32.gmra.mxu0 %v2242
      %v2358 = vpop.f32.mrf.mxu0
      %v2359 = vadd.f32 0.0, %v2358
      %2360 = vmatmul.f32.gmra.mxu0 %v2245
      %v2361 = vpop.f32.mrf.mxu0
      %v2362 = vadd.f32 0.0, %v2361
      %2363 = vmatmul.f32.gmra.mxu0 %v2248
      %v2364 = vpop.f32.mrf.mxu0
      %v2365 = vadd.f32 0.0, %v2364
      %2366 = vmatmul.f32.gmra.mxu0 %v2251
      %v2367 = vpop.f32.mrf.mxu0
      %v2368 = vadd.f32 0.0, %v2367
      %2369 = vmatmul.f32.gmra.mxu0 %v2254
      %v2370 = vpop.f32.mrf.mxu0
      %v2371 = vadd.f32 0.0, %v2370
      %2372 = vdwg.mxu0
      %v2373 = vld [vmem:[%s2] sm:$0x1]
      %v2375 = vperm.slane %v2373, 0
      %v2377 = vmul.f32 %v2278, %v2375
      %v2378 = vmul.f32 %v2281, %v2375
      %v2379 = vmul.f32 %v2284, %v2375
      %v2380 = vmul.f32 %v2287, %v2375
      %v2381 = vmul.f32 %v2290, %v2375
      %v2382 = vmul.f32 %v2293, %v2375
      %v2383 = vmul.f32 %v2296, %v2375
      %v2384 = vmul.f32 %v2299, %v2375
      %v2385 = vmul.f32 %v2302, %v2375
      %v2386 = vmul.f32 %v2305, %v2375
      %v2387 = vmul.f32 %v2308, %v2375
      %v2388 = vmul.f32 %v2311, %v2375
      %v2389 = vmul.f32 %v2314, %v2375
      %v2390 = vmul.f32 %v2317, %v2375
      %v2391 = vmul.f32 %v2320, %v2375
      %v2392 = vmul.f32 %v2323, %v2375
      %v2393 = vmul.f32 %v2326, %v2375
      %v2394 = vmul.f32 %v2329, %v2375
      %v2395 = vmul.f32 %v2332, %v2375
      %v2396 = vmul.f32 %v2335, %v2375
      %v2397 = vmul.f32 %v2338, %v2375
      %v2398 = vmul.f32 %v2341, %v2375
      %v2399 = vmul.f32 %v2344, %v2375
      %v2400 = vmul.f32 %v2347, %v2375
      %v2401 = vmul.f32 %v2350, %v2375
      %v2402 = vmul.f32 %v2353, %v2375
      %v2403 = vmul.f32 %v2356, %v2375
      %v2404 = vmul.f32 %v2359, %v2375
      %v2405 = vmul.f32 %v2362, %v2375
      %v2406 = vmul.f32 %v2365, %v2375
      %v2407 = vmul.f32 %v2368, %v2375
      %v2408 = vmul.f32 %v2371, %v2375
      %v2409 = vld [vmem:[%s3] sm:$0x1]
      %v2411 = vperm.slane %v2409, 0
      %v2413 = vadd.f32 %v2377, %v2411
      %v2414 = vadd.f32 %v2378, %v2411
      %v2415 = vadd.f32 %v2379, %v2411
      %v2416 = vadd.f32 %v2380, %v2411
      %v2417 = vadd.f32 %v2381, %v2411
      %v2418 = vadd.f32 %v2382, %v2411
      %v2419 = vadd.f32 %v2383, %v2411
      %v2420 = vadd.f32 %v2384, %v2411
      %v2421 = vadd.f32 %v2385, %v2411
      %v2422 = vadd.f32 %v2386, %v2411
      %v2423 = vadd.f32 %v2387, %v2411
      %v2424 = vadd.f32 %v2388, %v2411
      %v2425 = vadd.f32 %v2389, %v2411
      %v2426 = vadd.f32 %v2390, %v2411
      %v2427 = vadd.f32 %v2391, %v2411
      %v2428 = vadd.f32 %v2392, %v2411
      %v2429 = vadd.f32 %v2393, %v2411
      %v2430 = vadd.f32 %v2394, %v2411
      %v2431 = vadd.f32 %v2395, %v2411
      %v2432 = vadd.f32 %v2396, %v2411
      %v2433 = vadd.f32 %v2397, %v2411
      %v2434 = vadd.f32 %v2398, %v2411
      %v2435 = vadd.f32 %v2399, %v2411
      %v2436 = vadd.f32 %v2400, %v2411
      %v2437 = vadd.f32 %v2401, %v2411
      %v2438 = vadd.f32 %v2402, %v2411
      %v2439 = vadd.f32 %v2403, %v2411
      %v2440 = vadd.f32 %v2404, %v2411
      %v2441 = vadd.f32 %v2405, %v2411
      %v2442 = vadd.f32 %v2406, %v2411
      %v2443 = vadd.f32 %v2407, %v2411
      %v2444 = vadd.f32 %v2408, %v2411
      %vm2445 = vcmp.gt.f32.partialorder %v2413, 0.0
      %vm2446 = vcmp.gt.f32.partialorder %v2414, 0.0
      %vm2447 = vcmp.gt.f32.partialorder %v2415, 0.0
      %vm2448 = vcmp.gt.f32.partialorder %v2416, 0.0
      %vm2449 = vcmp.gt.f32.partialorder %v2417, 0.0
      %vm2450 = vcmp.gt.f32.partialorder %v2418, 0.0
      %vm2451 = vcmp.gt.f32.partialorder %v2419, 0.0
      %vm2452 = vcmp.gt.f32.partialorder %v2420, 0.0
      %vm2453 = vcmp.gt.f32.partialorder %v2421, 0.0
      %vm2454 = vcmp.gt.f32.partialorder %v2422, 0.0
      %vm2455 = vcmp.gt.f32.partialorder %v2423, 0.0
      %vm2456 = vcmp.gt.f32.partialorder %v2424, 0.0
      %vm2457 = vcmp.gt.f32.partialorder %v2425, 0.0
      %vm2458 = vcmp.gt.f32.partialorder %v2426, 0.0
      %vm2459 = vcmp.gt.f32.partialorder %v2427, 0.0
      %vm2460 = vcmp.gt.f32.partialorder %v2428, 0.0
      %vm2461 = vcmp.gt.f32.partialorder %v2429, 0.0
      %vm2462 = vcmp.gt.f32.partialorder %v2430, 0.0
      %vm2463 = vcmp.gt.f32.partialorder %v2431, 0.0
      %vm2464 = vcmp.gt.f32.partialorder %v2432, 0.0
      %vm2465 = vcmp.gt.f32.partialorder %v2433, 0.0
      %vm2466 = vcmp.gt.f32.partialorder %v2434, 0.0
      %vm2467 = vcmp.gt.f32.partialorder %v2435, 0.0
      %vm2468 = vcmp.gt.f32.partialorder %v2436, 0.0
      %vm2469 = vcmp.gt.f32.partialorder %v2437, 0.0
      %vm2470 = vcmp.gt.f32.partialorder %v2438, 0.0
      %vm2471 = vcmp.gt.f32.partialorder %v2439, 0.0
      %vm2472 = vcmp.gt.f32.partialorder %v2440, 0.0
      %vm2473 = vcmp.gt.f32.partialorder %v2441, 0.0
      %vm2474 = vcmp.gt.f32.partialorder %v2442, 0.0
      %vm2475 = vcmp.gt.f32.partialorder %v2443, 0.0
      %vm2476 = vcmp.gt.f32.partialorder %v2444, 0.0
      %v2477 = vmul.f32 %v2413, 0.01
      %v2478 = vmul.f32 %v2414, 0.01
      %v2479 = vmul.f32 %v2415, 0.01
      %v2480 = vmul.f32 %v2416, 0.01
      %v2481 = vmul.f32 %v2417, 0.01
      %v2482 = vmul.f32 %v2418, 0.01
      %v2483 = vmul.f32 %v2419, 0.01
      %v2484 = vmul.f32 %v2420, 0.01
      %v2485 = vmul.f32 %v2421, 0.01
      %v2486 = vmul.f32 %v2422, 0.01
      %v2487 = vmul.f32 %v2423, 0.01
      %v2488 = vmul.f32 %v2424, 0.01
      %v2489 = vmul.f32 %v2425, 0.01
      %v2490 = vmul.f32 %v2426, 0.01
      %v2491 = vmul.f32 %v2427, 0.01
      %v2492 = vmul.f32 %v2428, 0.01
      %v2493 = vmul.f32 %v2429, 0.01
      %v2494 = vmul.f32 %v2430, 0.01
      %v2495 = vmul.f32 %v2431, 0.01
      %v2496 = vmul.f32 %v2432, 0.01
      %v2497 = vmul.f32 %v2433, 0.01
      %v2498 = vmul.f32 %v2434, 0.01
      %v2499 = vmul.f32 %v2435, 0.01
      %v2500 = vmul.f32 %v2436, 0.01
      %v2501 = vmul.f32 %v2437, 0.01
      %v2502 = vmul.f32 %v2438, 0.01
      %v2503 = vmul.f32 %v2439, 0.01
      %v2504 = vmul.f32 %v2440, 0.01
      %v2505 = vmul.f32 %v2441, 0.01
      %v2506 = vmul.f32 %v2442, 0.01
      %v2507 = vmul.f32 %v2443, 0.01
      %v2508 = vmul.f32 %v2444, 0.01
      %v2509 = vsel %vm2445, %v2413, %v2477
      %v2510 = vsel %vm2446, %v2414, %v2478
      %v2511 = vsel %vm2447, %v2415, %v2479
      %v2512 = vsel %vm2448, %v2416, %v2480
      %v2513 = vsel %vm2449, %v2417, %v2481
      %v2514 = vsel %vm2450, %v2418, %v2482
      %v2515 = vsel %vm2451, %v2419, %v2483
      %v2516 = vsel %vm2452, %v2420, %v2484
      %v2517 = vsel %vm2453, %v2421, %v2485
      %v2518 = vsel %vm2454, %v2422, %v2486
      %v2519 = vsel %vm2455, %v2423, %v2487
      %v2520 = vsel %vm2456, %v2424, %v2488
      %v2521 = vsel %vm2457, %v2425, %v2489
      %v2522 = vsel %vm2458, %v2426, %v2490
      %v2523 = vsel %vm2459, %v2427, %v2491
      %v2524 = vsel %vm2460, %v2428, %v2492
      %v2525 = vsel %vm2461, %v2429, %v2493
      %v2526 = vsel %vm2462, %v2430, %v2494
      %v2527 = vsel %vm2463, %v2431, %v2495
      %v2528 = vsel %vm2464, %v2432, %v2496
      %v2529 = vsel %vm2465, %v2433, %v2497
      %v2530 = vsel %vm2466, %v2434, %v2498
      %v2531 = vsel %vm2467, %v2435, %v2499
      %v2532 = vsel %vm2468, %v2436, %v2500
      %v2533 = vsel %vm2469, %v2437, %v2501
      %v2534 = vsel %vm2470, %v2438, %v2502
      %v2535 = vsel %vm2471, %v2439, %v2503
      %v2536 = vsel %vm2472, %v2440, %v2504
      %v2537 = vsel %vm2473, %v2441, %v2505
      %v2538 = vsel %vm2474, %v2442, %v2506
      %v2539 = vsel %vm2475, %v2443, %v2507
      %v2540 = vsel %vm2476, %v2444, %v2508
      %vm2541 = vcmask 64512
      %2542 = vst.msk [vmem:[#allocation3] sm:$0xff] %vm2541, 0.0
      %2543 = vst.msk [vmem:[#allocation3 + $0x8] sm:$0xff] %vm2541, 0.0
      %vm2544 = vcmask 58368
      %2545 = vst.msk [vmem:[#allocation3 + $0x10] sm:$0x3] %vm2544, 0.0
      %2546 = vst.msk [vmem:[#allocation3 + $0x18] sm:$0xff] %vm2541, 0.0
      %2547 = vst.msk [vmem:[#allocation3 + $0x20] sm:$0xff] %vm2541, 0.0
      %2548 = vst.msk [vmem:[#allocation3 + $0x28] sm:$0x3] %vm2544, 0.0
      %2549 = vst.msk [vmem:[#allocation3 + $0x30] sm:$0xff] %vm2541, 0.0
      %2550 = vst.msk [vmem:[#allocation3 + $0x38] sm:$0xff] %vm2541, 0.0
      %2551 = vst.msk [vmem:[#allocation3 + $0x40] sm:$0x3] %vm2544, 0.0
      %2552 = vst.msk [vmem:[#allocation3 + $0x48] sm:$0xff] %vm2541, 0.0
      %2553 = vst.msk [vmem:[#allocation3 + $0x50] sm:$0xff] %vm2541, 0.0
      %2554 = vst.msk [vmem:[#allocation3 + $0x58] sm:$0x3] %vm2544, 0.0
      %2555 = vst.msk [vmem:[#allocation3 + $0x60] sm:$0xff] %vm2541, 0.0
      %2556 = vst.msk [vmem:[#allocation3 + $0x68] sm:$0xff] %vm2541, 0.0
      %2557 = vst.msk [vmem:[#allocation3 + $0x70] sm:$0x3] %vm2544, 0.0
      %2558 = vst.msk [vmem:[#allocation3 + $0x78] sm:$0xff] %vm2541, 0.0
      %2559 = vst.msk [vmem:[#allocation3 + $0x80] sm:$0xff] %vm2541, 0.0
      %2560 = vst.msk [vmem:[#allocation3 + $0x88] sm:$0x3] %vm2544, 0.0
      %2561 = vst.msk [vmem:[#allocation3 + $0x90] sm:$0xff] %vm2541, 0.0
      %2562 = vst.msk [vmem:[#allocation3 + $0x98] sm:$0xff] %vm2541, 0.0
      %2563 = vst.msk [vmem:[#allocation3 + $0xa0] sm:$0x3] %vm2544, 0.0
      %2564 = vst.msk [vmem:[#allocation3 + $0xa8] sm:$0xff] %vm2541, 0.0
      %2565 = vst.msk [vmem:[#allocation3 + $0xb0] sm:$0xff] %vm2541, 0.0
      %2566 = vst.msk [vmem:[#allocation3 + $0xb8] sm:$0x3] %vm2544, 0.0
      %2567 = vst.msk [vmem:[#allocation3 + $0xc0] sm:$0xff] %vm2541, 0.0
      %2568 = vst.msk [vmem:[#allocation3 + $0xc8] sm:$0xff] %vm2541, 0.0
      %2569 = vst.msk [vmem:[#allocation3 + $0xd0] sm:$0x3] %vm2544, 0.0
      %2570 = vst.msk [vmem:[#allocation3 + $0xd8] sm:$0xff] %vm2541, 0.0
      %2571 = vst.msk [vmem:[#allocation3 + $0xe0] sm:$0xff] %vm2541, 0.0
      %2572 = vst.msk [vmem:[#allocation3 + $0xe8] sm:$0x3] %vm2544, 0.0
      %2573 = vst.msk [vmem:[#allocation3 + $0xf0] sm:$0xff] %vm2541, 0.0
      %2574 = vst.msk [vmem:[#allocation3 + $0xf8] sm:$0xff] %vm2541, 0.0
      %2575 = vst.msk [vmem:[#allocation3 + $0x100] sm:$0x3] %vm2544, 0.0
      %2576 = vst.msk [vmem:[#allocation3 + $0x108] sm:$0xff] %vm2541, 0.0
      %2577 = vst.msk [vmem:[#allocation3 + $0x110] sm:$0xff] %vm2541, 0.0
      %2578 = vst.msk [vmem:[#allocation3 + $0x118] sm:$0x3] %vm2544, 0.0
      %2579 = vst.msk [vmem:[#allocation3 + $0x120] sm:$0xff] %vm2541, 0.0
      %2580 = vst.msk [vmem:[#allocation3 + $0x128] sm:$0xff] %vm2541, 0.0
      %2581 = vst.msk [vmem:[#allocation3 + $0x130] sm:$0x3] %vm2544, 0.0
      %2582 = vst.msk [vmem:[#allocation3 + $0x138] sm:$0xff] %vm2541, 0.0
      %2583 = vst.msk [vmem:[#allocation3 + $0x140] sm:$0xff] %vm2541, 0.0
      %2584 = vst.msk [vmem:[#allocation3 + $0x148] sm:$0x3] %vm2544, 0.0
      %2585 = vst.msk [vmem:[#allocation3 + $0x150] sm:$0xff] %vm2541, 0.0
      %2586 = vst.msk [vmem:[#allocation3 + $0x158] sm:$0xff] %vm2541, 0.0
      %2587 = vst.msk [vmem:[#allocation3 + $0x160] sm:$0x3] %vm2544, 0.0
      %2588 = vst.msk [vmem:[#allocation3 + $0x168] sm:$0xff] %vm2541, 0.0
      %2589 = vst.msk [vmem:[#allocation3 + $0x170] sm:$0xff] %vm2541, 0.0
      %2590 = vst.msk [vmem:[#allocation3 + $0x178] sm:$0x3] %vm2544, 0.0
      %2591 = vst.msk [vmem:[#allocation3 + $0x180] sm:$0xff] %vm2541, 0.0
      %2592 = vst.msk [vmem:[#allocation3 + $0x188] sm:$0xff] %vm2541, 0.0
      %2593 = vst.msk [vmem:[#allocation3 + $0x190] sm:$0x3] %vm2544, 0.0
      %2594 = vst.msk [vmem:[#allocation3 + $0x198] sm:$0xff] %vm2541, 0.0
      %2595 = vst.msk [vmem:[#allocation3 + $0x1a0] sm:$0xff] %vm2541, 0.0
      %2596 = vst.msk [vmem:[#allocation3 + $0x1a8] sm:$0x3] %vm2544, 0.0
      %s2597 = scalar_lea.vmem [#allocation3], 24
      %2598 = vst.msk [vmem:[%s2597 + $0x1] sm:$0xff] %vm2541, %v2509
      %2599 = vst.msk [vmem:[%s2597 + $0x9] sm:$0xff] %vm2541, %v2510
      %2600 = vst.msk [vmem:[%s2597 + $0x19] sm:$0xff] %vm2541, %v2511
      %2601 = vst.msk [vmem:[%s2597 + $0x21] sm:$0xff] %vm2541, %v2512
      %2602 = vst.msk [vmem:[%s2597 + $0x31] sm:$0xff] %vm2541, %v2513
      %2603 = vst.msk [vmem:[%s2597 + $0x39] sm:$0xff] %vm2541, %v2514
      %2604 = vst.msk [vmem:[%s2597 + $0x49] sm:$0xff] %vm2541, %v2515
      %2605 = vst.msk [vmem:[%s2597 + $0x51] sm:$0xff] %vm2541, %v2516
      %2606 = vst.msk [vmem:[%s2597 + $0x61] sm:$0xff] %vm2541, %v2517
      %2607 = vst.msk [vmem:[%s2597 + $0x69] sm:$0xff] %vm2541, %v2518
      %2608 = vst.msk [vmem:[%s2597 + $0x79] sm:$0xff] %vm2541, %v2519
      %2609 = vst.msk [vmem:[%s2597 + $0x81] sm:$0xff] %vm2541, %v2520
      %2610 = vst.msk [vmem:[%s2597 + $0x91] sm:$0xff] %vm2541, %v2521
      %2611 = vst.msk [vmem:[%s2597 + $0x99] sm:$0xff] %vm2541, %v2522
      %2612 = vst.msk [vmem:[%s2597 + $0xa9] sm:$0xff] %vm2541, %v2523
      %2613 = vst.msk [vmem:[%s2597 + $0xb1] sm:$0xff] %vm2541, %v2524
      %2614 = vst.msk [vmem:[%s2597 + $0xc1] sm:$0xff] %vm2541, %v2525
      %2615 = vst.msk [vmem:[%s2597 + $0xc9] sm:$0xff] %vm2541, %v2526
      %2616 = vst.msk [vmem:[%s2597 + $0xd9] sm:$0xff] %vm2541, %v2527
      %2617 = vst.msk [vmem:[%s2597 + $0xe1] sm:$0xff] %vm2541, %v2528
      %2618 = vst.msk [vmem:[%s2597 + $0xf1] sm:$0xff] %vm2541, %v2529
      %2619 = vst.msk [vmem:[%s2597 + $0xf9] sm:$0xff] %vm2541, %v2530
      %2620 = vst.msk [vmem:[%s2597 + $0x109] sm:$0xff] %vm2541, %v2531
      %2621 = vst.msk [vmem:[%s2597 + $0x111] sm:$0xff] %vm2541, %v2532
      %2622 = vst.msk [vmem:[%s2597 + $0x121] sm:$0xff] %vm2541, %v2533
      %2623 = vst.msk [vmem:[%s2597 + $0x129] sm:$0xff] %vm2541, %v2534
      %2624 = vst.msk [vmem:[%s2597 + $0x139] sm:$0xff] %vm2541, %v2535
      %2625 = vst.msk [vmem:[%s2597 + $0x141] sm:$0xff] %vm2541, %v2536
      %2626 = vst.msk [vmem:[%s2597 + $0x151] sm:$0xff] %vm2541, %v2537
      %2627 = vst.msk [vmem:[%s2597 + $0x159] sm:$0xff] %vm2541, %v2538
      %2628 = vst.msk [vmem:[%s2597 + $0x169] sm:$0xff] %vm2541, %v2539
      %2629 = vst.msk [vmem:[%s2597 + $0x171] sm:$0xff] %vm2541, %v2540
      %v2630 = vld [vmem:[#allocation3] sm:$0xff]
      %v2631 = vld [vmem:[#allocation3 + $0x8] sm:$0xff]
      %v2632 = vld [vmem:[#allocation3 + $0x18] sm:$0xff]
      %v2633 = vld [vmem:[#allocation3 + $0x20] sm:$0xff]
      %v2634 = vld [vmem:[#allocation3 + $0x30] sm:$0xff]
      %v2635 = vld [vmem:[#allocation3 + $0x38] sm:$0xff]
      %v2636 = vld [vmem:[#allocation3 + $0x48] sm:$0xff]
      %v2637 = vld [vmem:[#allocation3 + $0x50] sm:$0xff]
      %v2638 = vld [vmem:[#allocation3 + $0x60] sm:$0xff]
      %v2639 = vld [vmem:[#allocation3 + $0x68] sm:$0xff]
      %v2640 = vld [vmem:[#allocation3 + $0x78] sm:$0xff]
      %v2641 = vld [vmem:[#allocation3 + $0x80] sm:$0xff]
      %v2642 = vld [vmem:[#allocation3 + $0x90] sm:$0xff]
      %v2643 = vld [vmem:[#allocation3 + $0x98] sm:$0xff]
      %v2644 = vld [vmem:[#allocation3 + $0xa8] sm:$0xff]
      %v2645 = vld [vmem:[#allocation3 + $0xb0] sm:$0xff]
      %v2646 = vld [vmem:[#allocation3 + $0xc0] sm:$0xff]
      %v2647 = vld [vmem:[#allocation3 + $0xc8] sm:$0xff]
      %v2648 = vld [vmem:[#allocation3 + $0xd8] sm:$0xff]
      %v2649 = vld [vmem:[#allocation3 + $0xe0] sm:$0xff]
      %v2650 = vld [vmem:[#allocation3 + $0xf0] sm:$0xff]
      %v2651 = vld [vmem:[#allocation3 + $0xf8] sm:$0xff]
      %v2652 = vld [vmem:[#allocation3 + $0x108] sm:$0xff]
      %v2653 = vld [vmem:[#allocation3 + $0x110] sm:$0xff]
      %v2654 = vld [vmem:[#allocation3 + $0x120] sm:$0xff]
      %v2655 = vld [vmem:[#allocation3 + $0x128] sm:$0xff]
      %v2656 = vld [vmem:[#allocation3 + $0x138] sm:$0xff]
      %v2657 = vld [vmem:[#allocation3 + $0x140] sm:$0xff]
      %v2658 = vld [vmem:[#allocation3 + $0x150] sm:$0xff]
      %v2659 = vld [vmem:[#allocation3 + $0x158] sm:$0xff]
      %v2660 = vld [vmem:[#allocation3 + $0x168] sm:$0xff]
      %v2661 = vld [vmem:[#allocation3 + $0x170] sm:$0xff]
      %2662 = vst.msk [vmem:[#allocation5] sm:$0xff] %vm2541, %v2630
      %2663 = vst.msk [vmem:[#allocation5 + $0x8] sm:$0xff] %vm2541, %v2631
      %2664 = vst.msk [vmem:[#allocation5 + $0x10] sm:$0xff] %vm2541, %v2632
      %2665 = vst.msk [vmem:[#allocation5 + $0x18] sm:$0xff] %vm2541, %v2633
      %2666 = vst.msk [vmem:[#allocation5 + $0x20] sm:$0xff] %vm2541, %v2634
      %2667 = vst.msk [vmem:[#allocation5 + $0x28] sm:$0xff] %vm2541, %v2635
      %2668 = vst.msk [vmem:[#allocation5 + $0x30] sm:$0xff] %vm2541, %v2636
      %2669 = vst.msk [vmem:[#allocation5 + $0x38] sm:$0xff] %vm2541, %v2637
      %2670 = vst.msk [vmem:[#allocation5 + $0x40] sm:$0xff] %vm2541, %v2638
      %2671 = vst.msk [vmem:[#allocation5 + $0x48] sm:$0xff] %vm2541, %v2639
      %2672 = vst.msk [vmem:[#allocation5 + $0x50] sm:$0xff] %vm2541, %v2640
      %2673 = vst.msk [vmem:[#allocation5 + $0x58] sm:$0xff] %vm2541, %v2641
      %2674 = vst.msk [vmem:[#allocation5 + $0x60] sm:$0xff] %vm2541, %v2642
      %2675 = vst.msk [vmem:[#allocation5 + $0x68] sm:$0xff] %vm2541, %v2643
      %2676 = vst.msk [vmem:[#allocation5 + $0x70] sm:$0xff] %vm2541, %v2644
      %2677 = vst.msk [vmem:[#allocation5 + $0x78] sm:$0xff] %vm2541, %v2645
      %2678 = vst.msk [vmem:[#allocation5 + $0x80] sm:$0xff] %vm2541, %v2646
      %2679 = vst.msk [vmem:[#allocation5 + $0x88] sm:$0xff] %vm2541, %v2647
      %2680 = vst.msk [vmem:[#allocation5 + $0x90] sm:$0xff] %vm2541, %v2648
      %2681 = vst.msk [vmem:[#allocation5 + $0x98] sm:$0xff] %vm2541, %v2649
      %2682 = vst.msk [vmem:[#allocation5 + $0xa0] sm:$0xff] %vm2541, %v2650
      %2683 = vst.msk [vmem:[#allocation5 + $0xa8] sm:$0xff] %vm2541, %v2651
      %2684 = vst.msk [vmem:[#allocation5 + $0xb0] sm:$0xff] %vm2541, %v2652
      %2685 = vst.msk [vmem:[#allocation5 + $0xb8] sm:$0xff] %vm2541, %v2653
      %2686 = vst.msk [vmem:[#allocation5 + $0xc0] sm:$0xff] %vm2541, %v2654
      %2687 = vst.msk [vmem:[#allocation5 + $0xc8] sm:$0xff] %vm2541, %v2655
      %2688 = vst.msk [vmem:[#allocation5 + $0xd0] sm:$0xff] %vm2541, %v2656
      %2689 = vst.msk [vmem:[#allocation5 + $0xd8] sm:$0xff] %vm2541, %v2657
      %2690 = vst.msk [vmem:[#allocation5 + $0xe0] sm:$0xff] %vm2541, %v2658
      %2691 = vst.msk [vmem:[#allocation5 + $0xe8] sm:$0xff] %vm2541, %v2659
      %2692 = vst.msk [vmem:[#allocation5 + $0xf0] sm:$0xff] %vm2541, %v2660
      %2693 = vst.msk [vmem:[#allocation5 + $0xf8] sm:$0xff] %vm2541, %v2661
      %v2694 = vld [vmem:[#allocation3 + $0x1] sm:$0xff]
      %v2695 = vld [vmem:[#allocation3 + $0x9] sm:$0xff]
      %v2696 = vld [vmem:[#allocation3 + $0x19] sm:$0xff]
      %v2697 = vld [vmem:[#allocation3 + $0x21] sm:$0xff]
      %v2698 = vld [vmem:[#allocation3 + $0x31] sm:$0xff]
      %v2699 = vld [vmem:[#allocation3 + $0x39] sm:$0xff]
      %v2700 = vld [vmem:[#allocation3 + $0x49] sm:$0xff]
      %v2701 = vld [vmem:[#allocation3 + $0x51] sm:$0xff]
      %v2702 = vld [vmem:[#allocation3 + $0x61] sm:$0xff]
      %v2703 = vld [vmem:[#allocation3 + $0x69] sm:$0xff]
      %v2704 = vld [vmem:[#allocation3 + $0x79] sm:$0xff]
      %v2705 = vld [vmem:[#allocation3 + $0x81] sm:$0xff]
      %v2706 = vld [vmem:[#allocation3 + $0x91] sm:$0xff]
      %v2707 = vld [vmem:[#allocation3 + $0x99] sm:$0xff]
      %v2708 = vld [vmem:[#allocation3 + $0xa9] sm:$0xff]
      %v2709 = vld [vmem:[#allocation3 + $0xb1] sm:$0xff]
      %v2710 = vld [vmem:[#allocation3 + $0xc1] sm:$0xff]
      %v2711 = vld [vmem:[#allocation3 + $0xc9] sm:$0xff]
      %v2712 = vld [vmem:[#allocation3 + $0xd9] sm:$0xff]
      %v2713 = vld [vmem:[#allocation3 + $0xe1] sm:$0xff]
      %v2714 = vld [vmem:[#allocation3 + $0xf1] sm:$0xff]
      %v2715 = vld [vmem:[#allocation3 + $0xf9] sm:$0xff]
      %v2716 = vld [vmem:[#allocation3 + $0x109] sm:$0xff]
      %v2717 = vld [vmem:[#allocation3 + $0x111] sm:$0xff]
      %v2718 = vld [vmem:[#allocation3 + $0x121] sm:$0xff]
      %v2719 = vld [vmem:[#allocation3 + $0x129] sm:$0xff]
      %v2720 = vld [vmem:[#allocation3 + $0x139] sm:$0xff]
      %v2721 = vld [vmem:[#allocation3 + $0x141] sm:$0xff]
      %v2722 = vld [vmem:[#allocation3 + $0x151] sm:$0xff]
      %v2723 = vld [vmem:[#allocation3 + $0x159] sm:$0xff]
      %v2724 = vld [vmem:[#allocation3 + $0x169] sm:$0xff]
      %v2725 = vld [vmem:[#allocation3 + $0x171] sm:$0xff]
      %2758 = vrot.lane.b32.xlu0 %v2694, 8
      %v2759 = vpop.permute.xlu0 %2758
      %2760 = vrot.lane.b32.xlu0 %v2695, 8
      %v2761 = vpop.permute.xlu0 %2760
      %2762 = vrot.lane.b32.xlu0 %v2696, 8
      %v2763 = vpop.permute.xlu0 %2762
      %2764 = vrot.lane.b32.xlu0 %v2697, 8
      %v2765 = vpop.permute.xlu0 %2764
      %2766 = vrot.lane.b32.xlu0 %v2698, 8
      %v2767 = vpop.permute.xlu0 %2766
      %2768 = vrot.lane.b32.xlu0 %v2699, 8
      %v2769 = vpop.permute.xlu0 %2768
      %2770 = vrot.lane.b32.xlu0 %v2700, 8
      %v2771 = vpop.permute.xlu0 %2770
      %2772 = vrot.lane.b32.xlu0 %v2701, 8
      %v2773 = vpop.permute.xlu0 %2772
      %2774 = vrot.lane.b32.xlu0 %v2702, 8
      %v2775 = vpop.permute.xlu0 %2774
      %2776 = vrot.lane.b32.xlu0 %v2703, 8
      %v2777 = vpop.permute.xlu0 %2776
      %2778 = vrot.lane.b32.xlu0 %v2704, 8
      %v2779 = vpop.permute.xlu0 %2778
      %2780 = vrot.lane.b32.xlu0 %v2705, 8
      %v2781 = vpop.permute.xlu0 %2780
      %2782 = vrot.lane.b32.xlu0 %v2706, 8
      %v2783 = vpop.permute.xlu0 %2782
      %2784 = vrot.lane.b32.xlu0 %v2707, 8
      %v2785 = vpop.permute.xlu0 %2784
      %2786 = vrot.lane.b32.xlu0 %v2708, 8
      %v2787 = vpop.permute.xlu0 %2786
      %2788 = vrot.lane.b32.xlu0 %v2709, 8
      %v2789 = vpop.permute.xlu0 %2788
      %2790 = vrot.lane.b32.xlu0 %v2710, 8
      %v2791 = vpop.permute.xlu0 %2790
      %2792 = vrot.lane.b32.xlu0 %v2711, 8
      %v2793 = vpop.permute.xlu0 %2792
      %2794 = vrot.lane.b32.xlu0 %v2712, 8
      %v2795 = vpop.permute.xlu0 %2794
      %2796 = vrot.lane.b32.xlu0 %v2713, 8
      %v2797 = vpop.permute.xlu0 %2796
      %2798 = vrot.lane.b32.xlu0 %v2714, 8
      %v2799 = vpop.permute.xlu0 %2798
      %2800 = vrot.lane.b32.xlu0 %v2715, 8
      %v2801 = vpop.permute.xlu0 %2800
      %2802 = vrot.lane.b32.xlu0 %v2716, 8
      %v2803 = vpop.permute.xlu0 %2802
      %2804 = vrot.lane.b32.xlu0 %v2717, 8
      %v2805 = vpop.permute.xlu0 %2804
      %2806 = vrot.lane.b32.xlu0 %v2718, 8
      %v2807 = vpop.permute.xlu0 %2806
      %2808 = vrot.lane.b32.xlu0 %v2719, 8
      %v2809 = vpop.permute.xlu0 %2808
      %2810 = vrot.lane.b32.xlu0 %v2720, 8
      %v2811 = vpop.permute.xlu0 %2810
      %2812 = vrot.lane.b32.xlu0 %v2721, 8
      %v2813 = vpop.permute.xlu0 %2812
      %2814 = vrot.lane.b32.xlu0 %v2722, 8
      %v2815 = vpop.permute.xlu0 %2814
      %2816 = vrot.lane.b32.xlu0 %v2723, 8
      %v2817 = vpop.permute.xlu0 %2816
      %2818 = vrot.lane.b32.xlu0 %v2724, 8
      %v2819 = vpop.permute.xlu0 %2818
      %2820 = vrot.lane.b32.xlu0 %v2725, 8
      %v2821 = vpop.permute.xlu0 %2820
      %vm2854 = vcmask 130112
      %2855 = vst.msk [vmem:[#allocation5] sm:$0xff] %vm2854, %v2759
      %2856 = vst.msk [vmem:[#allocation5 + $0x8] sm:$0xff] %vm2854, %v2761
      %2857 = vst.msk [vmem:[#allocation5 + $0x10] sm:$0xff] %vm2854, %v2763
      %2858 = vst.msk [vmem:[#allocation5 + $0x18] sm:$0xff] %vm2854, %v2765
      %2859 = vst.msk [vmem:[#allocation5 + $0x20] sm:$0xff] %vm2854, %v2767
      %2860 = vst.msk [vmem:[#allocation5 + $0x28] sm:$0xff] %vm2854, %v2769
      %2861 = vst.msk [vmem:[#allocation5 + $0x30] sm:$0xff] %vm2854, %v2771
      %2862 = vst.msk [vmem:[#allocation5 + $0x38] sm:$0xff] %vm2854, %v2773
      %2863 = vst.msk [vmem:[#allocation5 + $0x40] sm:$0xff] %vm2854, %v2775
      %2864 = vst.msk [vmem:[#allocation5 + $0x48] sm:$0xff] %vm2854, %v2777
      %2865 = vst.msk [vmem:[#allocation5 + $0x50] sm:$0xff] %vm2854, %v2779
      %2866 = vst.msk [vmem:[#allocation5 + $0x58] sm:$0xff] %vm2854, %v2781
      %2867 = vst.msk [vmem:[#allocation5 + $0x60] sm:$0xff] %vm2854, %v2783
      %2868 = vst.msk [vmem:[#allocation5 + $0x68] sm:$0xff] %vm2854, %v2785
      %2869 = vst.msk [vmem:[#allocation5 + $0x70] sm:$0xff] %vm2854, %v2787
      %2870 = vst.msk [vmem:[#allocation5 + $0x78] sm:$0xff] %vm2854, %v2789
      %2871 = vst.msk [vmem:[#allocation5 + $0x80] sm:$0xff] %vm2854, %v2791
      %2872 = vst.msk [vmem:[#allocation5 + $0x88] sm:$0xff] %vm2854, %v2793
      %2873 = vst.msk [vmem:[#allocation5 + $0x90] sm:$0xff] %vm2854, %v2795
      %2874 = vst.msk [vmem:[#allocation5 + $0x98] sm:$0xff] %vm2854, %v2797
      %2875 = vst.msk [vmem:[#allocation5 + $0xa0] sm:$0xff] %vm2854, %v2799
      %2876 = vst.msk [vmem:[#allocation5 + $0xa8] sm:$0xff] %vm2854, %v2801
      %2877 = vst.msk [vmem:[#allocation5 + $0xb0] sm:$0xff] %vm2854, %v2803
      %2878 = vst.msk [vmem:[#allocation5 + $0xb8] sm:$0xff] %vm2854, %v2805
      %2879 = vst.msk [vmem:[#allocation5 + $0xc0] sm:$0xff] %vm2854, %v2807
      %2880 = vst.msk [vmem:[#allocation5 + $0xc8] sm:$0xff] %vm2854, %v2809
      %2881 = vst.msk [vmem:[#allocation5 + $0xd0] sm:$0xff] %vm2854, %v2811
      %2882 = vst.msk [vmem:[#allocation5 + $0xd8] sm:$0xff] %vm2854, %v2813
      %2883 = vst.msk [vmem:[#allocation5 + $0xe0] sm:$0xff] %vm2854, %v2815
      %2884 = vst.msk [vmem:[#allocation5 + $0xe8] sm:$0xff] %vm2854, %v2817
      %2885 = vst.msk [vmem:[#allocation5 + $0xf0] sm:$0xff] %vm2854, %v2819
      %2886 = vst.msk [vmem:[#allocation5 + $0xf8] sm:$0xff] %vm2854, %v2821
      %v2887 = vld [vmem:[#allocation3 + $0x2] sm:$0xff]
      %v2888 = vld [vmem:[#allocation3 + $0xa] sm:$0xff]
      %v2889 = vld [vmem:[#allocation3 + $0x1a] sm:$0xff]
      %v2890 = vld [vmem:[#allocation3 + $0x22] sm:$0xff]
      %v2891 = vld [vmem:[#allocation3 + $0x32] sm:$0xff]
      %v2892 = vld [vmem:[#allocation3 + $0x3a] sm:$0xff]
      %v2893 = vld [vmem:[#allocation3 + $0x4a] sm:$0xff]
      %v2894 = vld [vmem:[#allocation3 + $0x52] sm:$0xff]
      %v2895 = vld [vmem:[#allocation3 + $0x62] sm:$0xff]
      %v2896 = vld [vmem:[#allocation3 + $0x6a] sm:$0xff]
      %v2897 = vld [vmem:[#allocation3 + $0x7a] sm:$0xff]
      %v2898 = vld [vmem:[#allocation3 + $0x82] sm:$0xff]
      %v2899 = vld [vmem:[#allocation3 + $0x92] sm:$0xff]
      %v2900 = vld [vmem:[#allocation3 + $0x9a] sm:$0xff]
      %v2901 = vld [vmem:[#allocation3 + $0xaa] sm:$0xff]
      %v2902 = vld [vmem:[#allocation3 + $0xb2] sm:$0xff]
      %v2903 = vld [vmem:[#allocation3 + $0xc2] sm:$0xff]
      %v2904 = vld [vmem:[#allocation3 + $0xca] sm:$0xff]
      %v2905 = vld [vmem:[#allocation3 + $0xda] sm:$0xff]
      %v2906 = vld [vmem:[#allocation3 + $0xe2] sm:$0xff]
      %v2907 = vld [vmem:[#allocation3 + $0xf2] sm:$0xff]
      %v2908 = vld [vmem:[#allocation3 + $0xfa] sm:$0xff]
      %v2909 = vld [vmem:[#allocation3 + $0x10a] sm:$0xff]
      %v2910 = vld [vmem:[#allocation3 + $0x112] sm:$0xff]
      %v2911 = vld [vmem:[#allocation3 + $0x122] sm:$0xff]
      %v2912 = vld [vmem:[#allocation3 + $0x12a] sm:$0xff]
      %v2913 = vld [vmem:[#allocation3 + $0x13a] sm:$0xff]
      %v2914 = vld [vmem:[#allocation3 + $0x142] sm:$0xff]
      %v2915 = vld [vmem:[#allocation3 + $0x152] sm:$0xff]
      %v2916 = vld [vmem:[#allocation3 + $0x15a] sm:$0xff]
      %v2917 = vld [vmem:[#allocation3 + $0x16a] sm:$0xff]
      %v2918 = vld [vmem:[#allocation3 + $0x172] sm:$0xff]
      %2951 = vrot.lane.b32.xlu0 %v2887, 16
      %v2952 = vpop.permute.xlu0 %2951
      %2953 = vrot.lane.b32.xlu0 %v2888, 16
      %v2954 = vpop.permute.xlu0 %2953
      %2955 = vrot.lane.b32.xlu0 %v2889, 16
      %v2956 = vpop.permute.xlu0 %2955
      %2957 = vrot.lane.b32.xlu0 %v2890, 16
      %v2958 = vpop.permute.xlu0 %2957
      %2959 = vrot.lane.b32.xlu0 %v2891, 16
      %v2960 = vpop.permute.xlu0 %2959
      %2961 = vrot.lane.b32.xlu0 %v2892, 16
      %v2962 = vpop.permute.xlu0 %2961
      %2963 = vrot.lane.b32.xlu0 %v2893, 16
      %v2964 = vpop.permute.xlu0 %2963
      %2965 = vrot.lane.b32.xlu0 %v2894, 16
      %v2966 = vpop.permute.xlu0 %2965
      %2967 = vrot.lane.b32.xlu0 %v2895, 16
      %v2968 = vpop.permute.xlu0 %2967
      %2969 = vrot.lane.b32.xlu0 %v2896, 16
      %v2970 = vpop.permute.xlu0 %2969
      %2971 = vrot.lane.b32.xlu0 %v2897, 16
      %v2972 = vpop.permute.xlu0 %2971
      %2973 = vrot.lane.b32.xlu0 %v2898, 16
      %v2974 = vpop.permute.xlu0 %2973
      %2975 = vrot.lane.b32.xlu0 %v2899, 16
      %v2976 = vpop.permute.xlu0 %2975
      %2977 = vrot.lane.b32.xlu0 %v2900, 16
      %v2978 = vpop.permute.xlu0 %2977
      %2979 = vrot.lane.b32.xlu0 %v2901, 16
      %v2980 = vpop.permute.xlu0 %2979
      %2981 = vrot.lane.b32.xlu0 %v2902, 16
      %v2982 = vpop.permute.xlu0 %2981
      %2983 = vrot.lane.b32.xlu0 %v2903, 16
      %v2984 = vpop.permute.xlu0 %2983
      %2985 = vrot.lane.b32.xlu0 %v2904, 16
      %v2986 = vpop.permute.xlu0 %2985
      %2987 = vrot.lane.b32.xlu0 %v2905, 16
      %v2988 = vpop.permute.xlu0 %2987
      %2989 = vrot.lane.b32.xlu0 %v2906, 16
      %v2990 = vpop.permute.xlu0 %2989
      %2991 = vrot.lane.b32.xlu0 %v2907, 16
      %v2992 = vpop.permute.xlu0 %2991
      %2993 = vrot.lane.b32.xlu0 %v2908, 16
      %v2994 = vpop.permute.xlu0 %2993
      %2995 = vrot.lane.b32.xlu0 %v2909, 16
      %v2996 = vpop.permute.xlu0 %2995
      %2997 = vrot.lane.b32.xlu0 %v2910, 16
      %v2998 = vpop.permute.xlu0 %2997
      %2999 = vrot.lane.b32.xlu0 %v2911, 16
      %v3000 = vpop.permute.xlu0 %2999
      %3001 = vrot.lane.b32.xlu0 %v2912, 16
      %v3002 = vpop.permute.xlu0 %3001
      %3003 = vrot.lane.b32.xlu0 %v2913, 16
      %v3004 = vpop.permute.xlu0 %3003
      %3005 = vrot.lane.b32.xlu0 %v2914, 16
      %v3006 = vpop.permute.xlu0 %3005
      %3007 = vrot.lane.b32.xlu0 %v2915, 16
      %v3008 = vpop.permute.xlu0 %3007
      %3009 = vrot.lane.b32.xlu0 %v2916, 16
      %v3010 = vpop.permute.xlu0 %3009
      %3011 = vrot.lane.b32.xlu0 %v2917, 16
      %v3012 = vpop.permute.xlu0 %3011
      %3013 = vrot.lane.b32.xlu0 %v2918, 16
      %v3014 = vpop.permute.xlu0 %3013
      %vm3047 = vcmask 195712
      %3048 = vst.msk [vmem:[#allocation5] sm:$0xff] %vm3047, %v2952
      %3049 = vst.msk [vmem:[#allocation5 + $0x8] sm:$0xff] %vm3047, %v2954
      %3050 = vst.msk [vmem:[#allocation5 + $0x10] sm:$0xff] %vm3047, %v2956
      %3051 = vst.msk [vmem:[#allocation5 + $0x18] sm:$0xff] %vm3047, %v2958
      %3052 = vst.msk [vmem:[#allocation5 + $0x20] sm:$0xff] %vm3047, %v2960
      %3053 = vst.msk [vmem:[#allocation5 + $0x28] sm:$0xff] %vm3047, %v2962
      %3054 = vst.msk [vmem:[#allocation5 + $0x30] sm:$0xff] %vm3047, %v2964
      %3055 = vst.msk [vmem:[#allocation5 + $0x38] sm:$0xff] %vm3047, %v2966
      %3056 = vst.msk [vmem:[#allocation5 + $0x40] sm:$0xff] %vm3047, %v2968
      %3057 = vst.msk [vmem:[#allocation5 + $0x48] sm:$0xff] %vm3047, %v2970
      %3058 = vst.msk [vmem:[#allocation5 + $0x50] sm:$0xff] %vm3047, %v2972
      %3059 = vst.msk [vmem:[#allocation5 + $0x58] sm:$0xff] %vm3047, %v2974
      %3060 = vst.msk [vmem:[#allocation5 + $0x60] sm:$0xff] %vm3047, %v2976
      %3061 = vst.msk [vmem:[#allocation5 + $0x68] sm:$0xff] %vm3047, %v2978
      %3062 = vst.msk [vmem:[#allocation5 + $0x70] sm:$0xff] %vm3047, %v2980
      %3063 = vst.msk [vmem:[#allocation5 + $0x78] sm:$0xff] %vm3047, %v2982
      %3064 = vst.msk [vmem:[#allocation5 + $0x80] sm:$0xff] %vm3047, %v2984
      %3065 = vst.msk [vmem:[#allocation5 + $0x88] sm:$0xff] %vm3047, %v2986
      %3066 = vst.msk [vmem:[#allocation5 + $0x90] sm:$0xff] %vm3047, %v2988
      %3067 = vst.msk [vmem:[#allocation5 + $0x98] sm:$0xff] %vm3047, %v2990
      %3068 = vst.msk [vmem:[#allocation5 + $0xa0] sm:$0xff] %vm3047, %v2992
      %3069 = vst.msk [vmem:[#allocation5 + $0xa8] sm:$0xff] %vm3047, %v2994
      %3070 = vst.msk [vmem:[#allocation5 + $0xb0] sm:$0xff] %vm3047, %v2996
      %3071 = vst.msk [vmem:[#allocation5 + $0xb8] sm:$0xff] %vm3047, %v2998
      %3072 = vst.msk [vmem:[#allocation5 + $0xc0] sm:$0xff] %vm3047, %v3000
      %3073 = vst.msk [vmem:[#allocation5 + $0xc8] sm:$0xff] %vm3047, %v3002
      %3074 = vst.msk [vmem:[#allocation5 + $0xd0] sm:$0xff] %vm3047, %v3004
      %3075 = vst.msk [vmem:[#allocation5 + $0xd8] sm:$0xff] %vm3047, %v3006
      %3076 = vst.msk [vmem:[#allocation5 + $0xe0] sm:$0xff] %vm3047, %v3008
      %3077 = vst.msk [vmem:[#allocation5 + $0xe8] sm:$0xff] %vm3047, %v3010
      %3078 = vst.msk [vmem:[#allocation5 + $0xf0] sm:$0xff] %vm3047, %v3012
      %3079 = vst.msk [vmem:[#allocation5 + $0xf8] sm:$0xff] %vm3047, %v3014
      %v3080 = vld [vmem:[%s2597] sm:$0xff]
      %v3081 = vld [vmem:[%s2597 + $0x8] sm:$0xff]
      %v3082 = vld [vmem:[%s2597 + $0x18] sm:$0xff]
      %v3083 = vld [vmem:[%s2597 + $0x20] sm:$0xff]
      %v3084 = vld [vmem:[%s2597 + $0x30] sm:$0xff]
      %v3085 = vld [vmem:[%s2597 + $0x38] sm:$0xff]
      %v3086 = vld [vmem:[%s2597 + $0x48] sm:$0xff]
      %v3087 = vld [vmem:[%s2597 + $0x50] sm:$0xff]
      %v3088 = vld [vmem:[%s2597 + $0x60] sm:$0xff]
      %v3089 = vld [vmem:[%s2597 + $0x68] sm:$0xff]
      %v3090 = vld [vmem:[%s2597 + $0x78] sm:$0xff]
      %v3091 = vld [vmem:[%s2597 + $0x80] sm:$0xff]
      %v3092 = vld [vmem:[%s2597 + $0x90] sm:$0xff]
      %v3093 = vld [vmem:[%s2597 + $0x98] sm:$0xff]
      %v3094 = vld [vmem:[%s2597 + $0xa8] sm:$0xff]
      %v3095 = vld [vmem:[%s2597 + $0xb0] sm:$0xff]
      %v3096 = vld [vmem:[%s2597 + $0xc0] sm:$0xff]
      %v3097 = vld [vmem:[%s2597 + $0xc8] sm:$0xff]
      %v3098 = vld [vmem:[%s2597 + $0xd8] sm:$0xff]
      %v3099 = vld [vmem:[%s2597 + $0xe0] sm:$0xff]
      %v3100 = vld [vmem:[%s2597 + $0xf0] sm:$0xff]
      %v3101 = vld [vmem:[%s2597 + $0xf8] sm:$0xff]
      %v3102 = vld [vmem:[%s2597 + $0x108] sm:$0xff]
      %v3103 = vld [vmem:[%s2597 + $0x110] sm:$0xff]
      %v3104 = vld [vmem:[%s2597 + $0x120] sm:$0xff]
      %v3105 = vld [vmem:[%s2597 + $0x128] sm:$0xff]
      %v3106 = vld [vmem:[%s2597 + $0x138] sm:$0xff]
      %v3107 = vld [vmem:[%s2597 + $0x140] sm:$0xff]
      %v3108 = vld [vmem:[%s2597 + $0x150] sm:$0xff]
      %v3109 = vld [vmem:[%s2597 + $0x158] sm:$0xff]
      %v3110 = vld [vmem:[%s2597 + $0x168] sm:$0xff]
      %v3111 = vld [vmem:[%s2597 + $0x170] sm:$0xff]
      %3144 = vrot.lane.b32.xlu0 %v3080, 24
      %v3145 = vpop.permute.xlu0 %3144
      %3146 = vrot.lane.b32.xlu0 %v3081, 24
      %v3147 = vpop.permute.xlu0 %3146
      %3148 = vrot.lane.b32.xlu0 %v3082, 24
      %v3149 = vpop.permute.xlu0 %3148
      %3150 = vrot.lane.b32.xlu0 %v3083, 24
      %v3151 = vpop.permute.xlu0 %3150
      %3152 = vrot.lane.b32.xlu0 %v3084, 24
      %v3153 = vpop.permute.xlu0 %3152
      %3154 = vrot.lane.b32.xlu0 %v3085, 24
      %v3155 = vpop.permute.xlu0 %3154
      %3156 = vrot.lane.b32.xlu0 %v3086, 24
      %v3157 = vpop.permute.xlu0 %3156
      %3158 = vrot.lane.b32.xlu0 %v3087, 24
      %v3159 = vpop.permute.xlu0 %3158
      %3160 = vrot.lane.b32.xlu0 %v3088, 24
      %v3161 = vpop.permute.xlu0 %3160
      %3162 = vrot.lane.b32.xlu0 %v3089, 24
      %v3163 = vpop.permute.xlu0 %3162
      %3164 = vrot.lane.b32.xlu0 %v3090, 24
      %v3165 = vpop.permute.xlu0 %3164
      %3166 = vrot.lane.b32.xlu0 %v3091, 24
      %v3167 = vpop.permute.xlu0 %3166
      %3168 = vrot.lane.b32.xlu0 %v3092, 24
      %v3169 = vpop.permute.xlu0 %3168
      %3170 = vrot.lane.b32.xlu0 %v3093, 24
      %v3171 = vpop.permute.xlu0 %3170
      %3172 = vrot.lane.b32.xlu0 %v3094, 24
      %v3173 = vpop.permute.xlu0 %3172
      %3174 = vrot.lane.b32.xlu0 %v3095, 24
      %v3175 = vpop.permute.xlu0 %3174
      %3176 = vrot.lane.b32.xlu0 %v3096, 24
      %v3177 = vpop.permute.xlu0 %3176
      %3178 = vrot.lane.b32.xlu0 %v3097, 24
      %v3179 = vpop.permute.xlu0 %3178
      %3180 = vrot.lane.b32.xlu0 %v3098, 24
      %v3181 = vpop.permute.xlu0 %3180
      %3182 = vrot.lane.b32.xlu0 %v3099, 24
      %v3183 = vpop.permute.xlu0 %3182
      %3184 = vrot.lane.b32.xlu0 %v3100, 24
      %v3185 = vpop.permute.xlu0 %3184
      %3186 = vrot.lane.b32.xlu0 %v3101, 24
      %v3187 = vpop.permute.xlu0 %3186
      %3188 = vrot.lane.b32.xlu0 %v3102, 24
      %v3189 = vpop.permute.xlu0 %3188
      %3190 = vrot.lane.b32.xlu0 %v3103, 24
      %v3191 = vpop.permute.xlu0 %3190
      %3192 = vrot.lane.b32.xlu0 %v3104, 24
      %v3193 = vpop.permute.xlu0 %3192
      %3194 = vrot.lane.b32.xlu0 %v3105, 24
      %v3195 = vpop.permute.xlu0 %3194
      %3196 = vrot.lane.b32.xlu0 %v3106, 24
      %v3197 = vpop.permute.xlu0 %3196
      %3198 = vrot.lane.b32.xlu0 %v3107, 24
      %v3199 = vpop.permute.xlu0 %3198
      %3200 = vrot.lane.b32.xlu0 %v3108, 24
      %v3201 = vpop.permute.xlu0 %3200
      %3202 = vrot.lane.b32.xlu0 %v3109, 24
      %v3203 = vpop.permute.xlu0 %3202
      %3204 = vrot.lane.b32.xlu0 %v3110, 24
      %v3205 = vpop.permute.xlu0 %3204
      %3206 = vrot.lane.b32.xlu0 %v3111, 24
      %v3207 = vpop.permute.xlu0 %3206
      %vm3240 = vcmask 261312
      %3241 = vst.msk [vmem:[#allocation5] sm:$0xff] %vm3240, %v3145
      %3242 = vst.msk [vmem:[#allocation5 + $0x8] sm:$0xff] %vm3240, %v3147
      %3243 = vst.msk [vmem:[#allocation5 + $0x10] sm:$0xff] %vm3240, %v3149
      %3244 = vst.msk [vmem:[#allocation5 + $0x18] sm:$0xff] %vm3240, %v3151
      %3245 = vst.msk [vmem:[#allocation5 + $0x20] sm:$0xff] %vm3240, %v3153
      %3246 = vst.msk [vmem:[#allocation5 + $0x28] sm:$0xff] %vm3240, %v3155
      %3247 = vst.msk [vmem:[#allocation5 + $0x30] sm:$0xff] %vm3240, %v3157
      %3248 = vst.msk [vmem:[#allocation5 + $0x38] sm:$0xff] %vm3240, %v3159
      %3249 = vst.msk [vmem:[#allocation5 + $0x40] sm:$0xff] %vm3240, %v3161
      %3250 = vst.msk [vmem:[#allocation5 + $0x48] sm:$0xff] %vm3240, %v3163
      %3251 = vst.msk [vmem:[#allocation5 + $0x50] sm:$0xff] %vm3240, %v3165
      %3252 = vst.msk [vmem:[#allocation5 + $0x58] sm:$0xff] %vm3240, %v3167
      %3253 = vst.msk [vmem:[#allocation5 + $0x60] sm:$0xff] %vm3240, %v3169
      %3254 = vst.msk [vmem:[#allocation5 + $0x68] sm:$0xff] %vm3240, %v3171
      %3255 = vst.msk [vmem:[#allocation5 + $0x70] sm:$0xff] %vm3240, %v3173
      %3256 = vst.msk [vmem:[#allocation5 + $0x78] sm:$0xff] %vm3240, %v3175
      %3257 = vst.msk [vmem:[#allocation5 + $0x80] sm:$0xff] %vm3240, %v3177
      %3258 = vst.msk [vmem:[#allocation5 + $0x88] sm:$0xff] %vm3240, %v3179
      %3259 = vst.msk [vmem:[#allocation5 + $0x90] sm:$0xff] %vm3240, %v3181
      %3260 = vst.msk [vmem:[#allocation5 + $0x98] sm:$0xff] %vm3240, %v3183
      %3261 = vst.msk [vmem:[#allocation5 + $0xa0] sm:$0xff] %vm3240, %v3185
      %3262 = vst.msk [vmem:[#allocation5 + $0xa8] sm:$0xff] %vm3240, %v3187
      %3263 = vst.msk [vmem:[#allocation5 + $0xb0] sm:$0xff] %vm3240, %v3189
      %3264 = vst.msk [vmem:[#allocation5 + $0xb8] sm:$0xff] %vm3240, %v3191
      %3265 = vst.msk [vmem:[#allocation5 + $0xc0] sm:$0xff] %vm3240, %v3193
      %3266 = vst.msk [vmem:[#allocation5 + $0xc8] sm:$0xff] %vm3240, %v3195
      %3267 = vst.msk [vmem:[#allocation5 + $0xd0] sm:$0xff] %vm3240, %v3197
      %3268 = vst.msk [vmem:[#allocation5 + $0xd8] sm:$0xff] %vm3240, %v3199
      %3269 = vst.msk [vmem:[#allocation5 + $0xe0] sm:$0xff] %vm3240, %v3201
      %3270 = vst.msk [vmem:[#allocation5 + $0xe8] sm:$0xff] %vm3240, %v3203
      %3271 = vst.msk [vmem:[#allocation5 + $0xf0] sm:$0xff] %vm3240, %v3205
      %3272 = vst.msk [vmem:[#allocation5 + $0xf8] sm:$0xff] %vm3240, %v3207
      %v3273 = vld [vmem:[%s2597 + $0x1] sm:$0xff]
      %v3274 = vld [vmem:[%s2597 + $0x9] sm:$0xff]
      %v3275 = vld [vmem:[%s2597 + $0x19] sm:$0xff]
      %v3276 = vld [vmem:[%s2597 + $0x21] sm:$0xff]
      %v3277 = vld [vmem:[%s2597 + $0x31] sm:$0xff]
      %v3278 = vld [vmem:[%s2597 + $0x39] sm:$0xff]
      %v3279 = vld [vmem:[%s2597 + $0x49] sm:$0xff]
      %v3280 = vld [vmem:[%s2597 + $0x51] sm:$0xff]
      %v3281 = vld [vmem:[%s2597 + $0x61] sm:$0xff]
      %v3282 = vld [vmem:[%s2597 + $0x69] sm:$0xff]
      %v3283 = vld [vmem:[%s2597 + $0x79] sm:$0xff]
      %v3284 = vld [vmem:[%s2597 + $0x81] sm:$0xff]
      %v3285 = vld [vmem:[%s2597 + $0x91] sm:$0xff]
      %v3286 = vld [vmem:[%s2597 + $0x99] sm:$0xff]
      %v3287 = vld [vmem:[%s2597 + $0xa9] sm:$0xff]
      %v3288 = vld [vmem:[%s2597 + $0xb1] sm:$0xff]
      %v3289 = vld [vmem:[%s2597 + $0xc1] sm:$0xff]
      %v3290 = vld [vmem:[%s2597 + $0xc9] sm:$0xff]
      %v3291 = vld [vmem:[%s2597 + $0xd9] sm:$0xff]
      %v3292 = vld [vmem:[%s2597 + $0xe1] sm:$0xff]
      %v3293 = vld [vmem:[%s2597 + $0xf1] sm:$0xff]
      %v3294 = vld [vmem:[%s2597 + $0xf9] sm:$0xff]
      %v3295 = vld [vmem:[%s2597 + $0x109] sm:$0xff]
      %v3296 = vld [vmem:[%s2597 + $0x111] sm:$0xff]
      %v3297 = vld [vmem:[%s2597 + $0x121] sm:$0xff]
      %v3298 = vld [vmem:[%s2597 + $0x129] sm:$0xff]
      %v3299 = vld [vmem:[%s2597 + $0x139] sm:$0xff]
      %v3300 = vld [vmem:[%s2597 + $0x141] sm:$0xff]
      %v3301 = vld [vmem:[%s2597 + $0x151] sm:$0xff]
      %v3302 = vld [vmem:[%s2597 + $0x159] sm:$0xff]
      %v3303 = vld [vmem:[%s2597 + $0x169] sm:$0xff]
      %v3304 = vld [vmem:[%s2597 + $0x171] sm:$0xff]
      %3337 = vrot.lane.b32.xlu0 %v3273, 32
      %v3338 = vpop.permute.xlu0 %3337
      %3339 = vrot.lane.b32.xlu0 %v3274, 32
      %v3340 = vpop.permute.xlu0 %3339
      %3341 = vrot.lane.b32.xlu0 %v3275, 32
      %v3342 = vpop.permute.xlu0 %3341
      %3343 = vrot.lane.b32.xlu0 %v3276, 32
      %v3344 = vpop.permute.xlu0 %3343
      %3345 = vrot.lane.b32.xlu0 %v3277, 32
      %v3346 = vpop.permute.xlu0 %3345
      %3347 = vrot.lane.b32.xlu0 %v3278, 32
      %v3348 = vpop.permute.xlu0 %3347
      %3349 = vrot.lane.b32.xlu0 %v3279, 32
      %v3350 = vpop.permute.xlu0 %3349
      %3351 = vrot.lane.b32.xlu0 %v3280, 32
      %v3352 = vpop.permute.xlu0 %3351
      %3353 = vrot.lane.b32.xlu0 %v3281, 32
      %v3354 = vpop.permute.xlu0 %3353
      %3355 = vrot.lane.b32.xlu0 %v3282, 32
      %v3356 = vpop.permute.xlu0 %3355
      %3357 = vrot.lane.b32.xlu0 %v3283, 32
      %v3358 = vpop.permute.xlu0 %3357
      %3359 = vrot.lane.b32.xlu0 %v3284, 32
      %v3360 = vpop.permute.xlu0 %3359
      %3361 = vrot.lane.b32.xlu0 %v3285, 32
      %v3362 = vpop.permute.xlu0 %3361
      %3363 = vrot.lane.b32.xlu0 %v3286, 32
      %v3364 = vpop.permute.xlu0 %3363
      %3365 = vrot.lane.b32.xlu0 %v3287, 32
      %v3366 = vpop.permute.xlu0 %3365
      %3367 = vrot.lane.b32.xlu0 %v3288, 32
      %v3368 = vpop.permute.xlu0 %3367
      %3369 = vrot.lane.b32.xlu0 %v3289, 32
      %v3370 = vpop.permute.xlu0 %3369
      %3371 = vrot.lane.b32.xlu0 %v3290, 32
      %v3372 = vpop.permute.xlu0 %3371
      %3373 = vrot.lane.b32.xlu0 %v3291, 32
      %v3374 = vpop.permute.xlu0 %3373
      %3375 = vrot.lane.b32.xlu0 %v3292, 32
      %v3376 = vpop.permute.xlu0 %3375
      %3377 = vrot.lane.b32.xlu0 %v3293, 32
      %v3378 = vpop.permute.xlu0 %3377
      %3379 = vrot.lane.b32.xlu0 %v3294, 32
      %v3380 = vpop.permute.xlu0 %3379
      %3381 = vrot.lane.b32.xlu0 %v3295, 32
      %v3382 = vpop.permute.xlu0 %3381
      %3383 = vrot.lane.b32.xlu0 %v3296, 32
      %v3384 = vpop.permute.xlu0 %3383
      %3385 = vrot.lane.b32.xlu0 %v3297, 32
      %v3386 = vpop.permute.xlu0 %3385
      %3387 = vrot.lane.b32.xlu0 %v3298, 32
      %v3388 = vpop.permute.xlu0 %3387
      %3389 = vrot.lane.b32.xlu0 %v3299, 32
      %v3390 = vpop.permute.xlu0 %3389
      %3391 = vrot.lane.b32.xlu0 %v3300, 32
      %v3392 = vpop.permute.xlu0 %3391
      %3393 = vrot.lane.b32.xlu0 %v3301, 32
      %v3394 = vpop.permute.xlu0 %3393
      %3395 = vrot.lane.b32.xlu0 %v3302, 32
      %v3396 = vpop.permute.xlu0 %3395
      %3397 = vrot.lane.b32.xlu0 %v3303, 32
      %v3398 = vpop.permute.xlu0 %3397
      %3399 = vrot.lane.b32.xlu0 %v3304, 32
      %v3400 = vpop.permute.xlu0 %3399
      %vm3433 = vcmask 326912
      %3434 = vst.msk [vmem:[#allocation5] sm:$0xff] %vm3433, %v3338
      %3435 = vst.msk [vmem:[#allocation5 + $0x8] sm:$0xff] %vm3433, %v3340
      %3436 = vst.msk [vmem:[#allocation5 + $0x10] sm:$0xff] %vm3433, %v3342
      %3437 = vst.msk [vmem:[#allocation5 + $0x18] sm:$0xff] %vm3433, %v3344
      %3438 = vst.msk [vmem:[#allocation5 + $0x20] sm:$0xff] %vm3433, %v3346
      %3439 = vst.msk [vmem:[#allocation5 + $0x28] sm:$0xff] %vm3433, %v3348
      %3440 = vst.msk [vmem:[#allocation5 + $0x30] sm:$0xff] %vm3433, %v3350
      %3441 = vst.msk [vmem:[#allocation5 + $0x38] sm:$0xff] %vm3433, %v3352
      %3442 = vst.msk [vmem:[#allocation5 + $0x40] sm:$0xff] %vm3433, %v3354
      %3443 = vst.msk [vmem:[#allocation5 + $0x48] sm:$0xff] %vm3433, %v3356
      %3444 = vst.msk [vmem:[#allocation5 + $0x50] sm:$0xff] %vm3433, %v3358
      %3445 = vst.msk [vmem:[#allocation5 + $0x58] sm:$0xff] %vm3433, %v3360
      %3446 = vst.msk [vmem:[#allocation5 + $0x60] sm:$0xff] %vm3433, %v3362
      %3447 = vst.msk [vmem:[#allocation5 + $0x68] sm:$0xff] %vm3433, %v3364
      %3448 = vst.msk [vmem:[#allocation5 + $0x70] sm:$0xff] %vm3433, %v3366
      %3449 = vst.msk [vmem:[#allocation5 + $0x78] sm:$0xff] %vm3433, %v3368
      %3450 = vst.msk [vmem:[#allocation5 + $0x80] sm:$0xff] %vm3433, %v3370
      %3451 = vst.msk [vmem:[#allocation5 + $0x88] sm:$0xff] %vm3433, %v3372
      %3452 = vst.msk [vmem:[#allocation5 + $0x90] sm:$0xff] %vm3433, %v3374
      %3453 = vst.msk [vmem:[#allocation5 + $0x98] sm:$0xff] %vm3433, %v3376
      %3454 = vst.msk [vmem:[#allocation5 + $0xa0] sm:$0xff] %vm3433, %v3378
      %3455 = vst.msk [vmem:[#allocation5 + $0xa8] sm:$0xff] %vm3433, %v3380
      %3456 = vst.msk [vmem:[#allocation5 + $0xb0] sm:$0xff] %vm3433, %v3382
      %3457 = vst.msk [vmem:[#allocation5 + $0xb8] sm:$0xff] %vm3433, %v3384
      %3458 = vst.msk [vmem:[#allocation5 + $0xc0] sm:$0xff] %vm3433, %v3386
      %3459 = vst.msk [vmem:[#allocation5 + $0xc8] sm:$0xff] %vm3433, %v3388
      %3460 = vst.msk [vmem:[#allocation5 + $0xd0] sm:$0xff] %vm3433, %v3390
      %3461 = vst.msk [vmem:[#allocation5 + $0xd8] sm:$0xff] %vm3433, %v3392
      %3462 = vst.msk [vmem:[#allocation5 + $0xe0] sm:$0xff] %vm3433, %v3394
      %3463 = vst.msk [vmem:[#allocation5 + $0xe8] sm:$0xff] %vm3433, %v3396
      %3464 = vst.msk [vmem:[#allocation5 + $0xf0] sm:$0xff] %vm3433, %v3398
      %3465 = vst.msk [vmem:[#allocation5 + $0xf8] sm:$0xff] %vm3433, %v3400
      %v3466 = vld [vmem:[%s2597 + $0x2] sm:$0xff]
      %v3467 = vld [vmem:[%s2597 + $0xa] sm:$0xff]
      %v3468 = vld [vmem:[%s2597 + $0x1a] sm:$0xff]
      %v3469 = vld [vmem:[%s2597 + $0x22] sm:$0xff]
      %v3470 = vld [vmem:[%s2597 + $0x32] sm:$0xff]
      %v3471 = vld [vmem:[%s2597 + $0x3a] sm:$0xff]
      %v3472 = vld [vmem:[%s2597 + $0x4a] sm:$0xff]
      %v3473 = vld [vmem:[%s2597 + $0x52] sm:$0xff]
      %v3474 = vld [vmem:[%s2597 + $0x62] sm:$0xff]
      %v3475 = vld [vmem:[%s2597 + $0x6a] sm:$0xff]
      %v3476 = vld [vmem:[%s2597 + $0x7a] sm:$0xff]
      %v3477 = vld [vmem:[%s2597 + $0x82] sm:$0xff]
      %v3478 = vld [vmem:[%s2597 + $0x92] sm:$0xff]
      %v3479 = vld [vmem:[%s2597 + $0x9a] sm:$0xff]
      %v3480 = vld [vmem:[%s2597 + $0xaa] sm:$0xff]
      %v3481 = vld [vmem:[%s2597 + $0xb2] sm:$0xff]
      %v3482 = vld [vmem:[%s2597 + $0xc2] sm:$0xff]
      %v3483 = vld [vmem:[%s2597 + $0xca] sm:$0xff]
      %v3484 = vld [vmem:[%s2597 + $0xda] sm:$0xff]
      %v3485 = vld [vmem:[%s2597 + $0xe2] sm:$0xff]
      %v3486 = vld [vmem:[%s2597 + $0xf2] sm:$0xff]
      %v3487 = vld [vmem:[%s2597 + $0xfa] sm:$0xff]
      %v3488 = vld [vmem:[%s2597 + $0x10a] sm:$0xff]
      %v3489 = vld [vmem:[%s2597 + $0x112] sm:$0xff]
      %v3490 = vld [vmem:[%s2597 + $0x122] sm:$0xff]
      %v3491 = vld [vmem:[%s2597 + $0x12a] sm:$0xff]
      %v3492 = vld [vmem:[%s2597 + $0x13a] sm:$0xff]
      %v3493 = vld [vmem:[%s2597 + $0x142] sm:$0xff]
      %v3494 = vld [vmem:[%s2597 + $0x152] sm:$0xff]
      %v3495 = vld [vmem:[%s2597 + $0x15a] sm:$0xff]
      %v3496 = vld [vmem:[%s2597 + $0x16a] sm:$0xff]
      %v3497 = vld [vmem:[%s2597 + $0x172] sm:$0xff]
      %3530 = vrot.lane.b32.xlu0 %v3466, 40
      %v3531 = vpop.permute.xlu0 %3530
      %3532 = vrot.lane.b32.xlu0 %v3467, 40
      %v3533 = vpop.permute.xlu0 %3532
      %3534 = vrot.lane.b32.xlu0 %v3468, 40
      %v3535 = vpop.permute.xlu0 %3534
      %3536 = vrot.lane.b32.xlu0 %v3469, 40
      %v3537 = vpop.permute.xlu0 %3536
      %3538 = vrot.lane.b32.xlu0 %v3470, 40
      %v3539 = vpop.permute.xlu0 %3538
      %3540 = vrot.lane.b32.xlu0 %v3471, 40
      %v3541 = vpop.permute.xlu0 %3540
      %3542 = vrot.lane.b32.xlu0 %v3472, 40
      %v3543 = vpop.permute.xlu0 %3542
      %3544 = vrot.lane.b32.xlu0 %v3473, 40
      %v3545 = vpop.permute.xlu0 %3544
      %3546 = vrot.lane.b32.xlu0 %v3474, 40
      %v3547 = vpop.permute.xlu0 %3546
      %3548 = vrot.lane.b32.xlu0 %v3475, 40
      %v3549 = vpop.permute.xlu0 %3548
      %3550 = vrot.lane.b32.xlu0 %v3476, 40
      %v3551 = vpop.permute.xlu0 %3550
      %3552 = vrot.lane.b32.xlu0 %v3477, 40
      %v3553 = vpop.permute.xlu0 %3552
      %3554 = vrot.lane.b32.xlu0 %v3478, 40
      %v3555 = vpop.permute.xlu0 %3554
      %3556 = vrot.lane.b32.xlu0 %v3479, 40
      %v3557 = vpop.permute.xlu0 %3556
      %3558 = vrot.lane.b32.xlu0 %v3480, 40
      %v3559 = vpop.permute.xlu0 %3558
      %3560 = vrot.lane.b32.xlu0 %v3481, 40
      %v3561 = vpop.permute.xlu0 %3560
      %3562 = vrot.lane.b32.xlu0 %v3482, 40
      %v3563 = vpop.permute.xlu0 %3562
      %3564 = vrot.lane.b32.xlu0 %v3483, 40
      %v3565 = vpop.permute.xlu0 %3564
      %3566 = vrot.lane.b32.xlu0 %v3484, 40
      %v3567 = vpop.permute.xlu0 %3566
      %3568 = vrot.lane.b32.xlu0 %v3485, 40
      %v3569 = vpop.permute.xlu0 %3568
      %3570 = vrot.lane.b32.xlu0 %v3486, 40
      %v3571 = vpop.permute.xlu0 %3570
      %3572 = vrot.lane.b32.xlu0 %v3487, 40
      %v3573 = vpop.permute.xlu0 %3572
      %3574 = vrot.lane.b32.xlu0 %v3488, 40
      %v3575 = vpop.permute.xlu0 %3574
      %3576 = vrot.lane.b32.xlu0 %v3489, 40
      %v3577 = vpop.permute.xlu0 %3576
      %3578 = vrot.lane.b32.xlu0 %v3490, 40
      %v3579 = vpop.permute.xlu0 %3578
      %3580 = vrot.lane.b32.xlu0 %v3491, 40
      %v3581 = vpop.permute.xlu0 %3580
      %3582 = vrot.lane.b32.xlu0 %v3492, 40
      %v3583 = vpop.permute.xlu0 %3582
      %3584 = vrot.lane.b32.xlu0 %v3493, 40
      %v3585 = vpop.permute.xlu0 %3584
      %3586 = vrot.lane.b32.xlu0 %v3494, 40
      %v3587 = vpop.permute.xlu0 %3586
      %3588 = vrot.lane.b32.xlu0 %v3495, 40
      %v3589 = vpop.permute.xlu0 %3588
      %3590 = vrot.lane.b32.xlu0 %v3496, 40
      %v3591 = vpop.permute.xlu0 %3590
      %3592 = vrot.lane.b32.xlu0 %v3497, 40
      %v3593 = vpop.permute.xlu0 %3592
      %vm3626 = vcmask 392512
      %3627 = vst.msk [vmem:[#allocation5] sm:$0xff] %vm3626, %v3531
      %3628 = vst.msk [vmem:[#allocation5 + $0x8] sm:$0xff] %vm3626, %v3533
      %3629 = vst.msk [vmem:[#allocation5 + $0x10] sm:$0xff] %vm3626, %v3535
      %3630 = vst.msk [vmem:[#allocation5 + $0x18] sm:$0xff] %vm3626, %v3537
      %3631 = vst.msk [vmem:[#allocation5 + $0x20] sm:$0xff] %vm3626, %v3539
      %3632 = vst.msk [vmem:[#allocation5 + $0x28] sm:$0xff] %vm3626, %v3541
      %3633 = vst.msk [vmem:[#allocation5 + $0x30] sm:$0xff] %vm3626, %v3543
      %3634 = vst.msk [vmem:[#allocation5 + $0x38] sm:$0xff] %vm3626, %v3545
      %3635 = vst.msk [vmem:[#allocation5 + $0x40] sm:$0xff] %vm3626, %v3547
      %3636 = vst.msk [vmem:[#allocation5 + $0x48] sm:$0xff] %vm3626, %v3549
      %3637 = vst.msk [vmem:[#allocation5 + $0x50] sm:$0xff] %vm3626, %v3551
      %3638 = vst.msk [vmem:[#allocation5 + $0x58] sm:$0xff] %vm3626, %v3553
      %3639 = vst.msk [vmem:[#allocation5 + $0x60] sm:$0xff] %vm3626, %v3555
      %3640 = vst.msk [vmem:[#allocation5 + $0x68] sm:$0xff] %vm3626, %v3557
      %3641 = vst.msk [vmem:[#allocation5 + $0x70] sm:$0xff] %vm3626, %v3559
      %3642 = vst.msk [vmem:[#allocation5 + $0x78] sm:$0xff] %vm3626, %v3561
      %3643 = vst.msk [vmem:[#allocation5 + $0x80] sm:$0xff] %vm3626, %v3563
      %3644 = vst.msk [vmem:[#allocation5 + $0x88] sm:$0xff] %vm3626, %v3565
      %3645 = vst.msk [vmem:[#allocation5 + $0x90] sm:$0xff] %vm3626, %v3567
      %3646 = vst.msk [vmem:[#allocation5 + $0x98] sm:$0xff] %vm3626, %v3569
      %3647 = vst.msk [vmem:[#allocation5 + $0xa0] sm:$0xff] %vm3626, %v3571
      %3648 = vst.msk [vmem:[#allocation5 + $0xa8] sm:$0xff] %vm3626, %v3573
      %3649 = vst.msk [vmem:[#allocation5 + $0xb0] sm:$0xff] %vm3626, %v3575
      %3650 = vst.msk [vmem:[#allocation5 + $0xb8] sm:$0xff] %vm3626, %v3577
      %3651 = vst.msk [vmem:[#allocation5 + $0xc0] sm:$0xff] %vm3626, %v3579
      %3652 = vst.msk [vmem:[#allocation5 + $0xc8] sm:$0xff] %vm3626, %v3581
      %3653 = vst.msk [vmem:[#allocation5 + $0xd0] sm:$0xff] %vm3626, %v3583
      %3654 = vst.msk [vmem:[#allocation5 + $0xd8] sm:$0xff] %vm3626, %v3585
      %3655 = vst.msk [vmem:[#allocation5 + $0xe0] sm:$0xff] %vm3626, %v3587
      %3656 = vst.msk [vmem:[#allocation5 + $0xe8] sm:$0xff] %vm3626, %v3589
      %3657 = vst.msk [vmem:[#allocation5 + $0xf0] sm:$0xff] %vm3626, %v3591
      %3658 = vst.msk [vmem:[#allocation5 + $0xf8] sm:$0xff] %vm3626, %v3593
      %s3659 = scalar_lea.vmem [#allocation3], 48
      %v3660 = vld [vmem:[%s3659] sm:$0xff]
      %v3661 = vld [vmem:[%s3659 + $0x8] sm:$0xff]
      %v3662 = vld [vmem:[%s3659 + $0x18] sm:$0xff]
      %v3663 = vld [vmem:[%s3659 + $0x20] sm:$0xff]
      %v3664 = vld [vmem:[%s3659 + $0x30] sm:$0xff]
      %v3665 = vld [vmem:[%s3659 + $0x38] sm:$0xff]
      %v3666 = vld [vmem:[%s3659 + $0x48] sm:$0xff]
      %v3667 = vld [vmem:[%s3659 + $0x50] sm:$0xff]
      %v3668 = vld [vmem:[%s3659 + $0x60] sm:$0xff]
      %v3669 = vld [vmem:[%s3659 + $0x68] sm:$0xff]
      %v3670 = vld [vmem:[%s3659 + $0x78] sm:$0xff]
      %v3671 = vld [vmem:[%s3659 + $0x80] sm:$0xff]
      %v3672 = vld [vmem:[%s3659 + $0x90] sm:$0xff]
      %v3673 = vld [vmem:[%s3659 + $0x98] sm:$0xff]
      %v3674 = vld [vmem:[%s3659 + $0xa8] sm:$0xff]
      %v3675 = vld [vmem:[%s3659 + $0xb0] sm:$0xff]
      %v3676 = vld [vmem:[%s3659 + $0xc0] sm:$0xff]
      %v3677 = vld [vmem:[%s3659 + $0xc8] sm:$0xff]
      %v3678 = vld [vmem:[%s3659 + $0xd8] sm:$0xff]
      %v3679 = vld [vmem:[%s3659 + $0xe0] sm:$0xff]
      %v3680 = vld [vmem:[%s3659 + $0xf0] sm:$0xff]
      %v3681 = vld [vmem:[%s3659 + $0xf8] sm:$0xff]
      %v3682 = vld [vmem:[%s3659 + $0x108] sm:$0xff]
      %v3683 = vld [vmem:[%s3659 + $0x110] sm:$0xff]
      %v3684 = vld [vmem:[%s3659 + $0x120] sm:$0xff]
      %v3685 = vld [vmem:[%s3659 + $0x128] sm:$0xff]
      %v3686 = vld [vmem:[%s3659 + $0x138] sm:$0xff]
      %v3687 = vld [vmem:[%s3659 + $0x140] sm:$0xff]
      %v3688 = vld [vmem:[%s3659 + $0x150] sm:$0xff]
      %v3689 = vld [vmem:[%s3659 + $0x158] sm:$0xff]
      %v3690 = vld [vmem:[%s3659 + $0x168] sm:$0xff]
      %v3691 = vld [vmem:[%s3659 + $0x170] sm:$0xff]
      %3724 = vrot.lane.b32.xlu0 %v3660, 48
      %v3725 = vpop.permute.xlu0 %3724
      %3726 = vrot.lane.b32.xlu0 %v3661, 48
      %v3727 = vpop.permute.xlu0 %3726
      %3728 = vrot.lane.b32.xlu0 %v3662, 48
      %v3729 = vpop.permute.xlu0 %3728
      %3730 = vrot.lane.b32.xlu0 %v3663, 48
      %v3731 = vpop.permute.xlu0 %3730
      %3732 = vrot.lane.b32.xlu0 %v3664, 48
      %v3733 = vpop.permute.xlu0 %3732
      %3734 = vrot.lane.b32.xlu0 %v3665, 48
      %v3735 = vpop.permute.xlu0 %3734
      %3736 = vrot.lane.b32.xlu0 %v3666, 48
      %v3737 = vpop.permute.xlu0 %3736
      %3738 = vrot.lane.b32.xlu0 %v3667, 48
      %v3739 = vpop.permute.xlu0 %3738
      %3740 = vrot.lane.b32.xlu0 %v3668, 48
      %v3741 = vpop.permute.xlu0 %3740
      %3742 = vrot.lane.b32.xlu0 %v3669, 48
      %v3743 = vpop.permute.xlu0 %3742
      %3744 = vrot.lane.b32.xlu0 %v3670, 48
      %v3745 = vpop.permute.xlu0 %3744
      %3746 = vrot.lane.b32.xlu0 %v3671, 48
      %v3747 = vpop.permute.xlu0 %3746
      %3748 = vrot.lane.b32.xlu0 %v3672, 48
      %v3749 = vpop.permute.xlu0 %3748
      %3750 = vrot.lane.b32.xlu0 %v3673, 48
      %v3751 = vpop.permute.xlu0 %3750
      %3752 = vrot.lane.b32.xlu0 %v3674, 48
      %v3753 = vpop.permute.xlu0 %3752
      %3754 = vrot.lane.b32.xlu0 %v3675, 48
      %v3755 = vpop.permute.xlu0 %3754
      %3756 = vrot.lane.b32.xlu0 %v3676, 48
      %v3757 = vpop.permute.xlu0 %3756
      %3758 = vrot.lane.b32.xlu0 %v3677, 48
      %v3759 = vpop.permute.xlu0 %3758
      %3760 = vrot.lane.b32.xlu0 %v3678, 48
      %v3761 = vpop.permute.xlu0 %3760
      %3762 = vrot.lane.b32.xlu0 %v3679, 48
      %v3763 = vpop.permute.xlu0 %3762
      %3764 = vrot.lane.b32.xlu0 %v3680, 48
      %v3765 = vpop.permute.xlu0 %3764
      %3766 = vrot.lane.b32.xlu0 %v3681, 48
      %v3767 = vpop.permute.xlu0 %3766
      %3768 = vrot.lane.b32.xlu0 %v3682, 48
      %v3769 = vpop.permute.xlu0 %3768
      %3770 = vrot.lane.b32.xlu0 %v3683, 48
      %v3771 = vpop.permute.xlu0 %3770
      %3772 = vrot.lane.b32.xlu0 %v3684, 48
      %v3773 = vpop.permute.xlu0 %3772
      %3774 = vrot.lane.b32.xlu0 %v3685, 48
      %v3775 = vpop.permute.xlu0 %3774
      %3776 = vrot.lane.b32.xlu0 %v3686, 48
      %v3777 = vpop.permute.xlu0 %3776
      %3778 = vrot.lane.b32.xlu0 %v3687, 48
      %v3779 = vpop.permute.xlu0 %3778
      %3780 = vrot.lane.b32.xlu0 %v3688, 48
      %v3781 = vpop.permute.xlu0 %3780
      %3782 = vrot.lane.b32.xlu0 %v3689, 48
      %v3783 = vpop.permute.xlu0 %3782
      %3784 = vrot.lane.b32.xlu0 %v3690, 48
      %v3785 = vpop.permute.xlu0 %3784
      %3786 = vrot.lane.b32.xlu0 %v3691, 48
      %v3787 = vpop.permute.xlu0 %3786
      %vm3820 = vcmask 458112
      %3821 = vst.msk [vmem:[#allocation5] sm:$0xff] %vm3820, %v3725
      %3822 = vst.msk [vmem:[#allocation5 + $0x8] sm:$0xff] %vm3820, %v3727
      %3823 = vst.msk [vmem:[#allocation5 + $0x10] sm:$0xff] %vm3820, %v3729
      %3824 = vst.msk [vmem:[#allocation5 + $0x18] sm:$0xff] %vm3820, %v3731
      %3825 = vst.msk [vmem:[#allocation5 + $0x20] sm:$0xff] %vm3820, %v3733
      %3826 = vst.msk [vmem:[#allocation5 + $0x28] sm:$0xff] %vm3820, %v3735
      %3827 = vst.msk [vmem:[#allocation5 + $0x30] sm:$0xff] %vm3820, %v3737
      %3828 = vst.msk [vmem:[#allocation5 + $0x38] sm:$0xff] %vm3820, %v3739
      %3829 = vst.msk [vmem:[#allocation5 + $0x40] sm:$0xff] %vm3820, %v3741
      %3830 = vst.msk [vmem:[#allocation5 + $0x48] sm:$0xff] %vm3820, %v3743
      %3831 = vst.msk [vmem:[#allocation5 + $0x50] sm:$0xff] %vm3820, %v3745
      %3832 = vst.msk [vmem:[#allocation5 + $0x58] sm:$0xff] %vm3820, %v3747
      %3833 = vst.msk [vmem:[#allocation5 + $0x60] sm:$0xff] %vm3820, %v3749
      %3834 = vst.msk [vmem:[#allocation5 + $0x68] sm:$0xff] %vm3820, %v3751
      %3835 = vst.msk [vmem:[#allocation5 + $0x70] sm:$0xff] %vm3820, %v3753
      %3836 = vst.msk [vmem:[#allocation5 + $0x78] sm:$0xff] %vm3820, %v3755
      %3837 = vst.msk [vmem:[#allocation5 + $0x80] sm:$0xff] %vm3820, %v3757
      %3838 = vst.msk [vmem:[#allocation5 + $0x88] sm:$0xff] %vm3820, %v3759
      %3839 = vst.msk [vmem:[#allocation5 + $0x90] sm:$0xff] %vm3820, %v3761
      %3840 = vst.msk [vmem:[#allocation5 + $0x98] sm:$0xff] %vm3820, %v3763
      %3841 = vst.msk [vmem:[#allocation5 + $0xa0] sm:$0xff] %vm3820, %v3765
      %3842 = vst.msk [vmem:[#allocation5 + $0xa8] sm:$0xff] %vm3820, %v3767
      %3843 = vst.msk [vmem:[#allocation5 + $0xb0] sm:$0xff] %vm3820, %v3769
      %3844 = vst.msk [vmem:[#allocation5 + $0xb8] sm:$0xff] %vm3820, %v3771
      %3845 = vst.msk [vmem:[#allocation5 + $0xc0] sm:$0xff] %vm3820, %v3773
      %3846 = vst.msk [vmem:[#allocation5 + $0xc8] sm:$0xff] %vm3820, %v3775
      %3847 = vst.msk [vmem:[#allocation5 + $0xd0] sm:$0xff] %vm3820, %v3777
      %3848 = vst.msk [vmem:[#allocation5 + $0xd8] sm:$0xff] %vm3820, %v3779
      %3849 = vst.msk [vmem:[#allocation5 + $0xe0] sm:$0xff] %vm3820, %v3781
      %3850 = vst.msk [vmem:[#allocation5 + $0xe8] sm:$0xff] %vm3820, %v3783
      %3851 = vst.msk [vmem:[#allocation5 + $0xf0] sm:$0xff] %vm3820, %v3785
      %3852 = vst.msk [vmem:[#allocation5 + $0xf8] sm:$0xff] %vm3820, %v3787
      %v3853 = vld [vmem:[%s3659 + $0x1] sm:$0xff]
      %v3854 = vld [vmem:[%s3659 + $0x9] sm:$0xff]
      %v3855 = vld [vmem:[%s3659 + $0x19] sm:$0xff]
      %v3856 = vld [vmem:[%s3659 + $0x21] sm:$0xff]
      %v3857 = vld [vmem:[%s3659 + $0x31] sm:$0xff]
      %v3858 = vld [vmem:[%s3659 + $0x39] sm:$0xff]
      %v3859 = vld [vmem:[%s3659 + $0x49] sm:$0xff]
      %v3860 = vld [vmem:[%s3659 + $0x51] sm:$0xff]
      %v3861 = vld [vmem:[%s3659 + $0x61] sm:$0xff]
      %v3862 = vld [vmem:[%s3659 + $0x69] sm:$0xff]
      %v3863 = vld [vmem:[%s3659 + $0x79] sm:$0xff]
      %v3864 = vld [vmem:[%s3659 + $0x81] sm:$0xff]
      %v3865 = vld [vmem:[%s3659 + $0x91] sm:$0xff]
      %v3866 = vld [vmem:[%s3659 + $0x99] sm:$0xff]
      %v3867 = vld [vmem:[%s3659 + $0xa9] sm:$0xff]
      %v3868 = vld [vmem:[%s3659 + $0xb1] sm:$0xff]
      %v3869 = vld [vmem:[%s3659 + $0xc1] sm:$0xff]
      %v3870 = vld [vmem:[%s3659 + $0xc9] sm:$0xff]
      %v3871 = vld [vmem:[%s3659 + $0xd9] sm:$0xff]
      %v3872 = vld [vmem:[%s3659 + $0xe1] sm:$0xff]
      %v3873 = vld [vmem:[%s3659 + $0xf1] sm:$0xff]
      %v3874 = vld [vmem:[%s3659 + $0xf9] sm:$0xff]
      %v3875 = vld [vmem:[%s3659 + $0x109] sm:$0xff]
      %v3876 = vld [vmem:[%s3659 + $0x111] sm:$0xff]
      %v3877 = vld [vmem:[%s3659 + $0x121] sm:$0xff]
      %v3878 = vld [vmem:[%s3659 + $0x129] sm:$0xff]
      %v3879 = vld [vmem:[%s3659 + $0x139] sm:$0xff]
      %v3880 = vld [vmem:[%s3659 + $0x141] sm:$0xff]
      %v3881 = vld [vmem:[%s3659 + $0x151] sm:$0xff]
      %v3882 = vld [vmem:[%s3659 + $0x159] sm:$0xff]
      %v3883 = vld [vmem:[%s3659 + $0x169] sm:$0xff]
      %v3884 = vld [vmem:[%s3659 + $0x171] sm:$0xff]
      %3917 = vrot.lane.b32.xlu0 %v3853, 56
      %v3918 = vpop.permute.xlu0 %3917
      %3919 = vrot.lane.b32.xlu0 %v3854, 56
      %v3920 = vpop.permute.xlu0 %3919
      %3921 = vrot.lane.b32.xlu0 %v3855, 56
      %v3922 = vpop.permute.xlu0 %3921
      %3923 = vrot.lane.b32.xlu0 %v3856, 56
      %v3924 = vpop.permute.xlu0 %3923
      %3925 = vrot.lane.b32.xlu0 %v3857, 56
      %v3926 = vpop.permute.xlu0 %3925
      %3927 = vrot.lane.b32.xlu0 %v3858, 56
      %v3928 = vpop.permute.xlu0 %3927
      %3929 = vrot.lane.b32.xlu0 %v3859, 56
      %v3930 = vpop.permute.xlu0 %3929
      %3931 = vrot.lane.b32.xlu0 %v3860, 56
      %v3932 = vpop.permute.xlu0 %3931
      %3933 = vrot.lane.b32.xlu0 %v3861, 56
      %v3934 = vpop.permute.xlu0 %3933
      %3935 = vrot.lane.b32.xlu0 %v3862, 56
      %v3936 = vpop.permute.xlu0 %3935
      %3937 = vrot.lane.b32.xlu0 %v3863, 56
      %v3938 = vpop.permute.xlu0 %3937
      %3939 = vrot.lane.b32.xlu0 %v3864, 56
      %v3940 = vpop.permute.xlu0 %3939
      %3941 = vrot.lane.b32.xlu0 %v3865, 56
      %v3942 = vpop.permute.xlu0 %3941
      %3943 = vrot.lane.b32.xlu0 %v3866, 56
      %v3944 = vpop.permute.xlu0 %3943
      %3945 = vrot.lane.b32.xlu0 %v3867, 56
      %v3946 = vpop.permute.xlu0 %3945
      %3947 = vrot.lane.b32.xlu0 %v3868, 56
      %v3948 = vpop.permute.xlu0 %3947
      %3949 = vrot.lane.b32.xlu0 %v3869, 56
      %v3950 = vpop.permute.xlu0 %3949
      %3951 = vrot.lane.b32.xlu0 %v3870, 56
      %v3952 = vpop.permute.xlu0 %3951
      %3953 = vrot.lane.b32.xlu0 %v3871, 56
      %v3954 = vpop.permute.xlu0 %3953
      %3955 = vrot.lane.b32.xlu0 %v3872, 56
      %v3956 = vpop.permute.xlu0 %3955
      %3957 = vrot.lane.b32.xlu0 %v3873, 56
      %v3958 = vpop.permute.xlu0 %3957
      %3959 = vrot.lane.b32.xlu0 %v3874, 56
      %v3960 = vpop.permute.xlu0 %3959
      %3961 = vrot.lane.b32.xlu0 %v3875, 56
      %v3962 = vpop.permute.xlu0 %3961
      %3963 = vrot.lane.b32.xlu0 %v3876, 56
      %v3964 = vpop.permute.xlu0 %3963
      %3965 = vrot.lane.b32.xlu0 %v3877, 56
      %v3966 = vpop.permute.xlu0 %3965
      %3967 = vrot.lane.b32.xlu0 %v3878, 56
      %v3968 = vpop.permute.xlu0 %3967
      %3969 = vrot.lane.b32.xlu0 %v3879, 56
      %v3970 = vpop.permute.xlu0 %3969
      %3971 = vrot.lane.b32.xlu0 %v3880, 56
      %v3972 = vpop.permute.xlu0 %3971
      %3973 = vrot.lane.b32.xlu0 %v3881, 56
      %v3974 = vpop.permute.xlu0 %3973
      %3975 = vrot.lane.b32.xlu0 %v3882, 56
      %v3976 = vpop.permute.xlu0 %3975
      %3977 = vrot.lane.b32.xlu0 %v3883, 56
      %v3978 = vpop.permute.xlu0 %3977
      %3979 = vrot.lane.b32.xlu0 %v3884, 56
      %v3980 = vpop.permute.xlu0 %3979
      %vm4013 = vcmask 523712
      %4014 = vst.msk [vmem:[#allocation5] sm:$0xff] %vm4013, %v3918
      %4015 = vst.msk [vmem:[#allocation5 + $0x8] sm:$0xff] %vm4013, %v3920
      %4016 = vst.msk [vmem:[#allocation5 + $0x10] sm:$0xff] %vm4013, %v3922
      %4017 = vst.msk [vmem:[#allocation5 + $0x18] sm:$0xff] %vm4013, %v3924
      %4018 = vst.msk [vmem:[#allocation5 + $0x20] sm:$0xff] %vm4013, %v3926
      %4019 = vst.msk [vmem:[#allocation5 + $0x28] sm:$0xff] %vm4013, %v3928
      %4020 = vst.msk [vmem:[#allocation5 + $0x30] sm:$0xff] %vm4013, %v3930
      %4021 = vst.msk [vmem:[#allocation5 + $0x38] sm:$0xff] %vm4013, %v3932
      %4022 = vst.msk [vmem:[#allocation5 + $0x40] sm:$0xff] %vm4013, %v3934
      %4023 = vst.msk [vmem:[#allocation5 + $0x48] sm:$0xff] %vm4013, %v3936
      %4024 = vst.msk [vmem:[#allocation5 + $0x50] sm:$0xff] %vm4013, %v3938
      %4025 = vst.msk [vmem:[#allocation5 + $0x58] sm:$0xff] %vm4013, %v3940
      %4026 = vst.msk [vmem:[#allocation5 + $0x60] sm:$0xff] %vm4013, %v3942
      %4027 = vst.msk [vmem:[#allocation5 + $0x68] sm:$0xff] %vm4013, %v3944
      %4028 = vst.msk [vmem:[#allocation5 + $0x70] sm:$0xff] %vm4013, %v3946
      %4029 = vst.msk [vmem:[#allocation5 + $0x78] sm:$0xff] %vm4013, %v3948
      %4030 = vst.msk [vmem:[#allocation5 + $0x80] sm:$0xff] %vm4013, %v3950
      %4031 = vst.msk [vmem:[#allocation5 + $0x88] sm:$0xff] %vm4013, %v3952
      %4032 = vst.msk [vmem:[#allocation5 + $0x90] sm:$0xff] %vm4013, %v3954
      %4033 = vst.msk [vmem:[#allocation5 + $0x98] sm:$0xff] %vm4013, %v3956
      %4034 = vst.msk [vmem:[#allocation5 + $0xa0] sm:$0xff] %vm4013, %v3958
      %4035 = vst.msk [vmem:[#allocation5 + $0xa8] sm:$0xff] %vm4013, %v3960
      %4036 = vst.msk [vmem:[#allocation5 + $0xb0] sm:$0xff] %vm4013, %v3962
      %4037 = vst.msk [vmem:[#allocation5 + $0xb8] sm:$0xff] %vm4013, %v3964
      %4038 = vst.msk [vmem:[#allocation5 + $0xc0] sm:$0xff] %vm4013, %v3966
      %4039 = vst.msk [vmem:[#allocation5 + $0xc8] sm:$0xff] %vm4013, %v3968
      %4040 = vst.msk [vmem:[#allocation5 + $0xd0] sm:$0xff] %vm4013, %v3970
      %4041 = vst.msk [vmem:[#allocation5 + $0xd8] sm:$0xff] %vm4013, %v3972
      %4042 = vst.msk [vmem:[#allocation5 + $0xe0] sm:$0xff] %vm4013, %v3974
      %4043 = vst.msk [vmem:[#allocation5 + $0xe8] sm:$0xff] %vm4013, %v3976
      %4044 = vst.msk [vmem:[#allocation5 + $0xf0] sm:$0xff] %vm4013, %v3978
      %4045 = vst.msk [vmem:[#allocation5 + $0xf8] sm:$0xff] %vm4013, %v3980
      %v4046 = vld [vmem:[%s3659 + $0x2] sm:$0xff]
      %v4047 = vld [vmem:[%s3659 + $0xa] sm:$0xff]
      %v4048 = vld [vmem:[%s3659 + $0x1a] sm:$0xff]
      %v4049 = vld [vmem:[%s3659 + $0x22] sm:$0xff]
      %v4050 = vld [vmem:[%s3659 + $0x32] sm:$0xff]
      %v4051 = vld [vmem:[%s3659 + $0x3a] sm:$0xff]
      %v4052 = vld [vmem:[%s3659 + $0x4a] sm:$0xff]
      %v4053 = vld [vmem:[%s3659 + $0x52] sm:$0xff]
      %v4054 = vld [vmem:[%s3659 + $0x62] sm:$0xff]
      %v4055 = vld [vmem:[%s3659 + $0x6a] sm:$0xff]
      %v4056 = vld [vmem:[%s3659 + $0x7a] sm:$0xff]
      %v4057 = vld [vmem:[%s3659 + $0x82] sm:$0xff]
      %v4058 = vld [vmem:[%s3659 + $0x92] sm:$0xff]
      %v4059 = vld [vmem:[%s3659 + $0x9a] sm:$0xff]
      %v4060 = vld [vmem:[%s3659 + $0xaa] sm:$0xff]
      %v4061 = vld [vmem:[%s3659 + $0xb2] sm:$0xff]
      %v4062 = vld [vmem:[%s3659 + $0xc2] sm:$0xff]
      %v4063 = vld [vmem:[%s3659 + $0xca] sm:$0xff]
      %v4064 = vld [vmem:[%s3659 + $0xda] sm:$0xff]
      %v4065 = vld [vmem:[%s3659 + $0xe2] sm:$0xff]
      %v4066 = vld [vmem:[%s3659 + $0xf2] sm:$0xff]
      %v4067 = vld [vmem:[%s3659 + $0xfa] sm:$0xff]
      %v4068 = vld [vmem:[%s3659 + $0x10a] sm:$0xff]
      %v4069 = vld [vmem:[%s3659 + $0x112] sm:$0xff]
      %v4070 = vld [vmem:[%s3659 + $0x122] sm:$0xff]
      %v4071 = vld [vmem:[%s3659 + $0x12a] sm:$0xff]
      %v4072 = vld [vmem:[%s3659 + $0x13a] sm:$0xff]
      %v4073 = vld [vmem:[%s3659 + $0x142] sm:$0xff]
      %v4074 = vld [vmem:[%s3659 + $0x152] sm:$0xff]
      %v4075 = vld [vmem:[%s3659 + $0x15a] sm:$0xff]
      %v4076 = vld [vmem:[%s3659 + $0x16a] sm:$0xff]
      %v4077 = vld [vmem:[%s3659 + $0x172] sm:$0xff]
      %4110 = vrot.lane.b32.xlu0 %v4046, 64
      %v4111 = vpop.permute.xlu0 %4110
      %4112 = vrot.lane.b32.xlu0 %v4047, 64
      %v4113 = vpop.permute.xlu0 %4112
      %4114 = vrot.lane.b32.xlu0 %v4048, 64
      %v4115 = vpop.permute.xlu0 %4114
      %4116 = vrot.lane.b32.xlu0 %v4049, 64
      %v4117 = vpop.permute.xlu0 %4116
      %4118 = vrot.lane.b32.xlu0 %v4050, 64
      %v4119 = vpop.permute.xlu0 %4118
      %4120 = vrot.lane.b32.xlu0 %v4051, 64
      %v4121 = vpop.permute.xlu0 %4120
      %4122 = vrot.lane.b32.xlu0 %v4052, 64
      %v4123 = vpop.permute.xlu0 %4122
      %4124 = vrot.lane.b32.xlu0 %v4053, 64
      %v4125 = vpop.permute.xlu0 %4124
      %4126 = vrot.lane.b32.xlu0 %v4054, 64
      %v4127 = vpop.permute.xlu0 %4126
      %4128 = vrot.lane.b32.xlu0 %v4055, 64
      %v4129 = vpop.permute.xlu0 %4128
      %4130 = vrot.lane.b32.xlu0 %v4056, 64
      %v4131 = vpop.permute.xlu0 %4130
      %4132 = vrot.lane.b32.xlu0 %v4057, 64
      %v4133 = vpop.permute.xlu0 %4132
      %4134 = vrot.lane.b32.xlu0 %v4058, 64
      %v4135 = vpop.permute.xlu0 %4134
      %4136 = vrot.lane.b32.xlu0 %v4059, 64
      %v4137 = vpop.permute.xlu0 %4136
      %4138 = vrot.lane.b32.xlu0 %v4060, 64
      %v4139 = vpop.permute.xlu0 %4138
      %4140 = vrot.lane.b32.xlu0 %v4061, 64
      %v4141 = vpop.permute.xlu0 %4140
      %4142 = vrot.lane.b32.xlu0 %v4062, 64
      %v4143 = vpop.permute.xlu0 %4142
      %4144 = vrot.lane.b32.xlu0 %v4063, 64
      %v4145 = vpop.permute.xlu0 %4144
      %4146 = vrot.lane.b32.xlu0 %v4064, 64
      %v4147 = vpop.permute.xlu0 %4146
      %4148 = vrot.lane.b32.xlu0 %v4065, 64
      %v4149 = vpop.permute.xlu0 %4148
      %4150 = vrot.lane.b32.xlu0 %v4066, 64
      %v4151 = vpop.permute.xlu0 %4150
      %4152 = vrot.lane.b32.xlu0 %v4067, 64
      %v4153 = vpop.permute.xlu0 %4152
      %4154 = vrot.lane.b32.xlu0 %v4068, 64
      %v4155 = vpop.permute.xlu0 %4154
      %4156 = vrot.lane.b32.xlu0 %v4069, 64
      %v4157 = vpop.permute.xlu0 %4156
      %4158 = vrot.lane.b32.xlu0 %v4070, 64
      %v4159 = vpop.permute.xlu0 %4158
      %4160 = vrot.lane.b32.xlu0 %v4071, 64
      %v4161 = vpop.permute.xlu0 %4160
      %4162 = vrot.lane.b32.xlu0 %v4072, 64
      %v4163 = vpop.permute.xlu0 %4162
      %4164 = vrot.lane.b32.xlu0 %v4073, 64
      %v4165 = vpop.permute.xlu0 %4164
      %4166 = vrot.lane.b32.xlu0 %v4074, 64
      %v4167 = vpop.permute.xlu0 %4166
      %4168 = vrot.lane.b32.xlu0 %v4075, 64
      %v4169 = vpop.permute.xlu0 %4168
      %4170 = vrot.lane.b32.xlu0 %v4076, 64
      %v4171 = vpop.permute.xlu0 %4170
      %4172 = vrot.lane.b32.xlu0 %v4077, 64
      %v4173 = vpop.permute.xlu0 %4172
      %vm4206 = vcmask 589312
      %4207 = vst.msk [vmem:[#allocation5] sm:$0xff] %vm4206, %v4111
      %4208 = vst.msk [vmem:[#allocation5 + $0x8] sm:$0xff] %vm4206, %v4113
      %4209 = vst.msk [vmem:[#allocation5 + $0x10] sm:$0xff] %vm4206, %v4115
      %4210 = vst.msk [vmem:[#allocation5 + $0x18] sm:$0xff] %vm4206, %v4117
      %4211 = vst.msk [vmem:[#allocation5 + $0x20] sm:$0xff] %vm4206, %v4119
      %4212 = vst.msk [vmem:[#allocation5 + $0x28] sm:$0xff] %vm4206, %v4121
      %4213 = vst.msk [vmem:[#allocation5 + $0x30] sm:$0xff] %vm4206, %v4123
      %4214 = vst.msk [vmem:[#allocation5 + $0x38] sm:$0xff] %vm4206, %v4125
      %4215 = vst.msk [vmem:[#allocation5 + $0x40] sm:$0xff] %vm4206, %v4127
      %4216 = vst.msk [vmem:[#allocation5 + $0x48] sm:$0xff] %vm4206, %v4129
      %4217 = vst.msk [vmem:[#allocation5 + $0x50] sm:$0xff] %vm4206, %v4131
      %4218 = vst.msk [vmem:[#allocation5 + $0x58] sm:$0xff] %vm4206, %v4133
      %4219 = vst.msk [vmem:[#allocation5 + $0x60] sm:$0xff] %vm4206, %v4135
      %4220 = vst.msk [vmem:[#allocation5 + $0x68] sm:$0xff] %vm4206, %v4137
      %4221 = vst.msk [vmem:[#allocation5 + $0x70] sm:$0xff] %vm4206, %v4139
      %4222 = vst.msk [vmem:[#allocation5 + $0x78] sm:$0xff] %vm4206, %v4141
      %4223 = vst.msk [vmem:[#allocation5 + $0x80] sm:$0xff] %vm4206, %v4143
      %4224 = vst.msk [vmem:[#allocation5 + $0x88] sm:$0xff] %vm4206, %v4145
      %4225 = vst.msk [vmem:[#allocation5 + $0x90] sm:$0xff] %vm4206, %v4147
      %4226 = vst.msk [vmem:[#allocation5 + $0x98] sm:$0xff] %vm4206, %v4149
      %4227 = vst.msk [vmem:[#allocation5 + $0xa0] sm:$0xff] %vm4206, %v4151
      %4228 = vst.msk [vmem:[#allocation5 + $0xa8] sm:$0xff] %vm4206, %v4153
      %4229 = vst.msk [vmem:[#allocation5 + $0xb0] sm:$0xff] %vm4206, %v4155
      %4230 = vst.msk [vmem:[#allocation5 + $0xb8] sm:$0xff] %vm4206, %v4157
      %4231 = vst.msk [vmem:[#allocation5 + $0xc0] sm:$0xff] %vm4206, %v4159
      %4232 = vst.msk [vmem:[#allocation5 + $0xc8] sm:$0xff] %vm4206, %v4161
      %4233 = vst.msk [vmem:[#allocation5 + $0xd0] sm:$0xff] %vm4206, %v4163
      %4234 = vst.msk [vmem:[#allocation5 + $0xd8] sm:$0xff] %vm4206, %v4165
      %4235 = vst.msk [vmem:[#allocation5 + $0xe0] sm:$0xff] %vm4206, %v4167
      %4236 = vst.msk [vmem:[#allocation5 + $0xe8] sm:$0xff] %vm4206, %v4169
      %4237 = vst.msk [vmem:[#allocation5 + $0xf0] sm:$0xff] %vm4206, %v4171
      %4238 = vst.msk [vmem:[#allocation5 + $0xf8] sm:$0xff] %vm4206, %v4173
      %v4239 = vld [vmem:[#allocation5] sm:$0xff]
      %v4240 = vld [vmem:[#allocation5 + $0x8] sm:$0xff]
      %v4241 = vld [vmem:[#allocation5 + $0x10] sm:$0xff]
      %v4242 = vld [vmem:[#allocation5 + $0x18] sm:$0xff]
      %v4243 = vld [vmem:[#allocation5 + $0x20] sm:$0xff]
      %v4244 = vld [vmem:[#allocation5 + $0x28] sm:$0xff]
      %v4245 = vld [vmem:[#allocation5 + $0x30] sm:$0xff]
      %v4246 = vld [vmem:[#allocation5 + $0x38] sm:$0xff]
      %v4247 = vld [vmem:[#allocation5 + $0x40] sm:$0xff]
      %v4248 = vld [vmem:[#allocation5 + $0x48] sm:$0xff]
      %v4249 = vld [vmem:[#allocation5 + $0x50] sm:$0xff]
      %v4250 = vld [vmem:[#allocation5 + $0x58] sm:$0xff]
      %v4251 = vld [vmem:[#allocation5 + $0x60] sm:$0xff]
      %v4252 = vld [vmem:[#allocation5 + $0x68] sm:$0xff]
      %v4253 = vld [vmem:[#allocation5 + $0x70] sm:$0xff]
      %v4254 = vld [vmem:[#allocation5 + $0x78] sm:$0xff]
      %v4255 = vld [vmem:[#allocation5 + $0x80] sm:$0xff]
      %v4256 = vld [vmem:[#allocation5 + $0x88] sm:$0xff]
      %v4257 = vld [vmem:[#allocation5 + $0x90] sm:$0xff]
      %v4258 = vld [vmem:[#allocation5 + $0x98] sm:$0xff]
      %v4259 = vld [vmem:[#allocation5 + $0xa0] sm:$0xff]
      %v4260 = vld [vmem:[#allocation5 + $0xa8] sm:$0xff]
      %v4261 = vld [vmem:[#allocation5 + $0xb0] sm:$0xff]
      %v4262 = vld [vmem:[#allocation5 + $0xb8] sm:$0xff]
      %v4263 = vld [vmem:[#allocation5 + $0xc0] sm:$0xff]
      %v4264 = vld [vmem:[#allocation5 + $0xc8] sm:$0xff]
      %v4265 = vld [vmem:[#allocation5 + $0xd0] sm:$0xff]
      %v4266 = vld [vmem:[#allocation5 + $0xd8] sm:$0xff]
      %v4267 = vld [vmem:[#allocation5 + $0xe0] sm:$0xff]
      %v4268 = vld [vmem:[#allocation5 + $0xe8] sm:$0xff]
      %v4269 = vld [vmem:[#allocation5 + $0xf0] sm:$0xff]
      %v4270 = vld [vmem:[#allocation5 + $0xf8] sm:$0xff]
      %v4271 = vld [vmem:[%s4] sm:$0xff]
      %v4272 = vld [vmem:[%s4 + $0x8] sm:$0xff]
      %v4273 = vld [vmem:[%s4 + $0x10] sm:$0xff]
      %v4274 = vld [vmem:[%s4 + $0x18] sm:$0xff]
      %v4275 = vld [vmem:[%s4 + $0x20] sm:$0xff]
      %v4276 = vld [vmem:[%s4 + $0x28] sm:$0xff]
      %v4277 = vld [vmem:[%s4 + $0x30] sm:$0xff]
      %v4278 = vld [vmem:[%s4 + $0x38] sm:$0xff]
      %v4279 = vld [vmem:[%s4 + $0x40] sm:$0xff]
      %vm4280 = vcmask 588800
      %v4282 = vsel %vm4280, %v4239, 0
      %v4285 = vsel %vm4280, %v4240, 0
      %v4288 = vsel %vm4280, %v4241, 0
      %v4291 = vsel %vm4280, %v4242, 0
      %v4294 = vsel %vm4280, %v4243, 0
      %v4297 = vsel %vm4280, %v4244, 0
      %v4300 = vsel %vm4280, %v4245, 0
      %v4303 = vsel %vm4280, %v4246, 0
      %v4306 = vsel %vm4280, %v4247, 0
      %v4309 = vsel %vm4280, %v4248, 0
      %v4312 = vsel %vm4280, %v4249, 0
      %v4315 = vsel %vm4280, %v4250, 0
      %v4318 = vsel %vm4280, %v4251, 0
      %v4321 = vsel %vm4280, %v4252, 0
      %v4324 = vsel %vm4280, %v4253, 0
      %v4327 = vsel %vm4280, %v4254, 0
      %v4330 = vsel %vm4280, %v4255, 0
      %v4333 = vsel %vm4280, %v4256, 0
      %v4336 = vsel %vm4280, %v4257, 0
      %v4339 = vsel %vm4280, %v4258, 0
      %v4342 = vsel %vm4280, %v4259, 0
      %v4345 = vsel %vm4280, %v4260, 0
      %v4348 = vsel %vm4280, %v4261, 0
      %v4351 = vsel %vm4280, %v4262, 0
      %v4354 = vsel %vm4280, %v4263, 0
      %v4357 = vsel %vm4280, %v4264, 0
      %v4360 = vsel %vm4280, %v4265, 0
      %v4363 = vsel %vm4280, %v4266, 0
      %v4366 = vsel %vm4280, %v4267, 0
      %v4369 = vsel %vm4280, %v4268, 0
      %v4372 = vsel %vm4280, %v4269, 0
      %v4375 = vsel %vm4280, %v4270, 0
      %4377 = vmatpush.msra.mxu0 0.0
      %4378 = vmatpush.msra.mxu0 0.0
      %4379 = vmatpush.msra.mxu0 0.0
      %4380 = vmatpush.msra.mxu0 0.0
      %4381 = vmatpush.msra.mxu0 0.0
      %4382 = vmatpush.msra.mxu0 0.0
      %4383 = vmatpush.msra.mxu0 0.0
      %4384 = vmatpush.msra.mxu0 %v4279
      %4385 = vmatpush.msra.mxu0 %v4278
      %4386 = vmatpush.msra.mxu0 %v4277
      %4387 = vmatpush.msra.mxu0 %v4276
      %4388 = vmatpush.msra.mxu0 %v4275
      %4389 = vmatpush.msra.mxu0 %v4274
      %4390 = vmatpush.msra.mxu0 %v4273
      %4391 = vmatpush.msra.mxu0 %v4272
      %4392 = vmatpush.msra.mxu0 %v4271
      %4393 = vmatmul.f32.gmra.mxu0 %v4282
      %v4394 = vpop.f32.mrf.mxu0
      %v4395 = vadd.f32 0.0, %v4394
      %4396 = vmatmul.f32.gmra.mxu0 %v4285
      %v4397 = vpop.f32.mrf.mxu0
      %v4398 = vadd.f32 0.0, %v4397
      %4399 = vmatmul.f32.gmra.mxu0 %v4288
      %v4400 = vpop.f32.mrf.mxu0
      %v4401 = vadd.f32 0.0, %v4400
      %4402 = vmatmul.f32.gmra.mxu0 %v4291
      %v4403 = vpop.f32.mrf.mxu0
      %v4404 = vadd.f32 0.0, %v4403
      %4405 = vmatmul.f32.gmra.mxu0 %v4294
      %v4406 = vpop.f32.mrf.mxu0
      %v4407 = vadd.f32 0.0, %v4406
      %4408 = vmatmul.f32.gmra.mxu0 %v4297
      %v4409 = vpop.f32.mrf.mxu0
      %v4410 = vadd.f32 0.0, %v4409
      %4411 = vmatmul.f32.gmra.mxu0 %v4300
      %v4412 = vpop.f32.mrf.mxu0
      %v4413 = vadd.f32 0.0, %v4412
      %4414 = vmatmul.f32.gmra.mxu0 %v4303
      %v4415 = vpop.f32.mrf.mxu0
      %v4416 = vadd.f32 0.0, %v4415
      %4417 = vmatmul.f32.gmra.mxu0 %v4306
      %v4418 = vpop.f32.mrf.mxu0
      %v4419 = vadd.f32 0.0, %v4418
      %4420 = vmatmul.f32.gmra.mxu0 %v4309
      %v4421 = vpop.f32.mrf.mxu0
      %v4422 = vadd.f32 0.0, %v4421
      %4423 = vmatmul.f32.gmra.mxu0 %v4312
      %v4424 = vpop.f32.mrf.mxu0
      %v4425 = vadd.f32 0.0, %v4424
      %4426 = vmatmul.f32.gmra.mxu0 %v4315
      %v4427 = vpop.f32.mrf.mxu0
      %v4428 = vadd.f32 0.0, %v4427
      %4429 = vmatmul.f32.gmra.mxu0 %v4318
      %v4430 = vpop.f32.mrf.mxu0
      %v4431 = vadd.f32 0.0, %v4430
      %4432 = vmatmul.f32.gmra.mxu0 %v4321
      %v4433 = vpop.f32.mrf.mxu0
      %v4434 = vadd.f32 0.0, %v4433
      %4435 = vmatmul.f32.gmra.mxu0 %v4324
      %v4436 = vpop.f32.mrf.mxu0
      %v4437 = vadd.f32 0.0, %v4436
      %4438 = vmatmul.f32.gmra.mxu0 %v4327
      %v4439 = vpop.f32.mrf.mxu0
      %v4440 = vadd.f32 0.0, %v4439
      %4441 = vmatmul.f32.gmra.mxu0 %v4330
      %v4442 = vpop.f32.mrf.mxu0
      %v4443 = vadd.f32 0.0, %v4442
      %4444 = vmatmul.f32.gmra.mxu0 %v4333
      %v4445 = vpop.f32.mrf.mxu0
      %v4446 = vadd.f32 0.0, %v4445
      %4447 = vmatmul.f32.gmra.mxu0 %v4336
      %v4448 = vpop.f32.mrf.mxu0
      %v4449 = vadd.f32 0.0, %v4448
      %4450 = vmatmul.f32.gmra.mxu0 %v4339
      %v4451 = vpop.f32.mrf.mxu0
      %v4452 = vadd.f32 0.0, %v4451
      %4453 = vmatmul.f32.gmra.mxu0 %v4342
      %v4454 = vpop.f32.mrf.mxu0
      %v4455 = vadd.f32 0.0, %v4454
      %4456 = vmatmul.f32.gmra.mxu0 %v4345
      %v4457 = vpop.f32.mrf.mxu0
      %v4458 = vadd.f32 0.0, %v4457
      %4459 = vmatmul.f32.gmra.mxu0 %v4348
      %v4460 = vpop.f32.mrf.mxu0
      %v4461 = vadd.f32 0.0, %v4460
      %4462 = vmatmul.f32.gmra.mxu0 %v4351
      %v4463 = vpop.f32.mrf.mxu0
      %v4464 = vadd.f32 0.0, %v4463
      %4465 = vmatmul.f32.gmra.mxu0 %v4354
      %v4466 = vpop.f32.mrf.mxu0
      %v4467 = vadd.f32 0.0, %v4466
      %4468 = vmatmul.f32.gmra.mxu0 %v4357
      %v4469 = vpop.f32.mrf.mxu0
      %v4470 = vadd.f32 0.0, %v4469
      %4471 = vmatmul.f32.gmra.mxu0 %v4360
      %v4472 = vpop.f32.mrf.mxu0
      %v4473 = vadd.f32 0.0, %v4472
      %4474 = vmatmul.f32.gmra.mxu0 %v4363
      %v4475 = vpop.f32.mrf.mxu0
      %v4476 = vadd.f32 0.0, %v4475
      %4477 = vmatmul.f32.gmra.mxu0 %v4366
      %v4478 = vpop.f32.mrf.mxu0
      %v4479 = vadd.f32 0.0, %v4478
      %4480 = vmatmul.f32.gmra.mxu0 %v4369
      %v4481 = vpop.f32.mrf.mxu0
      %v4482 = vadd.f32 0.0, %v4481
      %4483 = vmatmul.f32.gmra.mxu0 %v4372
      %v4484 = vpop.f32.mrf.mxu0
      %v4485 = vadd.f32 0.0, %v4484
      %4486 = vmatmul.f32.gmra.mxu0 %v4375
      %v4487 = vpop.f32.mrf.mxu0
      %v4488 = vadd.f32 0.0, %v4487
      %4489 = vdwg.mxu0
      %v4490 = vld [vmem:[%s5] sm:$0x1]
      %v4492 = vperm.slane %v4490, 0
      %v4494 = vmul.f32 %v4395, %v4492
      %v4495 = vmul.f32 %v4398, %v4492
      %v4496 = vmul.f32 %v4401, %v4492
      %v4497 = vmul.f32 %v4404, %v4492
      %v4498 = vmul.f32 %v4407, %v4492
      %v4499 = vmul.f32 %v4410, %v4492
      %v4500 = vmul.f32 %v4413, %v4492
      %v4501 = vmul.f32 %v4416, %v4492
      %v4502 = vmul.f32 %v4419, %v4492
      %v4503 = vmul.f32 %v4422, %v4492
      %v4504 = vmul.f32 %v4425, %v4492
      %v4505 = vmul.f32 %v4428, %v4492
      %v4506 = vmul.f32 %v4431, %v4492
      %v4507 = vmul.f32 %v4434, %v4492
      %v4508 = vmul.f32 %v4437, %v4492
      %v4509 = vmul.f32 %v4440, %v4492
      %v4510 = vmul.f32 %v4443, %v4492
      %v4511 = vmul.f32 %v4446, %v4492
      %v4512 = vmul.f32 %v4449, %v4492
      %v4513 = vmul.f32 %v4452, %v4492
      %v4514 = vmul.f32 %v4455, %v4492
      %v4515 = vmul.f32 %v4458, %v4492
      %v4516 = vmul.f32 %v4461, %v4492
      %v4517 = vmul.f32 %v4464, %v4492
      %v4518 = vmul.f32 %v4467, %v4492
      %v4519 = vmul.f32 %v4470, %v4492
      %v4520 = vmul.f32 %v4473, %v4492
      %v4521 = vmul.f32 %v4476, %v4492
      %v4522 = vmul.f32 %v4479, %v4492
      %v4523 = vmul.f32 %v4482, %v4492
      %v4524 = vmul.f32 %v4485, %v4492
      %v4525 = vmul.f32 %v4488, %v4492
      %v4526 = vld [vmem:[%s6] sm:$0x1]
      %v4528 = vperm.slane %v4526, 0
      %v4530 = vadd.f32 %v4494, %v4528
      %v4531 = vadd.f32 %v4495, %v4528
      %v4532 = vadd.f32 %v4496, %v4528
      %v4533 = vadd.f32 %v4497, %v4528
      %v4534 = vadd.f32 %v4498, %v4528
      %v4535 = vadd.f32 %v4499, %v4528
      %v4536 = vadd.f32 %v4500, %v4528
      %v4537 = vadd.f32 %v4501, %v4528
      %v4538 = vadd.f32 %v4502, %v4528
      %v4539 = vadd.f32 %v4503, %v4528
      %v4540 = vadd.f32 %v4504, %v4528
      %v4541 = vadd.f32 %v4505, %v4528
      %v4542 = vadd.f32 %v4506, %v4528
      %v4543 = vadd.f32 %v4507, %v4528
      %v4544 = vadd.f32 %v4508, %v4528
      %v4545 = vadd.f32 %v4509, %v4528
      %v4546 = vadd.f32 %v4510, %v4528
      %v4547 = vadd.f32 %v4511, %v4528
      %v4548 = vadd.f32 %v4512, %v4528
      %v4549 = vadd.f32 %v4513, %v4528
      %v4550 = vadd.f32 %v4514, %v4528
      %v4551 = vadd.f32 %v4515, %v4528
      %v4552 = vadd.f32 %v4516, %v4528
      %v4553 = vadd.f32 %v4517, %v4528
      %v4554 = vadd.f32 %v4518, %v4528
      %v4555 = vadd.f32 %v4519, %v4528
      %v4556 = vadd.f32 %v4520, %v4528
      %v4557 = vadd.f32 %v4521, %v4528
      %v4558 = vadd.f32 %v4522, %v4528
      %v4559 = vadd.f32 %v4523, %v4528
      %v4560 = vadd.f32 %v4524, %v4528
      %v4561 = vadd.f32 %v4525, %v4528
      %v4562 = vld [vmem:[%s7] sm:$0xf]
      %v4564 = vsel %vm360, %v2090, 0
      %v4567 = vsel %vm360, %v2091, 0
      %v4570 = vsel %vm360, %v2092, 0
      %v4573 = vsel %vm360, %v2093, 0
      %v4576 = vsel %vm360, %v2094, 0
      %v4579 = vsel %vm360, %v2095, 0
      %v4582 = vsel %vm360, %v2096, 0
      %v4585 = vsel %vm360, %v2097, 0
      %v4588 = vsel %vm360, %v2098, 0
      %v4591 = vsel %vm360, %v2099, 0
      %v4594 = vsel %vm360, %v2100, 0
      %v4597 = vsel %vm360, %v2101, 0
      %v4600 = vsel %vm360, %v2102, 0
      %v4603 = vsel %vm360, %v2103, 0
      %v4606 = vsel %vm360, %v2104, 0
      %v4609 = vsel %vm360, %v2105, 0
      %v4612 = vsel %vm360, %v2106, 0
      %v4615 = vsel %vm360, %v2107, 0
      %v4618 = vsel %vm360, %v2108, 0
      %v4621 = vsel %vm360, %v2109, 0
      %v4624 = vsel %vm360, %v2110, 0
      %v4627 = vsel %vm360, %v2111, 0
      %v4630 = vsel %vm360, %v2112, 0
      %v4633 = vsel %vm360, %v2113, 0
      %v4636 = vsel %vm360, %v2114, 0
      %v4639 = vsel %vm360, %v2115, 0
      %v4642 = vsel %vm360, %v2116, 0
      %v4645 = vsel %vm360, %v2117, 0
      %v4648 = vsel %vm360, %v2118, 0
      %v4651 = vsel %vm360, %v2119, 0
      %v4654 = vsel %vm360, %v2120, 0
      %v4657 = vsel %vm360, %v2121, 0
      %v4660 = vsel %vm2256, %v4562, 0
      %4662 = vmatpush.msra.mxu0 0.0
      %4663 = vmatpush.msra.mxu0 0.0
      %4664 = vmatpush.msra.mxu0 0.0
      %4665 = vmatpush.msra.mxu0 0.0
      %4666 = vmatpush.msra.mxu0 0.0
      %4667 = vmatpush.msra.mxu0 0.0
      %4668 = vmatpush.msra.mxu0 0.0
      %4669 = vmatpush.msra.mxu0 0.0
      %4670 = vmatpush.msra.mxu0 0.0
      %4671 = vmatpush.msra.mxu0 0.0
      %4672 = vmatpush.msra.mxu0 0.0
      %4673 = vmatpush.msra.mxu0 0.0
      %4674 = vmatpush.msra.mxu0 0.0
      %4675 = vmatpush.msra.mxu0 0.0
      %4676 = vmatpush.msra.mxu0 0.0
      %4677 = vmatpush.msra.mxu0 %v4660
      %4678 = vmatmul.f32.gmra.mxu0 %v4564
      %v4679 = vpop.f32.mrf.mxu0
      %v4680 = vadd.f32 0.0, %v4679
      %4681 = vmatmul.f32.gmra.mxu0 %v4567
      %v4682 = vpop.f32.mrf.mxu0
      %v4683 = vadd.f32 0.0, %v4682
      %4684 = vmatmul.f32.gmra.mxu0 %v4570
      %v4685 = vpop.f32.mrf.mxu0
      %v4686 = vadd.f32 0.0, %v4685
      %4687 = vmatmul.f32.gmra.mxu0 %v4573
      %v4688 = vpop.f32.mrf.mxu0
      %v4689 = vadd.f32 0.0, %v4688
      %4690 = vmatmul.f32.gmra.mxu0 %v4576
      %v4691 = vpop.f32.mrf.mxu0
      %v4692 = vadd.f32 0.0, %v4691
      %4693 = vmatmul.f32.gmra.mxu0 %v4579
      %v4694 = vpop.f32.mrf.mxu0
      %v4695 = vadd.f32 0.0, %v4694
      %4696 = vmatmul.f32.gmra.mxu0 %v4582
      %v4697 = vpop.f32.mrf.mxu0
      %v4698 = vadd.f32 0.0, %v4697
      %4699 = vmatmul.f32.gmra.mxu0 %v4585
      %v4700 = vpop.f32.mrf.mxu0
      %v4701 = vadd.f32 0.0, %v4700
      %4702 = vmatmul.f32.gmra.mxu0 %v4588
      %v4703 = vpop.f32.mrf.mxu0
      %v4704 = vadd.f32 0.0, %v4703
      %4705 = vmatmul.f32.gmra.mxu0 %v4591
      %v4706 = vpop.f32.mrf.mxu0
      %v4707 = vadd.f32 0.0, %v4706
      %4708 = vmatmul.f32.gmra.mxu0 %v4594
      %v4709 = vpop.f32.mrf.mxu0
      %v4710 = vadd.f32 0.0, %v4709
      %4711 = vmatmul.f32.gmra.mxu0 %v4597
      %v4712 = vpop.f32.mrf.mxu0
      %v4713 = vadd.f32 0.0, %v4712
      %4714 = vmatmul.f32.gmra.mxu0 %v4600
      %v4715 = vpop.f32.mrf.mxu0
      %v4716 = vadd.f32 0.0, %v4715
      %4717 = vmatmul.f32.gmra.mxu0 %v4603
      %v4718 = vpop.f32.mrf.mxu0
      %v4719 = vadd.f32 0.0, %v4718
      %4720 = vmatmul.f32.gmra.mxu0 %v4606
      %v4721 = vpop.f32.mrf.mxu0
      %v4722 = vadd.f32 0.0, %v4721
      %4723 = vmatmul.f32.gmra.mxu0 %v4609
      %v4724 = vpop.f32.mrf.mxu0
      %v4725 = vadd.f32 0.0, %v4724
      %4726 = vmatmul.f32.gmra.mxu0 %v4612
      %v4727 = vpop.f32.mrf.mxu0
      %v4728 = vadd.f32 0.0, %v4727
      %4729 = vmatmul.f32.gmra.mxu0 %v4615
      %v4730 = vpop.f32.mrf.mxu0
      %v4731 = vadd.f32 0.0, %v4730
      %4732 = vmatmul.f32.gmra.mxu0 %v4618
      %v4733 = vpop.f32.mrf.mxu0
      %v4734 = vadd.f32 0.0, %v4733
      %4735 = vmatmul.f32.gmra.mxu0 %v4621
      %v4736 = vpop.f32.mrf.mxu0
      %v4737 = vadd.f32 0.0, %v4736
      %4738 = vmatmul.f32.gmra.mxu0 %v4624
      %v4739 = vpop.f32.mrf.mxu0
      %v4740 = vadd.f32 0.0, %v4739
      %4741 = vmatmul.f32.gmra.mxu0 %v4627
      %v4742 = vpop.f32.mrf.mxu0
      %v4743 = vadd.f32 0.0, %v4742
      %4744 = vmatmul.f32.gmra.mxu0 %v4630
      %v4745 = vpop.f32.mrf.mxu0
      %v4746 = vadd.f32 0.0, %v4745
      %4747 = vmatmul.f32.gmra.mxu0 %v4633
      %v4748 = vpop.f32.mrf.mxu0
      %v4749 = vadd.f32 0.0, %v4748
      %4750 = vmatmul.f32.gmra.mxu0 %v4636
      %v4751 = vpop.f32.mrf.mxu0
      %v4752 = vadd.f32 0.0, %v4751
      %4753 = vmatmul.f32.gmra.mxu0 %v4639
      %v4754 = vpop.f32.mrf.mxu0
      %v4755 = vadd.f32 0.0, %v4754
      %4756 = vmatmul.f32.gmra.mxu0 %v4642
      %v4757 = vpop.f32.mrf.mxu0
      %v4758 = vadd.f32 0.0, %v4757
      %4759 = vmatmul.f32.gmra.mxu0 %v4645
      %v4760 = vpop.f32.mrf.mxu0
      %v4761 = vadd.f32 0.0, %v4760
      %4762 = vmatmul.f32.gmra.mxu0 %v4648
      %v4763 = vpop.f32.mrf.mxu0
      %v4764 = vadd.f32 0.0, %v4763
      %4765 = vmatmul.f32.gmra.mxu0 %v4651
      %v4766 = vpop.f32.mrf.mxu0
      %v4767 = vadd.f32 0.0, %v4766
      %4768 = vmatmul.f32.gmra.mxu0 %v4654
      %v4769 = vpop.f32.mrf.mxu0
      %v4770 = vadd.f32 0.0, %v4769
      %4771 = vmatmul.f32.gmra.mxu0 %v4657
      %v4772 = vpop.f32.mrf.mxu0
      %v4773 = vadd.f32 0.0, %v4772
      %4774 = vdwg.mxu0
      %v4775 = vld [vmem:[%s8] sm:$0x1]
      %v4777 = vperm.slane %v4775, 0
      %v4779 = vmul.f32 %v4680, %v4777
      %v4780 = vmul.f32 %v4683, %v4777
      %v4781 = vmul.f32 %v4686, %v4777
      %v4782 = vmul.f32 %v4689, %v4777
      %v4783 = vmul.f32 %v4692, %v4777
      %v4784 = vmul.f32 %v4695, %v4777
      %v4785 = vmul.f32 %v4698, %v4777
      %v4786 = vmul.f32 %v4701, %v4777
      %v4787 = vmul.f32 %v4704, %v4777
      %v4788 = vmul.f32 %v4707, %v4777
      %v4789 = vmul.f32 %v4710, %v4777
      %v4790 = vmul.f32 %v4713, %v4777
      %v4791 = vmul.f32 %v4716, %v4777
      %v4792 = vmul.f32 %v4719, %v4777
      %v4793 = vmul.f32 %v4722, %v4777
      %v4794 = vmul.f32 %v4725, %v4777
      %v4795 = vmul.f32 %v4728, %v4777
      %v4796 = vmul.f32 %v4731, %v4777
      %v4797 = vmul.f32 %v4734, %v4777
      %v4798 = vmul.f32 %v4737, %v4777
      %v4799 = vmul.f32 %v4740, %v4777
      %v4800 = vmul.f32 %v4743, %v4777
      %v4801 = vmul.f32 %v4746, %v4777
      %v4802 = vmul.f32 %v4749, %v4777
      %v4803 = vmul.f32 %v4752, %v4777
      %v4804 = vmul.f32 %v4755, %v4777
      %v4805 = vmul.f32 %v4758, %v4777
      %v4806 = vmul.f32 %v4761, %v4777
      %v4807 = vmul.f32 %v4764, %v4777
      %v4808 = vmul.f32 %v4767, %v4777
      %v4809 = vmul.f32 %v4770, %v4777
      %v4810 = vmul.f32 %v4773, %v4777
      %v4811 = vld [vmem:[%s9] sm:$0x1]
      %v4813 = vperm.slane %v4811, 0
      %v4815 = vadd.f32 %v4779, %v4813
      %v4816 = vadd.f32 %v4780, %v4813
      %v4817 = vadd.f32 %v4781, %v4813
      %v4818 = vadd.f32 %v4782, %v4813
      %v4819 = vadd.f32 %v4783, %v4813
      %v4820 = vadd.f32 %v4784, %v4813
      %v4821 = vadd.f32 %v4785, %v4813
      %v4822 = vadd.f32 %v4786, %v4813
      %v4823 = vadd.f32 %v4787, %v4813
      %v4824 = vadd.f32 %v4788, %v4813
      %v4825 = vadd.f32 %v4789, %v4813
      %v4826 = vadd.f32 %v4790, %v4813
      %v4827 = vadd.f32 %v4791, %v4813
      %v4828 = vadd.f32 %v4792, %v4813
      %v4829 = vadd.f32 %v4793, %v4813
      %v4830 = vadd.f32 %v4794, %v4813
      %v4831 = vadd.f32 %v4795, %v4813
      %v4832 = vadd.f32 %v4796, %v4813
      %v4833 = vadd.f32 %v4797, %v4813
      %v4834 = vadd.f32 %v4798, %v4813
      %v4835 = vadd.f32 %v4799, %v4813
      %v4836 = vadd.f32 %v4800, %v4813
      %v4837 = vadd.f32 %v4801, %v4813
      %v4838 = vadd.f32 %v4802, %v4813
      %v4839 = vadd.f32 %v4803, %v4813
      %v4840 = vadd.f32 %v4804, %v4813
      %v4841 = vadd.f32 %v4805, %v4813
      %v4842 = vadd.f32 %v4806, %v4813
      %v4843 = vadd.f32 %v4807, %v4813
      %v4844 = vadd.f32 %v4808, %v4813
      %v4845 = vadd.f32 %v4809, %v4813
      %v4846 = vadd.f32 %v4810, %v4813
      %v4847 = vadd.f32 %v4530, %v4815
      %v4848 = vadd.f32 %v4531, %v4816
      %v4849 = vadd.f32 %v4532, %v4817
      %v4850 = vadd.f32 %v4533, %v4818
      %v4851 = vadd.f32 %v4534, %v4819
      %v4852 = vadd.f32 %v4535, %v4820
      %v4853 = vadd.f32 %v4536, %v4821
      %v4854 = vadd.f32 %v4537, %v4822
      %v4855 = vadd.f32 %v4538, %v4823
      %v4856 = vadd.f32 %v4539, %v4824
      %v4857 = vadd.f32 %v4540, %v4825
      %v4858 = vadd.f32 %v4541, %v4826
      %v4859 = vadd.f32 %v4542, %v4827
      %v4860 = vadd.f32 %v4543, %v4828
      %v4861 = vadd.f32 %v4544, %v4829
      %v4862 = vadd.f32 %v4545, %v4830
      %v4863 = vadd.f32 %v4546, %v4831
      %v4864 = vadd.f32 %v4547, %v4832
      %v4865 = vadd.f32 %v4548, %v4833
      %v4866 = vadd.f32 %v4549, %v4834
      %v4867 = vadd.f32 %v4550, %v4835
      %v4868 = vadd.f32 %v4551, %v4836
      %v4869 = vadd.f32 %v4552, %v4837
      %v4870 = vadd.f32 %v4553, %v4838
      %v4871 = vadd.f32 %v4554, %v4839
      %v4872 = vadd.f32 %v4555, %v4840
      %v4873 = vadd.f32 %v4556, %v4841
      %v4874 = vadd.f32 %v4557, %v4842
      %v4875 = vadd.f32 %v4558, %v4843
      %v4876 = vadd.f32 %v4559, %v4844
      %v4877 = vadd.f32 %v4560, %v4845
      %v4878 = vadd.f32 %v4561, %v4846
      %v4879 = vmax.f32 %v4847, 0.0
      %v4880 = vmax.f32 %v4848, 0.0
      %v4881 = vmax.f32 %v4849, 0.0
      %v4882 = vmax.f32 %v4850, 0.0
      %v4883 = vmax.f32 %v4851, 0.0
      %v4884 = vmax.f32 %v4852, 0.0
      %v4885 = vmax.f32 %v4853, 0.0
      %v4886 = vmax.f32 %v4854, 0.0
      %v4887 = vmax.f32 %v4855, 0.0
      %v4888 = vmax.f32 %v4856, 0.0
      %v4889 = vmax.f32 %v4857, 0.0
      %v4890 = vmax.f32 %v4858, 0.0
      %v4891 = vmax.f32 %v4859, 0.0
      %v4892 = vmax.f32 %v4860, 0.0
      %v4893 = vmax.f32 %v4861, 0.0
      %v4894 = vmax.f32 %v4862, 0.0
      %v4895 = vmax.f32 %v4863, 0.0
      %v4896 = vmax.f32 %v4864, 0.0
      %v4897 = vmax.f32 %v4865, 0.0
      %v4898 = vmax.f32 %v4866, 0.0
      %v4899 = vmax.f32 %v4867, 0.0
      %v4900 = vmax.f32 %v4868, 0.0
      %v4901 = vmax.f32 %v4869, 0.0
      %v4902 = vmax.f32 %v4870, 0.0
      %v4903 = vmax.f32 %v4871, 0.0
      %v4904 = vmax.f32 %v4872, 0.0
      %v4905 = vmax.f32 %v4873, 0.0
      %v4906 = vmax.f32 %v4874, 0.0
      %v4907 = vmax.f32 %v4875, 0.0
      %v4908 = vmax.f32 %v4876, 0.0
      %v4909 = vmax.f32 %v4877, 0.0
      %v4910 = vmax.f32 %v4878, 0.0
      %4911 = vst.msk [vmem:[%s359] sm:$0xff] %vm2541, %v4879
      %4912 = vst.msk [vmem:[%s359 + $0x8] sm:$0xff] %vm2541, %v4880
      %4913 = vst.msk [vmem:[%s359 + $0x10] sm:$0xff] %vm2541, %v4881
      %4914 = vst.msk [vmem:[%s359 + $0x18] sm:$0xff] %vm2541, %v4882
      %4915 = vst.msk [vmem:[%s359 + $0x20] sm:$0xff] %vm2541, %v4883
      %4916 = vst.msk [vmem:[%s359 + $0x28] sm:$0xff] %vm2541, %v4884
      %4917 = vst.msk [vmem:[%s359 + $0x30] sm:$0xff] %vm2541, %v4885
      %4918 = vst.msk [vmem:[%s359 + $0x38] sm:$0xff] %vm2541, %v4886
      %4919 = vst.msk [vmem:[%s359 + $0x40] sm:$0xff] %vm2541, %v4887
      %4920 = vst.msk [vmem:[%s359 + $0x48] sm:$0xff] %vm2541, %v4888
      %4921 = vst.msk [vmem:[%s359 + $0x50] sm:$0xff] %vm2541, %v4889
      %4922 = vst.msk [vmem:[%s359 + $0x58] sm:$0xff] %vm2541, %v4890
      %4923 = vst.msk [vmem:[%s359 + $0x60] sm:$0xff] %vm2541, %v4891
      %4924 = vst.msk [vmem:[%s359 + $0x68] sm:$0xff] %vm2541, %v4892
      %4925 = vst.msk [vmem:[%s359 + $0x70] sm:$0xff] %vm2541, %v4893
      %4926 = vst.msk [vmem:[%s359 + $0x78] sm:$0xff] %vm2541, %v4894
      %4927 = vst.msk [vmem:[%s359 + $0x80] sm:$0xff] %vm2541, %v4895
      %4928 = vst.msk [vmem:[%s359 + $0x88] sm:$0xff] %vm2541, %v4896
      %4929 = vst.msk [vmem:[%s359 + $0x90] sm:$0xff] %vm2541, %v4897
      %4930 = vst.msk [vmem:[%s359 + $0x98] sm:$0xff] %vm2541, %v4898
      %4931 = vst.msk [vmem:[%s359 + $0xa0] sm:$0xff] %vm2541, %v4899
      %4932 = vst.msk [vmem:[%s359 + $0xa8] sm:$0xff] %vm2541, %v4900
      %4933 = vst.msk [vmem:[%s359 + $0xb0] sm:$0xff] %vm2541, %v4901
      %4934 = vst.msk [vmem:[%s359 + $0xb8] sm:$0xff] %vm2541, %v4902
      %4935 = vst.msk [vmem:[%s359 + $0xc0] sm:$0xff] %vm2541, %v4903
      %4936 = vst.msk [vmem:[%s359 + $0xc8] sm:$0xff] %vm2541, %v4904
      %4937 = vst.msk [vmem:[%s359 + $0xd0] sm:$0xff] %vm2541, %v4905
      %4938 = vst.msk [vmem:[%s359 + $0xd8] sm:$0xff] %vm2541, %v4906
      %4939 = vst.msk [vmem:[%s359 + $0xe0] sm:$0xff] %vm2541, %v4907
      %4940 = vst.msk [vmem:[%s359 + $0xe8] sm:$0xff] %vm2541, %v4908
      %4941 = vst.msk [vmem:[%s359 + $0xf0] sm:$0xff] %vm2541, %v4909
      %4942 = vst.msk [vmem:[%s359 + $0xf8] sm:$0xff] %vm2541, %v4910
      %p4943 = scmp.lt.s32.totalorder %s21, 1
      %s4944 = scalar_select %p4943, %s21, 1
      %s4945 = smul.addr %s4944, 32
      %s4946 = smul.addr %s4945, 8
      %s4947 = scalar_lea.vmem %s10, %s4946
      // Predicated region
      $region61: #{tpu_custom_call.1} parent=59 // pred_check
        %p4948 = pneg %p254
      $region62: #{tpu_custom_call.1} parent=59 // pred_check_branch
        %4950 = sbr.rel (%p4948) target = $region64
      $region63: #{tpu_custom_call.1} parent=59 // pred_region
        _
      $region64: #{tpu_custom_call.1} parent=59 // pred_fallthru
        _
    $region60: #{tpu_custom_call.1} parent=5 // pred_fallthru
      _
    %p4951 = scmp.le.s32.totalorder 2, %s16
    // Predicated region
    $region65: #{tpu_custom_call.1} parent=5 // pred_check
      %p4952 = pneg %p4951
    $region66: #{tpu_custom_call.1} parent=5 // pred_check_branch
      %4954 = sbr.rel (%p4952) target = $region68
    $region67: #{tpu_custom_call.1} parent=5 // pred_region
      %s4955 = ssub.s32 %s16, 2
      // Predicated region
      $region69: #{tpu_custom_call.1} parent=67 // pred_check
        %p4956 = pneg %p260
      $region70: #{tpu_custom_call.1} parent=67 // pred_check_branch
        %4958 = sbr.rel (%p4956) target = $region72
      $region71: #{tpu_custom_call.1} parent=67 // pred_region
        %p4959 = scmp.lt.s32.totalorder %s22, 1
        %s4960 = scalar_select %p4959, %s22, 1
        %s4961 = smul.addr %s4960, 32
        %s4962 = smul.addr %s4961, 8
        %s4963 = scalar_lea.vmem %s10, %s4962
      $region72: #{tpu_custom_call.1} parent=67 // pred_fallthru
        _
    $region68: #{tpu_custom_call.1} parent=5 // pred_fallthru
      _
  $region6: #{tpu_custom_call.1} parent=0 // loop_footer
    %s20 = sadd.s32 1, %s16
  $region7: #{tpu_custom_call.1} parent=0 // loop_footer_branch
    %15 = sbr.rel target = $region3
  $region8: #{tpu_custom_call.1} parent=0 // loop_exit
    _

</llo_original>
